<compile_context>
chip_gen: v5e
topology: v5e:2x2
jax: 0.10.0
libtpu: 0.0.40
codegen_flags: <defaults>
</compile_context>

<pallas_src>
import jax
import jax.numpy as jnp
from jax import lax
from jax.experimental import pallas as pl
from jax.experimental.pallas import tpu as pltpu

LANE = 128


def _round_up(x, m):
    return ((x + m - 1) // m) * m


def _pad_axis(a, axis, new_size):
    pad = new_size - a.shape[axis]
    if pad == 0:
        return a
    widths = [(0, 0)] * a.ndim
    widths[axis] = (0, pad)
    return jnp.pad(a, widths)


def _pick_query_tile(n):
    # prefer 256 (fills the v6e/v7x 256-wide MXU), else 128, else monolithic.
    for cand in (256, 128):
        if n % cand == 0:
            return cand
    return n


def _make_kernel(tq, ci_pad):
    def kernel(x_ref,                       # (1, N, Cp)   f32, resident per batch
               w_all_ref, b_all_ref,        # (Cp, 3*CiP), (1, 3*CiP)
               b_g_ref,                     # (1, CiP)   (applied post-attention)
               w_w_ref, b_w_ref,            # (CiP, Cp), (1, Cp)
               bn_scale_ref, bn_shift_ref,  # (1, Cp), (1, Cp)
               out_ref,                     # (1, TQ, Cp)
               theta_s, phi_s, g_s):        # (N, CiP) bf16 scratch, batch-resident
        q = pl.program_id(1)

        # Once per batch element: fused theta/phi/g projection of the full
        # (N, Cp) activation, stored bf16 in VMEM scratch.
        @pl.when(q == 0)
        def _():
            xf = x_ref[0]                                            # (N, Cp) f32
            proj = jnp.dot(xf, w_all_ref[...],
                           preferred_element_type=jnp.float32) + b_all_ref[...]
            theta_s[...] = proj[:, :ci_pad].astype(jnp.bfloat16)
            phi_s[...] = proj[:, ci_pad:2 * ci_pad].astype(jnp.bfloat16)
            g_s[...] = proj[:, 2 * ci_pad:].astype(jnp.bfloat16)

        qs = pl.multiple_of(q * tq, tq)
        theta_t = theta_s[pl.ds(qs, tq), :]                          # (TQ, CiP) bf16

        # scores = theta_tile @ phi^T, contracting Ci directly (no transpose copy)
        scores = lax.dot_general(
            theta_t, phi_s[...],
            dimension_numbers=(((1,), (1,)), ((), ())),
            preferred_element_type=jnp.float32)                      # (TQ, N) f32

        # softmax with deferred normalization (flash-style), f32 elementwise math
        m = jnp.max(scores, axis=-1, keepdims=True)
        p = jnp.exp(scores - m)
        l = jnp.sum(p, axis=-1, keepdims=True)

        y = jnp.dot(p.astype(jnp.bfloat16), g_s[...],
                    preferred_element_type=jnp.float32)              # (TQ, CiP)
        y = y * pl.reciprocal(l, approx=True) + b_g_ref[...]

        # W (Ci -> C) projection + BatchNorm (inference scale/shift) + residual
        w_y = jnp.dot(y, w_w_ref[...],
                      preferred_element_type=jnp.float32) + b_w_ref[...]
        w_y = w_y * bn_scale_ref[...] + bn_shift_ref[...]

        x_q = x_ref[0, pl.ds(qs, tq), :]                             # (TQ, Cp)
        out_ref[0] = (w_y + x_q).astype(out_ref.dtype)

    return kernel


def nonlocal_block_pallas(x_ncthw, params):
    """x_ncthw: (B, C, T, H, W) f32; params: unpadded weights (see make_params)."""
    B, C, T, H, W = x_ncthw.shape
    N = T * H * W
    Ci = params["w_g"].shape[1]
    Cp = _round_up(C, LANE)
    CiP = _round_up(Ci, LANE)
    TQ = _pick_query_tile(N)
    n_q = N // TQ

    # NCTHW -> (B, N, C) channels-last, pad channel axis to lane multiple.
    x_flat = jnp.transpose(x_ncthw.reshape(B, C, N), (0, 2, 1))
    x_pad = _pad_axis(x_flat, 2, Cp)

    def pad_w(w):  # (C, Ci) -> (Cp, CiP)
        return _pad_axis(_pad_axis(w, 0, Cp), 1, CiP)

    # Fused projection weights [theta | phi | g]; b_phi dropped (softmax shift
    # invariant), b_g deferred to after the attention matmul (rows sum to 1).
    w_all = jnp.concatenate(
        [pad_w(params["w_theta"]), pad_w(params["w_phi"]), pad_w(params["w_g"])],
        axis=1)                                                    # (Cp, 3*CiP)
    b_all = jnp.concatenate(
        [_pad_axis(params["b_theta"], 1, CiP),
         jnp.zeros((1, CiP), jnp.float32),
         jnp.zeros((1, CiP), jnp.float32)], axis=1)                # (1, 3*CiP)
    b_g_p = _pad_axis(params["b_g"], 1, CiP)
    w_w_p = _pad_axis(_pad_axis(params["w_w"], 0, CiP), 1, Cp)
    b_w_p = _pad_axis(params["b_w"], 1, Cp)
    bn_scale_p = _pad_axis(params["bn_scale"], 1, Cp)
    bn_shift_p = _pad_axis(params["bn_shift"], 1, Cp)

    full2d = lambda shape: pl.BlockSpec(shape, lambda b, q: (0, 0))

    flops = B * (2 * N * Cp * 3 * CiP        # fused projections
                 + 2 * 2 * N * N * CiP       # score + attention matmuls
                 + 2 * N * CiP * Cp)         # W projection
    bytes_accessed = (x_pad.size + B * N * Cp) * 4 + (w_all.size + w_w_p.size) * 4

    out_pad = pl.pallas_call(
        _make_kernel(TQ, CiP),
        out_shape=jax.ShapeDtypeStruct((B, N, Cp), x_pad.dtype),
        grid_spec=pltpu.PrefetchScalarGridSpec(
            num_scalar_prefetch=0,
            grid=(B, n_q),
            in_specs=[
                pl.BlockSpec((1, N, Cp), lambda b, q: (b, 0, 0)),  # x, resident per batch
                full2d((Cp, 3 * CiP)),                             # fused proj weights
                full2d((1, 3 * CiP)),                              # fused proj bias
                full2d((1, CiP)),                                  # b_g (post-attention)
                full2d((CiP, Cp)),                                 # W conv weight
                full2d((1, Cp)),                                   # W conv bias
                full2d((1, Cp)),                                   # BN scale
                full2d((1, Cp)),                                   # BN shift
            ],
            out_specs=pl.BlockSpec((1, TQ, Cp), lambda b, q: (b, q, 0)),
            scratch_shapes=[pltpu.VMEM((N, CiP), jnp.bfloat16)] * 3,
        ),
        compiler_params=pltpu.CompilerParams(
            dimension_semantics=("parallel", "arbitrary"),
            vmem_limit_bytes=48 * 1024 * 1024),
        cost_estimate=pl.CostEstimate(
            flops=flops, transcendentals=B * N * N,
            bytes_accessed=bytes_accessed),
    )(x_pad, w_all, b_all, b_g_p, w_w_p, b_w_p, bn_scale_p, bn_shift_p)

    z_flat = out_pad[:, :, :C]
    return jnp.transpose(z_flat, (0, 2, 1)).reshape(B, C, T, H, W)


def make_params(key, in_channels, inter_channels):
    """Synthetic parameters mirroring NonLocalBlock shapes (weights stored (in, out))."""
    ks = jax.random.split(key, 12)
    C, Ci = in_channels, inter_channels
    scale = 0.1
    w_g = jax.random.normal(ks[0], (C, Ci), jnp.float32) * scale
    b_g = jax.random.normal(ks[1], (1, Ci), jnp.float32) * scale
    w_theta = jax.random.normal(ks[2], (C, Ci), jnp.float32) * scale
    b_theta = jax.random.normal(ks[3], (1, Ci), jnp.float32) * scale
    w_phi = jax.random.normal(ks[4], (C, Ci), jnp.float32) * scale
    b_phi = jax.random.normal(ks[5], (1, Ci), jnp.float32) * scale
    w_w = jax.random.normal(ks[6], (Ci, C), jnp.float32) * scale
    b_w = jax.random.normal(ks[7], (1, C), jnp.float32) * scale
    # BatchNorm3d, inference form folded to scale/shift.  NOTE: the module's
    # __init__ zeros gamma/beta, which makes the whole non-local branch output
    # exactly zero; here we use non-trivial (as-if-trained) BN statistics so
    # the projection / softmax / matmul math is actually exercised.
    gamma = 1.0 + 0.1 * jax.random.normal(ks[8], (C,), jnp.float32)
    beta = 0.1 * jax.random.normal(ks[9], (C,), jnp.float32)
    running_mean = 0.1 * jax.random.normal(ks[10], (C,), jnp.float32)
    running_var = 1.0 + 0.1 * jnp.abs(jax.random.normal(ks[11], (C,), jnp.float32))
    eps = 1e-5
    bn_scale = (gamma / jnp.sqrt(running_var + eps)).reshape(1, C)
    bn_shift = (beta - running_mean * bn_scale[0]).reshape(1, C)
    return dict(w_g=w_g, b_g=b_g, w_theta=w_theta, b_theta=b_theta,
                w_phi=w_phi, b_phi=b_phi, w_w=w_w, b_w=b_w,
                bn_scale=bn_scale, bn_shift=bn_shift)


def nonlocal_block_reference(x_flat, params):
    """Pure-JAX f32 reference of the module math (biases in their original places)."""
    g_x = x_flat @ params["w_g"] + params["b_g"]
    theta_x = x_flat @ params["w_theta"] + params["b_theta"]
    phi_x = x_flat @ params["w_phi"] + params["b_phi"]
    f = jnp.einsum("bnc,bmc->bnm", theta_x, phi_x)
    f_div_c = jax.nn.softmax(f, axis=-1)
    y = jnp.einsum("bnm,bmc->bnc", f_div_c, g_x)
    w_y = y @ params["w_w"] + params["b_w"]
    w_y = w_y * params["bn_scale"] + params["bn_shift"]
    return w_y + x_flat


if __name__ == "__main__":
    # PyTorch module input: (b, c, t, h, w).  N = 512 -> TQ = 256, 2 query tiles,
    # so the batch-resident scratch + query tiling paths are both exercised.
    B, C, T, H, W = 2, 4, 2, 16, 16
    inter_channels = max(C // 2, 1)   # module default when inter_channels is None
    N = T * H * W

    key = jax.random.PRNGKey(0)
    kx, kp = jax.random.split(key)
    x_ncthw = jax.random.normal(kx, (B, C, T, H, W), jnp.float32)
    params = make_params(kp, C, inter_channels)

    z = nonlocal_block_pallas(x_ncthw, params)
    z = jax.block_until_ready(z)

    # Sanity check vs pure-JAX f32 reference; tolerance accounts for bf16 MXU
    # operands and the approximate EUP reciprocal inside the kernel.
    x_flat = jnp.transpose(x_ncthw.reshape(B, C, N), (0, 2, 1))
    z_flat = jnp.transpose(z.reshape(B, C, N), (0, 2, 1))
    z_ref = nonlocal_block_reference(x_flat, params)
    assert jnp.allclose(z_flat, z_ref, atol=2e-2, rtol=2e-2), "mismatch vs reference"

    print("KERNEL_OK")
</pallas_src>

<mosaic_0001>
module attributes {stable_mosaic.version = 11 : i64} {
  func.func @kernel(%arg0: i32, %arg1: i32, %arg2: memref<1x512x128xf32, #tpu.memory_space<vmem>>, %arg3: memref<128x384xf32, #tpu.memory_space<vmem>>, %arg4: memref<1x384xf32, #tpu.memory_space<vmem>>, %arg5: memref<1x128xf32, #tpu.memory_space<vmem>>, %arg6: memref<128x128xf32, #tpu.memory_space<vmem>>, %arg7: memref<1x128xf32, #tpu.memory_space<vmem>>, %arg8: memref<1x128xf32, #tpu.memory_space<vmem>>, %arg9: memref<1x128xf32, #tpu.memory_space<vmem>>, %arg10: memref<1x256x128xf32, #tpu.memory_space<vmem>>, %arg11: memref<512x128xbf16, #tpu.memory_space<vmem>>, %arg12: memref<512x128xbf16, #tpu.memory_space<vmem>>, %arg13: memref<512x128xbf16, #tpu.memory_space<vmem>>) attributes {dimension_semantics = [#tpu.dimension_semantics<parallel>, #tpu.dimension_semantics<arbitrary>], iteration_bounds = array<i64: 2, 2>, scalar_prefetch = 0 : i64, scratch_operands = 3 : i64, tpu.core_type = #tpu.core_type<tc>, window_params = [{transform_indices = @transform_0, window_bounds = array<i64: 1, 512, 128>}, {pipeline_mode = #tpu.pipeline_mode<synchronous>, transform_indices = @transform_1, window_bounds = array<i64: 128, 384>}, {pipeline_mode = #tpu.pipeline_mode<synchronous>, transform_indices = @transform_2, window_bounds = array<i64: 1, 384>}, {pipeline_mode = #tpu.pipeline_mode<synchronous>, transform_indices = @transform_3, window_bounds = array<i64: 1, 128>}, {pipeline_mode = #tpu.pipeline_mode<synchronous>, transform_indices = @transform_4, window_bounds = array<i64: 128, 128>}, {pipeline_mode = #tpu.pipeline_mode<synchronous>, transform_indices = @transform_5, window_bounds = array<i64: 1, 128>}, {pipeline_mode = #tpu.pipeline_mode<synchronous>, transform_indices = @transform_6, window_bounds = array<i64: 1, 128>}, {pipeline_mode = #tpu.pipeline_mode<synchronous>, transform_indices = @transform_7, window_bounds = array<i64: 1, 128>}, {transform_indices = @transform_8, window_bounds = array<i64: 1, 256, 128>}]} {
    %c0_i32 = arith.constant 0 : i32
    %0 = arith.cmpi eq, %arg1, %c0_i32 : i32
    %1 = arith.extui %0 : i1 to i32
    %c0_i32_0 = arith.constant 0 : i32
    %2 = arith.cmpi ne, %1, %c0_i32_0 : i32
    scf.if %2 {
      %c0_24 = arith.constant 0 : index
      %c0_25 = arith.constant 0 : index
      %c0_26 = arith.constant 0 : index
      %43 = vector.load %arg2[%c0_24, %c0_25, %c0_26] : memref<1x512x128xf32, #tpu.memory_space<vmem>>, vector<1x512x128xf32>
      %44 = vector.shape_cast %43 : vector<1x512x128xf32> to vector<512x128xf32>
      %c0_27 = arith.constant 0 : index
      %c0_28 = arith.constant 0 : index
      %45 = vector.load %arg3[%c0_27, %c0_28] : memref<128x384xf32, #tpu.memory_space<vmem>>, vector<128x384xf32>
      %cst_29 = arith.constant dense<0.000000e+00> : vector<512x384xf32>
      %46 = tpu.matmul %44, %45, %cst_29 {dimension_numbers = #tpu.dot_dimension_numbers<[1], [0], [0], [1], [0, 0, 1, 1], [], []>} : vector<512x128xf32>, vector<128x384xf32>, vector<512x384xf32> -> vector<512x384xf32>
      %c0_30 = arith.constant 0 : index
      %c0_31 = arith.constant 0 : index
      %47 = vector.load %arg4[%c0_30, %c0_31] : memref<1x384xf32, #tpu.memory_space<vmem>>, vector<1x384xf32>
      %48 = vector.broadcast %47 : vector<1x384xf32> to vector<512x384xf32>
      %49 = arith.addf %46, %48 : vector<512x384xf32>
      %50 = vector.extract_strided_slice %49 {offsets = [0, 0], sizes = [512, 128], strides = [1, 1]} : vector<512x384xf32> to vector<512x128xf32>
      %51 = arith.truncf %50 : vector<512x128xf32> to vector<512x128xbf16>
      %c0_32 = arith.constant 0 : index
      %c0_33 = arith.constant 0 : index
      %52 = vector.load %arg11[%c0_32, %c0_33] : memref<512x128xbf16, #tpu.memory_space<vmem>>, vector<512x128xbf16>
      tpu.vector_store %arg11[%c0_32, %c0_33], %51 {strides = array<i32>} : memref<512x128xbf16, #tpu.memory_space<vmem>>, vector<512x128xbf16>,
      %53 = vector.extract_strided_slice %49 {offsets = [0, 128], sizes = [512, 128], strides = [1, 1]} : vector<512x384xf32> to vector<512x128xf32>
      %54 = arith.truncf %53 : vector<512x128xf32> to vector<512x128xbf16>
      %c0_34 = arith.constant 0 : index
      %c0_35 = arith.constant 0 : index
      %55 = vector.load %arg12[%c0_34, %c0_35] : memref<512x128xbf16, #tpu.memory_space<vmem>>, vector<512x128xbf16>
      tpu.vector_store %arg12[%c0_34, %c0_35], %54 {strides = array<i32>} : memref<512x128xbf16, #tpu.memory_space<vmem>>, vector<512x128xbf16>,
      %56 = vector.extract_strided_slice %49 {offsets = [0, 256], sizes = [512, 128], strides = [1, 1]} : vector<512x384xf32> to vector<512x128xf32>
      %57 = arith.truncf %56 : vector<512x128xf32> to vector<512x128xbf16>
      %c0_36 = arith.constant 0 : index
      %c0_37 = arith.constant 0 : index
      %58 = vector.load %arg13[%c0_36, %c0_37] : memref<512x128xbf16, #tpu.memory_space<vmem>>, vector<512x128xbf16>
      tpu.vector_store %arg13[%c0_36, %c0_37], %57 {strides = array<i32>} : memref<512x128xbf16, #tpu.memory_space<vmem>>, vector<512x128xbf16>,
    } else {
    }
    %c256_i32 = arith.constant 256 : i32
    %3 = arith.muli %arg1, %c256_i32 : i32
    %4 = tpu.assume_multiple %3, 256 : i32
    %5 = arith.index_cast %4 : i32 to index
    %c0 = arith.constant 0 : index
    %6 = vector.load %arg11[%5, %c0] : memref<512x128xbf16, #tpu.memory_space<vmem>>, vector<256x128xbf16>
    %c0_1 = arith.constant 0 : index
    %c0_2 = arith.constant 0 : index
    %7 = vector.load %arg12[%c0_1, %c0_2] : memref<512x128xbf16, #tpu.memory_space<vmem>>, vector<512x128xbf16>
    %cst = arith.constant dense<0.000000e+00> : vector<256x512xf32>
    %8 = tpu.matmul %6, %7, %cst {dimension_numbers = #tpu.dot_dimension_numbers<[1], [1], [0], [0], [0, 0, 1, 0], [], []>} : vector<256x128xbf16>, vector<512x128xbf16>, vector<256x512xf32> -> vector<256x512xf32>
    %cst_3 = arith.constant dense<0xFF800000> : vector<256xf32>
    %9 = vector.multi_reduction <maximumf>, %8, %cst_3 [1] : vector<256x512xf32> to vector<256xf32>
    %10 = vector.shape_cast %9 : vector<256xf32> to vector<256x1xf32>
    %11 = vector.broadcast %10 : vector<256x1xf32> to vector<256x512xf32>
    %12 = arith.subf %8, %11 : vector<256x512xf32>
    %13 = math.exp %12 : vector<256x512xf32>
    %cst_4 = arith.constant dense<0.000000e+00> : vector<256xf32>
    %14 = vector.multi_reduction <add>, %13, %cst_4 [1] : vector<256x512xf32> to vector<256xf32>
    %15 = vector.shape_cast %14 : vector<256xf32> to vector<256x1xf32>
    %16 = arith.truncf %13 : vector<256x512xf32> to vector<256x512xbf16>
    %c0_5 = arith.constant 0 : index
    %c0_6 = arith.constant 0 : index
    %17 = vector.load %arg13[%c0_5, %c0_6] : memref<512x128xbf16, #tpu.memory_space<vmem>>, vector<512x128xbf16>
    %cst_7 = arith.constant dense<0.000000e+00> : vector<256x128xf32>
    %18 = tpu.matmul %16, %17, %cst_7 {dimension_numbers = #tpu.dot_dimension_numbers<[1], [0], [0], [1], [0, 0, 1, 1], [], []>} : vector<256x512xbf16>, vector<512x128xbf16>, vector<256x128xf32> -> vector<256x128xf32>
    %19 = tpu.reciprocal %15 {approx = true} : vector<256x1xf32> -> vector<256x1xf32>
    %20 = vector.broadcast %19 : vector<256x1xf32> to vector<256x128xf32>
    %21 = arith.mulf %18, %20 : vector<256x128xf32>
    %c0_8 = arith.constant 0 : index
    %c0_9 = arith.constant 0 : index
    %22 = vector.load %arg5[%c0_8, %c0_9] : memref<1x128xf32, #tpu.memory_space<vmem>>, vector<1x128xf32>
    %23 = vector.broadcast %22 : vector<1x128xf32> to vector<256x128xf32>
    %24 = arith.addf %21, %23 : vector<256x128xf32>
    %c0_10 = arith.constant 0 : index
    %c0_11 = arith.constant 0 : index
    %25 = vector.load %arg6[%c0_10, %c0_11] : memref<128x128xf32, #tpu.memory_space<vmem>>, vector<128x128xf32>
    %cst_12 = arith.constant dense<0.000000e+00> : vector<256x128xf32>
    %26 = tpu.matmul %24, %25, %cst_12 {dimension_numbers = #tpu.dot_dimension_numbers<[1], [0], [0], [1], [0, 0, 1, 1], [], []>} : vector<256x128xf32>, vector<128x128xf32>, vector<256x128xf32> -> vector<256x128xf32>
    %c0_13 = arith.constant 0 : index
    %c0_14 = arith.constant 0 : index
    %27 = vector.load %arg7[%c0_13, %c0_14] : memref<1x128xf32, #tpu.memory_space<vmem>>, vector<1x128xf32>
    %28 = vector.broadcast %27 : vector<1x128xf32> to vector<256x128xf32>
    %29 = arith.addf %26, %28 : vector<256x128xf32>
    %c0_15 = arith.constant 0 : index
    %c0_16 = arith.constant 0 : index
    %30 = vector.load %arg8[%c0_15, %c0_16] : memref<1x128xf32, #tpu.memory_space<vmem>>, vector<1x128xf32>
    %31 = vector.broadcast %30 : vector<1x128xf32> to vector<256x128xf32>
    %32 = arith.mulf %29, %31 : vector<256x128xf32>
    %c0_17 = arith.constant 0 : index
    %c0_18 = arith.constant 0 : index
    %33 = vector.load %arg9[%c0_17, %c0_18] : memref<1x128xf32, #tpu.memory_space<vmem>>, vector<1x128xf32>
    %34 = vector.broadcast %33 : vector<1x128xf32> to vector<256x128xf32>
    %35 = arith.addf %32, %34 : vector<256x128xf32>
    %c0_19 = arith.constant 0 : index
    %36 = arith.index_cast %4 : i32 to index
    %c0_20 = arith.constant 0 : index
    %37 = vector.load %arg2[%c0_19, %36, %c0_20] : memref<1x512x128xf32, #tpu.memory_space<vmem>>, vector<1x256x128xf32>
    %38 = vector.shape_cast %37 : vector<1x256x128xf32> to vector<256x128xf32>
    %39 = arith.addf %35, %38 : vector<256x128xf32>
    %c0_21 = arith.constant 0 : index
    %c0_22 = arith.constant 0 : index
    %c0_23 = arith.constant 0 : index
    %40 = vector.load %arg10[%c0_21, %c0_22, %c0_23] : memref<1x256x128xf32, #tpu.memory_space<vmem>>, vector<1x256x128xf32>
    %41 = vector.shape_cast %40 : vector<1x256x128xf32> to vector<256x128xf32>
    %42 = vector.shape_cast %39 : vector<256x128xf32> to vector<1x256x128xf32>
    tpu.vector_store %arg10[%c0_21, %c0_22, %c0_23], %42 {strides = array<i32>} : memref<1x256x128xf32, #tpu.memory_space<vmem>>, vector<1x256x128xf32>,
    return
  }
  func.func @transform_0(%arg0: i32, %arg1: i32) -> (i32, i32, i32) {
    %c0_i32 = arith.constant 0 : i32
    %c0_i32_0 = arith.constant 0 : i32
    %c0_i32_1 = arith.constant 0 : i32
    return %arg0, %c0_i32, %c0_i32_0 : i32, i32, i32
  }
  func.func @transform_1(%arg0: i32, %arg1: i32) -> (i32, i32) {
    %c0_i32 = arith.constant 0 : i32
    %c0_i32_0 = arith.constant 0 : i32
    %c0_i32_1 = arith.constant 0 : i32
    return %c0_i32, %c0_i32_0 : i32, i32
  }
  func.func @transform_2(%arg0: i32, %arg1: i32) -> (i32, i32) {
    %c0_i32 = arith.constant 0 : i32
    %c0_i32_0 = arith.constant 0 : i32
    %c0_i32_1 = arith.constant 0 : i32
    return %c0_i32, %c0_i32_0 : i32, i32
  }
  func.func @transform_3(%arg0: i32, %arg1: i32) -> (i32, i32) {
    %c0_i32 = arith.constant 0 : i32
    %c0_i32_0 = arith.constant 0 : i32
    %c0_i32_1 = arith.constant 0 : i32
    return %c0_i32, %c0_i32_0 : i32, i32
  }
  func.func @transform_4(%arg0: i32, %arg1: i32) -> (i32, i32) {
    %c0_i32 = arith.constant 0 : i32
    %c0_i32_0 = arith.constant 0 : i32
    %c0_i32_1 = arith.constant 0 : i32
    return %c0_i32, %c0_i32_0 : i32, i32
  }
  func.func @transform_5(%arg0: i32, %arg1: i32) -> (i32, i32) {
    %c0_i32 = arith.constant 0 : i32
    %c0_i32_0 = arith.constant 0 : i32
    %c0_i32_1 = arith.constant 0 : i32
    return %c0_i32, %c0_i32_0 : i32, i32
  }
  func.func @transform_6(%arg0: i32, %arg1: i32) -> (i32, i32) {
    %c0_i32 = arith.constant 0 : i32
    %c0_i32_0 = arith.constant 0 : i32
    %c0_i32_1 = arith.constant 0 : i32
    return %c0_i32, %c0_i32_0 : i32, i32
  }
  func.func @transform_7(%arg0: i32, %arg1: i32) -> (i32, i32) {
    %c0_i32 = arith.constant 0 : i32
    %c0_i32_0 = arith.constant 0 : i32
    %c0_i32_1 = arith.constant 0 : i32
    return %c0_i32, %c0_i32_0 : i32, i32
  }
  func.func @transform_8(%arg0: i32, %arg1: i32) -> (i32, i32, i32) {
    %c0_i32 = arith.constant 0 : i32
    %c0_i32_0 = arith.constant 0 : i32
    return %arg0, %arg1, %c0_i32 : i32, i32, i32
  }
}

</mosaic_0001>

<llo_original>
// kernel: tpu_custom_call.1
$region0: #{tpu_custom_call.1}
  #allocation0 [shape = 'u32[]', space=smem, size = 0x4, offset = 0x4, fixed_abs, tag = 'smem constant byte address 0x4 - core index']
  #allocation1 [shape = 'u32[72,128]{1,0:T(1,128)}', space=vmem, size = 0x9000, scoped, tag = 'internal scratch']
  #allocation2 [shape = 'bf16[512,128]{1,0:T(8,128)(2,1)}', space=vmem, size = 0x20000, scoped, tag = 'scratch operand']
  #allocation3 [shape = 'bf16[512,128]{1,0:T(8,128)(2,1)}', space=vmem, size = 0x20000, scoped, tag = 'scratch operand']
  #allocation4 [shape = 'bf16[512,128]{1,0:T(8,128)(2,1)}', space=vmem, size = 0x20000, scoped, tag = 'scratch operand']
  %s0 = inlined_call_operand.hbm [shape: f32[2,512,128], index: 0, kind: input, shape index: {}]
  %s1 = inlined_call_operand.hbm [shape: f32[128,384], index: 1, kind: input, shape index: {}]
  %s2 = inlined_call_operand.hbm [shape: f32[1,384], index: 2, kind: input, shape index: {}]
  %s3 = inlined_call_operand.vmem [shape: f32[1,128], index: 3, kind: input, shape index: {}]
  %s4 = inlined_call_operand.hbm [shape: f32[128,128], index: 4, kind: input, shape index: {}]
  %s5 = inlined_call_operand.vmem [shape: f32[1,128], index: 5, kind: input, shape index: {}]
  %s6 = inlined_call_operand.vmem [shape: f32[1,128], index: 6, kind: input, shape index: {}]
  %s7 = inlined_call_operand.vmem [shape: f32[1,128], index: 7, kind: input, shape index: {}]
  %s8 = inlined_call_operand.hbm [shape: f32[2,512,128], index: 8, kind: output, shape index: {}]
  %s9 = sld [smem:[#allocation0]]
  $region85: #{tpu_custom_call.1} parent=0
    _
  %s11 = ssub.s32 1, %s9
  %s12 = scalar_select 0, %s11, %s9
  $region1: #{tpu_custom_call.1} parent=0
    #allocation5 [shape = 'u8[524288]{0}', space=vmem, size = 0x80000, scoped, tag = 'input window, operand 0']
    #allocation6 [shape = 's32[2]{0}', space=sflag, size = 0x8, scoped, tag = 'scoped memory for tpu_custom_call.1']
    #allocation7 [shape = 's32[2]{0}', space=sflag, size = 0x8, scoped, tag = 'scoped memory for tpu_custom_call.1']
    #allocation8 [shape = 'u8[196608]{0}', space=vmem, size = 0x30000, scoped, tag = 'input window, operand 1, single buffered']
    #allocation9 [shape = 's32[1]{0}', space=sflag, size = 0x4, scoped, tag = 'scoped memory for tpu_custom_call.1']
    #allocation10 [shape = 'u8[1536]{0}', space=vmem, size = 0x800, scoped, tag = 'input window, operand 2, single buffered']
    #allocation11 [shape = 'u8[65536]{0}', space=vmem, size = 0x10000, scoped, tag = 'input window, operand 4, single buffered']
    #allocation12 [shape = 's32[1]{0}', space=sflag, size = 0x4, scoped, tag = 'scoped memory for tpu_custom_call.1']
    #allocation13 [shape = 'u8[262144]{0}', space=vmem, size = 0x40000, scoped, tag = 'output window, operand 0']
    %13 = vsyncpa [#allocation6], 0
    %s14 = scalar_lea.sflag [#allocation6], 1
    %15 = vsyncpa %s14, 0
    %16 = vsyncpa [#allocation9], 0
    %17 = vsyncpa [#allocation12], 0
    %18 = vsyncpa [#allocation7], 0
    %s19 = scalar_lea.sflag [#allocation7], 1
    %20 = vsyncpa %s19, 0
    loop: start=0, step=1, limit=6
    $region2: #{tpu_custom_call.1} parent=1 // loop_pre_header
      _
    $region3: #{tpu_custom_call.1} parent=1 // loop_header
      %s22 = sphi 0, %s26
      %p23 = scmp.ge.s32.totalorder %s22, 6
      %s29 = sphi 0, %s41
      %s30 = sphi 0, %s37
      %s31 = sphi 0, %s29
      %s32 = sphi 0, %s30
      %s33 = sphi 0, %s31
      %s34 = sphi 0, %s32
      %s44 = sphi 0, %s46
      %s47 = sphi 0, %s44
      %s48 = sphi 0, %s47
      %s64 = sphi 0, %s48
      %s68 = sphi 0, %s68
      %s70 = sphi 0, %s68
      %s71 = sphi 0, %s70
      %s85 = sphi 0, %s71
      %s89 = sphi 0, %s89
      %s91 = sphi 0, %s89
      %s92 = sphi 0, %s91
      %s106 = sphi 0, %s92
      %s110 = sphi 0, %s110
      %s112 = sphi 0, %s110
      %s113 = sphi 0, %s112
      %s127 = sphi 0, %s113
      %s131 = sphi 0, %s131
      %s133 = sphi 0, %s131
      %s134 = sphi 0, %s133
      %s148 = sphi 0, %s134
      %s152 = sphi 0, %s152
      %s154 = sphi 0, %s152
      %s155 = sphi 0, %s154
      %s169 = sphi 0, %s155
      %s173 = sphi 0, %s173
      %s175 = sphi 0, %s173
      %s176 = sphi 0, %s175
      %s190 = sphi 0, %s176
      %s194 = sphi 0, %s194
      %s196 = sphi 0, %s194
      %s197 = sphi 0, %s196
      %s211 = sphi 0, %s197
      %s219 = sphi 0, %s221
      %s222 = sphi 0, %s219
      %s223 = sphi 0, %s222
      %s239 = sphi 0, %s223
    $region4: #{tpu_custom_call.1} parent=1 // loop_header_branch
      %25 = sbr.rel (%p23) target = $region8
    $region5: #{tpu_custom_call.1} parent=1 // loop_body
      %s27 = ssub.s32 %s22, 1
      %s28 = ssub.s32 %s22, 2
      %s35 = sadd.s32 1, %s30
      %p36 = scmp.ge.s32.totalorder %s35, 2
      %s37 = scalar_select %p36, 0, %s35
      %s38 = sadd.s32 1, %s29
      %s39 = scalar_select %p36, %s38, %s29
      %p40 = scmp.ge.s32.totalorder %s39, 2
      %s41 = scalar_select %p40, 0, %s39
      %s42 = ssub.s32 %s29, %s41
      %p43 = scmp.eq.s32.totalorder %s42, 0
      %s45 = sadd.s32 %s44, 1
      %s46 = scalar_select %p43, %s44, %s45
      %p49 = pneg %p43
      %p50 = scmp.eq.s32.totalorder %s22, 3
      %p51 = por %p49, %p50
      %p52 = scmp.ne.s32.totalorder %s44, %s47
      %p53 = scmp.eq.s32.totalorder %s22, 0
      %p54 = por %p52, %p53
      %p55 = scmp.ne.s32.totalorder %s44, %s47
      %p56 = scmp.eq.s32.totalorder %s27, 3
      %p57 = por %p55, %p56
      %p58 = scmp.ne.s32.totalorder %s47, %s48
      %p59 = scmp.eq.s32.totalorder %s27, 0
      %p60 = por %p58, %p59
      %p61 = scmp.ne.s32.totalorder %s47, %s48
      %p62 = scmp.eq.s32.totalorder %s28, 3
      %p63 = por %p61, %p62
      %p65 = scmp.ne.s32.totalorder %s48, %s64
      %p66 = scmp.eq.s32.totalorder %s28, 0
      %p67 = por %p65, %p66
      %s69 = sadd.s32 %s68, 1
      %p72 = scmp.eq.s32.totalorder %s22, 3
      %p73 = scmp.ne.s32.totalorder %s68, %s70
      %p74 = scmp.eq.s32.totalorder %s22, 0
      %p75 = por %p73, %p74
      %p76 = scmp.ne.s32.totalorder %s68, %s70
      %p77 = scmp.eq.s32.totalorder %s27, 3
      %p78 = por %p76, %p77
      %p79 = scmp.ne.s32.totalorder %s70, %s71
      %p80 = scmp.eq.s32.totalorder %s27, 0
      %p81 = por %p79, %p80
      %p82 = scmp.ne.s32.totalorder %s70, %s71
      %p83 = scmp.eq.s32.totalorder %s28, 3
      %p84 = por %p82, %p83
      %p86 = scmp.ne.s32.totalorder %s71, %s85
      %p87 = scmp.eq.s32.totalorder %s28, 0
      %p88 = por %p86, %p87
      %s90 = sadd.s32 %s89, 1
      %p93 = scmp.eq.s32.totalorder %s22, 3
      %p94 = scmp.ne.s32.totalorder %s89, %s91
      %p95 = scmp.eq.s32.totalorder %s22, 0
      %p96 = por %p94, %p95
      %p97 = scmp.ne.s32.totalorder %s89, %s91
      %p98 = scmp.eq.s32.totalorder %s27, 3
      %p99 = por %p97, %p98
      %p100 = scmp.ne.s32.totalorder %s91, %s92
      %p101 = scmp.eq.s32.totalorder %s27, 0
      %p102 = por %p100, %p101
      %p103 = scmp.ne.s32.totalorder %s91, %s92
      %p104 = scmp.eq.s32.totalorder %s28, 3
      %p105 = por %p103, %p104
      %p107 = scmp.ne.s32.totalorder %s92, %s106
      %p108 = scmp.eq.s32.totalorder %s28, 0
      %p109 = por %p107, %p108
      %s111 = sadd.s32 %s110, 1
      %p114 = scmp.eq.s32.totalorder %s22, 3
      %p115 = scmp.ne.s32.totalorder %s110, %s112
      %p116 = scmp.eq.s32.totalorder %s22, 0
      %p117 = por %p115, %p116
      %p118 = scmp.ne.s32.totalorder %s110, %s112
      %p119 = scmp.eq.s32.totalorder %s27, 3
      %p120 = por %p118, %p119
      %p121 = scmp.ne.s32.totalorder %s112, %s113
      %p122 = scmp.eq.s32.totalorder %s27, 0
      %p123 = por %p121, %p122
      %p124 = scmp.ne.s32.totalorder %s112, %s113
      %p125 = scmp.eq.s32.totalorder %s28, 3
      %p126 = por %p124, %p125
      %p128 = scmp.ne.s32.totalorder %s113, %s127
      %p129 = scmp.eq.s32.totalorder %s28, 0
      %p130 = por %p128, %p129
      %s132 = sadd.s32 %s131, 1
      %p135 = scmp.eq.s32.totalorder %s22, 3
      %p136 = scmp.ne.s32.totalorder %s131, %s133
      %p137 = scmp.eq.s32.totalorder %s22, 0
      %p138 = por %p136, %p137
      %p139 = scmp.ne.s32.totalorder %s131, %s133
      %p140 = scmp.eq.s32.totalorder %s27, 3
      %p141 = por %p139, %p140
      %p142 = scmp.ne.s32.totalorder %s133, %s134
      %p143 = scmp.eq.s32.totalorder %s27, 0
      %p144 = por %p142, %p143
      %p145 = scmp.ne.s32.totalorder %s133, %s134
      %p146 = scmp.eq.s32.totalorder %s28, 3
      %p147 = por %p145, %p146
      %p149 = scmp.ne.s32.totalorder %s134, %s148
      %p150 = scmp.eq.s32.totalorder %s28, 0
      %p151 = por %p149, %p150
      %s153 = sadd.s32 %s152, 1
      %p156 = scmp.eq.s32.totalorder %s22, 3
      %p157 = scmp.ne.s32.totalorder %s152, %s154
      %p158 = scmp.eq.s32.totalorder %s22, 0
      %p159 = por %p157, %p158
      %p160 = scmp.ne.s32.totalorder %s152, %s154
      %p161 = scmp.eq.s32.totalorder %s27, 3
      %p162 = por %p160, %p161
      %p163 = scmp.ne.s32.totalorder %s154, %s155
      %p164 = scmp.eq.s32.totalorder %s27, 0
      %p165 = por %p163, %p164
      %p166 = scmp.ne.s32.totalorder %s154, %s155
      %p167 = scmp.eq.s32.totalorder %s28, 3
      %p168 = por %p166, %p167
      %p170 = scmp.ne.s32.totalorder %s155, %s169
      %p171 = scmp.eq.s32.totalorder %s28, 0
      %p172 = por %p170, %p171
      %s174 = sadd.s32 %s173, 1
      %p177 = scmp.eq.s32.totalorder %s22, 3
      %p178 = scmp.ne.s32.totalorder %s173, %s175
      %p179 = scmp.eq.s32.totalorder %s22, 0
      %p180 = por %p178, %p179
      %p181 = scmp.ne.s32.totalorder %s173, %s175
      %p182 = scmp.eq.s32.totalorder %s27, 3
      %p183 = por %p181, %p182
      %p184 = scmp.ne.s32.totalorder %s175, %s176
      %p185 = scmp.eq.s32.totalorder %s27, 0
      %p186 = por %p184, %p185
      %p187 = scmp.ne.s32.totalorder %s175, %s176
      %p188 = scmp.eq.s32.totalorder %s28, 3
      %p189 = por %p187, %p188
      %p191 = scmp.ne.s32.totalorder %s176, %s190
      %p192 = scmp.eq.s32.totalorder %s28, 0
      %p193 = por %p191, %p192
      %s195 = sadd.s32 %s194, 1
      %p198 = scmp.eq.s32.totalorder %s22, 3
      %p199 = scmp.ne.s32.totalorder %s194, %s196
      %p200 = scmp.eq.s32.totalorder %s22, 0
      %p201 = por %p199, %p200
      %p202 = scmp.ne.s32.totalorder %s194, %s196
      %p203 = scmp.eq.s32.totalorder %s27, 3
      %p204 = por %p202, %p203
      %p205 = scmp.ne.s32.totalorder %s196, %s197
      %p206 = scmp.eq.s32.totalorder %s27, 0
      %p207 = por %p205, %p206
      %p208 = scmp.ne.s32.totalorder %s196, %s197
      %p209 = scmp.eq.s32.totalorder %s28, 3
      %p210 = por %p208, %p209
      %p212 = scmp.ne.s32.totalorder %s197, %s211
      %p213 = scmp.eq.s32.totalorder %s28, 0
      %p214 = por %p212, %p213
      %s215 = ssub.s32 %s29, %s41
      %s216 = ssub.s32 %s30, %s37
      %s217 = sor.u32 %s215, %s216
      %p218 = scmp.eq.s32.totalorder %s217, 0
      %s220 = sadd.s32 %s219, 1
      %s221 = scalar_select %p218, %s219, %s220
      %p224 = pneg %p218
      %p225 = scmp.eq.s32.totalorder %s22, 3
      %p226 = por %p224, %p225
      %p227 = scmp.ne.s32.totalorder %s219, %s222
      %p228 = scmp.eq.s32.totalorder %s22, 0
      %p229 = por %p227, %p228
      %p230 = scmp.ne.s32.totalorder %s219, %s222
      %p231 = scmp.eq.s32.totalorder %s27, 3
      %p232 = por %p230, %p231
      %p233 = scmp.ne.s32.totalorder %s222, %s223
      %p234 = scmp.eq.s32.totalorder %s27, 0
      %p235 = por %p233, %p234
      %p236 = scmp.ne.s32.totalorder %s222, %s223
      %p237 = scmp.eq.s32.totalorder %s28, 3
      %p238 = por %p236, %p237
      %p240 = scmp.ne.s32.totalorder %s223, %s239
      %p241 = scmp.eq.s32.totalorder %s28, 0
      %p242 = por %p240, %p241
      %p243 = scmp.le.s32.totalorder 1, %s22
      %p244 = scmp.lt.s32.totalorder %s22, 5
      %p245 = pnand %p243, %p244
      %p246 = pneg %p245
      // Predicated region
      $region9: #{tpu_custom_call.1} parent=5 // pred_check
        _
      $region10: #{tpu_custom_call.1} parent=5 // pred_check_branch
        %248 = sbr.rel (%p245) target = $region12
      $region11: #{tpu_custom_call.1} parent=5 // pred_region
        %s249 = ssub.s32 %s22, 1
        // Predicated region
        $region13: #{tpu_custom_call.1} parent=11 // pred_check
          %p250 = pneg %p81
        $region14: #{tpu_custom_call.1} parent=11 // pred_check_branch
          %252 = sbr.rel (%p250) target = $region16
        $region15: #{tpu_custom_call.1} parent=11 // pred_region
          %254 = vsyncadd [#allocation9], 0
          %s255 = sshll.u32 %s1, 4
          %s256 = int_to_ptr.hbm [resolvable:$true] %s255
          %s257 = sshll.u32 [#allocation8], 4
          %s258 = int_to_ptr.vmem [resolvable:$true] %s257
          %263 = dma.hbm_to_vmem [thread:$0]  %s256, 6144, %s258, [#allocation9], 384, 384, 24
        $region16: #{tpu_custom_call.1} parent=11 // pred_fallthru
          _
        // Predicated region
        $region17: #{tpu_custom_call.1} parent=11 // pred_check
          %p264 = pneg %p102
        $region18: #{tpu_custom_call.1} parent=11 // pred_check_branch
          %266 = sbr.rel (%p264) target = $region20
        $region19: #{tpu_custom_call.1} parent=11 // pred_region
          %268 = vsyncadd [#allocation9], 0
          %s270 = sshll.u32 %s2, 4
          %s271 = int_to_ptr.hbm [resolvable:$true] %s270
          %s272 = sshll.u32 [#allocation10], 4
          %s273 = int_to_ptr.vmem [resolvable:$true] %s272
          %275 = dma.hbm_to_vmem [thread:$0]  %s271, 48, %s273, [#allocation9]
        $region20: #{tpu_custom_call.1} parent=11 // pred_fallthru
          _
        // Predicated region
        $region21: #{tpu_custom_call.1} parent=11 // pred_check
          %p276 = pneg %p123
        $region22: #{tpu_custom_call.1} parent=11 // pred_check_branch
          %278 = sbr.rel (%p276) target = $region24
        $region23: #{tpu_custom_call.1} parent=11 // pred_region
          _
        $region24: #{tpu_custom_call.1} parent=11 // pred_fallthru
          _
        // Predicated region
        $region25: #{tpu_custom_call.1} parent=11 // pred_check
          %p279 = pneg %p144
        $region26: #{tpu_custom_call.1} parent=11 // pred_check_branch
          %281 = sbr.rel (%p279) target = $region28
        $region27: #{tpu_custom_call.1} parent=11 // pred_region
          %283 = vsyncadd [#allocation12], 0
          %s284 = sshll.u32 %s4, 4
          %s285 = int_to_ptr.hbm [resolvable:$true] %s284
          %s286 = sshll.u32 [#allocation11], 4
          %s287 = int_to_ptr.vmem [resolvable:$true] %s286
          %292 = dma.hbm_to_vmem [thread:$0]  %s285, 2048, %s287, [#allocation12], 128, 128, 8
        $region28: #{tpu_custom_call.1} parent=11 // pred_fallthru
          _
        // Predicated region
        $region29: #{tpu_custom_call.1} parent=11 // pred_check
          %p293 = pneg %p165
        $region30: #{tpu_custom_call.1} parent=11 // pred_check_branch
          %295 = sbr.rel (%p293) target = $region32
        $region31: #{tpu_custom_call.1} parent=11 // pred_region
          _
        $region32: #{tpu_custom_call.1} parent=11 // pred_fallthru
          _
        // Predicated region
        $region33: #{tpu_custom_call.1} parent=11 // pred_check
          %p296 = pneg %p186
        $region34: #{tpu_custom_call.1} parent=11 // pred_check_branch
          %298 = sbr.rel (%p296) target = $region36
        $region35: #{tpu_custom_call.1} parent=11 // pred_region
          _
        $region36: #{tpu_custom_call.1} parent=11 // pred_fallthru
          _
        // Predicated region
        $region37: #{tpu_custom_call.1} parent=11 // pred_check
          %p299 = pneg %p207
        $region38: #{tpu_custom_call.1} parent=11 // pred_check_branch
          %301 = sbr.rel (%p299) target = $region40
        $region39: #{tpu_custom_call.1} parent=11 // pred_region
          _
        $region40: #{tpu_custom_call.1} parent=11 // pred_fallthru
          _
      $region12: #{tpu_custom_call.1} parent=5 // pred_fallthru
        _
      %p302 = scmp.lt.s32.totalorder %s22, 4
      // Predicated region
      $region41: #{tpu_custom_call.1} parent=5 // pred_check
        %p303 = pneg %p302
      $region42: #{tpu_custom_call.1} parent=5 // pred_check_branch
        %305 = sbr.rel (%p303) target = $region44
      $region43: #{tpu_custom_call.1} parent=5 // pred_region
        // Predicated region
        $region45: #{tpu_custom_call.1} parent=43 // pred_check
          %p306 = pneg %p54
        $region46: #{tpu_custom_call.1} parent=43 // pred_check_branch
          %308 = sbr.rel (%p306) target = $region48
        $region47: #{tpu_custom_call.1} parent=43 // pred_region
          %s309 = sand.u32 %s44, 1
          %s310 = scalar_lea.sflag [#allocation6], %s309
          %s311 = sand.u32 %s44, 1
          %s312 = smul.addr %s311, 512
          %s313 = scalar_lea.vmem [#allocation5], %s312
          %315 = vsyncadd %s310, 0
          %s316 = smul.addr %s29, 64
          %s317 = smul.addr %s316, 8
          %s318 = scalar_lea.hbm %s0, %s317
          %s319 = sshll.u32 %s318, 4
          %s320 = int_to_ptr.hbm [resolvable:$true] %s319
          %s321 = sshll.u32 %s313, 4
          %s322 = int_to_ptr.vmem [resolvable:$true] %s321
          %327 = dma.hbm_to_vmem [thread:$0]  %s320, 8192, %s322, %s310, 128, 128, 8
        $region48: #{tpu_custom_call.1} parent=43 // pred_fallthru
          _
      $region44: #{tpu_custom_call.1} parent=5 // pred_fallthru
        _
      %p328 = scmp.le.s32.totalorder 1, %s22
      %p329 = scmp.lt.s32.totalorder %s22, 5
      %p330 = pnand %p328, %p329
      %p331 = pneg %p330
      // Predicated region
      $region49: #{tpu_custom_call.1} parent=5 // pred_check
        _
      $region50: #{tpu_custom_call.1} parent=5 // pred_check_branch
        %333 = sbr.rel (%p330) target = $region52
      $region51: #{tpu_custom_call.1} parent=5 // pred_region
        %s334 = ssub.s32 %s22, 1
        %s335 = sand.u32 %s47, 1
        %s336 = scalar_lea.sflag [#allocation6], %s335
        %s337 = sand.u32 %s47, 1
        %s338 = smul.addr %s337, 512
        %s339 = scalar_lea.vmem [#allocation5], %s338
        // Predicated region
        $region53: #{tpu_custom_call.1} parent=51 // pred_check
          %p340 = pneg %p60
        $region54: #{tpu_custom_call.1} parent=51 // pred_check_branch
          %342 = sbr.rel (%p340) target = $region56
        $region55: #{tpu_custom_call.1} parent=51 // pred_region
          %344 = dma.done %s336, 8192
        $region56: #{tpu_custom_call.1} parent=51 // pred_fallthru
          _
        // Predicated region
        $region57: #{tpu_custom_call.1} parent=51 // pred_check
          %p345 = pneg %p81
        $region58: #{tpu_custom_call.1} parent=51 // pred_check_branch
          %347 = sbr.rel (%p345) target = $region60
        $region59: #{tpu_custom_call.1} parent=51 // pred_region
          %349 = dma.done [#allocation9], 6144
        $region60: #{tpu_custom_call.1} parent=51 // pred_fallthru
          _
        // Predicated region
        $region61: #{tpu_custom_call.1} parent=51 // pred_check
          %p350 = pneg %p102
        $region62: #{tpu_custom_call.1} parent=51 // pred_check_branch
          %352 = sbr.rel (%p350) target = $region64
        $region63: #{tpu_custom_call.1} parent=51 // pred_region
          %354 = dma.done [#allocation9], 48
        $region64: #{tpu_custom_call.1} parent=51 // pred_fallthru
          _
        // Predicated region
        $region65: #{tpu_custom_call.1} parent=51 // pred_check
          %p355 = pneg %p144
        $region66: #{tpu_custom_call.1} parent=51 // pred_check_branch
          %357 = sbr.rel (%p355) target = $region68
        $region67: #{tpu_custom_call.1} parent=51 // pred_region
          %359 = dma.done [#allocation12], 2048
        $region68: #{tpu_custom_call.1} parent=51 // pred_fallthru
          _
        %s360 = sand.u32 %s47, 1
        %s361 = scalar_lea.sflag [#allocation6], %s360
        %s362 = sand.u32 %s47, 1
        %s363 = smul.addr %s362, 512
        %s364 = scalar_lea.vmem [#allocation5], %s363
        %p365 = pneg %p60
        %p366 = pneg %p57
        %p367 = pneg %p81
        %p368 = pneg %p78
        %p369 = pneg %p102
        %p370 = pneg %p99
        %p371 = pneg %p123
        %p372 = pneg %p120
        %p373 = pneg %p144
        %p374 = pneg %p141
        %p375 = pneg %p165
        %p376 = pneg %p162
        %p377 = pneg %p186
        %p378 = pneg %p183
        %p379 = pneg %p207
        %p380 = pneg %p204
        %p381 = pneg %p235
        %p382 = pneg %p232
        %s383 = sand.u32 %s222, 1
        %s384 = scalar_lea.sflag [#allocation7], %s383
        %s385 = sand.u32 %s222, 1
        %s386 = smul.addr %s385, 256
        %s387 = scalar_lea.vmem [#allocation13], %s386
        %s388 = smul.u32 32, %s32
        %p389 = scmp.eq.s32.totalorder %s32, 0
        // Predicated region
        $region69: #{tpu_custom_call.1} parent=51 // pred_check
          %p390 = pneg %p389
        $region70: #{tpu_custom_call.1} parent=51 // pred_check_branch
          %392 = sbr.rel (%p390) target = $region72
        $region71: #{tpu_custom_call.1} parent=51 // pred_region
          %v393 = vld [vmem:[%s339] sm:$0xff]
          %v394 = vld [vmem:[%s339 + $0x8] sm:$0xff]
          %v395 = vld [vmem:[%s339 + $0x10] sm:$0xff]
          %v396 = vld [vmem:[%s339 + $0x18] sm:$0xff]
          %v397 = vld [vmem:[%s339 + $0x20] sm:$0xff]
          %v398 = vld [vmem:[%s339 + $0x28] sm:$0xff]
          %v399 = vld [vmem:[%s339 + $0x30] sm:$0xff]
          %v400 = vld [vmem:[%s339 + $0x38] sm:$0xff]
          %v401 = vld [vmem:[%s339 + $0x40] sm:$0xff]
          %v402 = vld [vmem:[%s339 + $0x48] sm:$0xff]
          %v403 = vld [vmem:[%s339 + $0x50] sm:$0xff]
          %v404 = vld [vmem:[%s339 + $0x58] sm:$0xff]
          %v405 = vld [vmem:[%s339 + $0x60] sm:$0xff]
          %v406 = vld [vmem:[%s339 + $0x68] sm:$0xff]
          %v407 = vld [vmem:[%s339 + $0x70] sm:$0xff]
          %v408 = vld [vmem:[%s339 + $0x78] sm:$0xff]
          %v409 = vld [vmem:[%s339 + $0x80] sm:$0xff]
          %v410 = vld [vmem:[%s339 + $0x88] sm:$0xff]
          %v411 = vld [vmem:[%s339 + $0x90] sm:$0xff]
          %v412 = vld [vmem:[%s339 + $0x98] sm:$0xff]
          %v413 = vld [vmem:[%s339 + $0xa0] sm:$0xff]
          %v414 = vld [vmem:[%s339 + $0xa8] sm:$0xff]
          %v415 = vld [vmem:[%s339 + $0xb0] sm:$0xff]
          %v416 = vld [vmem:[%s339 + $0xb8] sm:$0xff]
          %v417 = vld [vmem:[%s339 + $0xc0] sm:$0xff]
          %v418 = vld [vmem:[%s339 + $0xc8] sm:$0xff]
          %v419 = vld [vmem:[%s339 + $0xd0] sm:$0xff]
          %v420 = vld [vmem:[%s339 + $0xd8] sm:$0xff]
          %v421 = vld [vmem:[%s339 + $0xe0] sm:$0xff]
          %v422 = vld [vmem:[%s339 + $0xe8] sm:$0xff]
          %v423 = vld [vmem:[%s339 + $0xf0] sm:$0xff]
          %v424 = vld [vmem:[%s339 + $0xf8] sm:$0xff]
          %v425 = vld [vmem:[%s339 + $0x100] sm:$0xff]
          %v426 = vld [vmem:[%s339 + $0x108] sm:$0xff]
          %v427 = vld [vmem:[%s339 + $0x110] sm:$0xff]
          %v428 = vld [vmem:[%s339 + $0x118] sm:$0xff]
          %v429 = vld [vmem:[%s339 + $0x120] sm:$0xff]
          %v430 = vld [vmem:[%s339 + $0x128] sm:$0xff]
          %v431 = vld [vmem:[%s339 + $0x130] sm:$0xff]
          %v432 = vld [vmem:[%s339 + $0x138] sm:$0xff]
          %v433 = vld [vmem:[%s339 + $0x140] sm:$0xff]
          %v434 = vld [vmem:[%s339 + $0x148] sm:$0xff]
          %v435 = vld [vmem:[%s339 + $0x150] sm:$0xff]
          %v436 = vld [vmem:[%s339 + $0x158] sm:$0xff]
          %v437 = vld [vmem:[%s339 + $0x160] sm:$0xff]
          %v438 = vld [vmem:[%s339 + $0x168] sm:$0xff]
          %v439 = vld [vmem:[%s339 + $0x170] sm:$0xff]
          %v440 = vld [vmem:[%s339 + $0x178] sm:$0xff]
          %v441 = vld [vmem:[%s339 + $0x180] sm:$0xff]
          %v442 = vld [vmem:[%s339 + $0x188] sm:$0xff]
          %v443 = vld [vmem:[%s339 + $0x190] sm:$0xff]
          %v444 = vld [vmem:[%s339 + $0x198] sm:$0xff]
          %v445 = vld [vmem:[%s339 + $0x1a0] sm:$0xff]
          %v446 = vld [vmem:[%s339 + $0x1a8] sm:$0xff]
          %v447 = vld [vmem:[%s339 + $0x1b0] sm:$0xff]
          %v448 = vld [vmem:[%s339 + $0x1b8] sm:$0xff]
          %v449 = vld [vmem:[%s339 + $0x1c0] sm:$0xff]
          %v450 = vld [vmem:[%s339 + $0x1c8] sm:$0xff]
          %v451 = vld [vmem:[%s339 + $0x1d0] sm:$0xff]
          %v452 = vld [vmem:[%s339 + $0x1d8] sm:$0xff]
          %v453 = vld [vmem:[%s339 + $0x1e0] sm:$0xff]
          %v454 = vld [vmem:[%s339 + $0x1e8] sm:$0xff]
          %v455 = vld [vmem:[%s339 + $0x1f0] sm:$0xff]
          %v456 = vld [vmem:[%s339 + $0x1f8] sm:$0xff]
          %v457 = vld [vmem:[#allocation8] sm:$0xff]
          %v458 = vld [vmem:[#allocation8 + $0x8] sm:$0xff]
          %v459 = vld [vmem:[#allocation8 + $0x10] sm:$0xff]
          %v460 = vld [vmem:[#allocation8 + $0x18] sm:$0xff]
          %v461 = vld [vmem:[#allocation8 + $0x20] sm:$0xff]
          %v462 = vld [vmem:[#allocation8 + $0x28] sm:$0xff]
          %v463 = vld [vmem:[#allocation8 + $0x30] sm:$0xff]
          %v464 = vld [vmem:[#allocation8 + $0x38] sm:$0xff]
          %v465 = vld [vmem:[#allocation8 + $0x40] sm:$0xff]
          %v466 = vld [vmem:[#allocation8 + $0x48] sm:$0xff]
          %v467 = vld [vmem:[#allocation8 + $0x50] sm:$0xff]
          %v468 = vld [vmem:[#allocation8 + $0x58] sm:$0xff]
          %v469 = vld [vmem:[#allocation8 + $0x60] sm:$0xff]
          %v470 = vld [vmem:[#allocation8 + $0x68] sm:$0xff]
          %v471 = vld [vmem:[#allocation8 + $0x70] sm:$0xff]
          %v472 = vld [vmem:[#allocation8 + $0x78] sm:$0xff]
          %v473 = vld [vmem:[#allocation8 + $0x80] sm:$0xff]
          %v474 = vld [vmem:[#allocation8 + $0x88] sm:$0xff]
          %v475 = vld [vmem:[#allocation8 + $0x90] sm:$0xff]
          %v476 = vld [vmem:[#allocation8 + $0x98] sm:$0xff]
          %v477 = vld [vmem:[#allocation8 + $0xa0] sm:$0xff]
          %v478 = vld [vmem:[#allocation8 + $0xa8] sm:$0xff]
          %v479 = vld [vmem:[#allocation8 + $0xb0] sm:$0xff]
          %v480 = vld [vmem:[#allocation8 + $0xb8] sm:$0xff]
          %v481 = vld [vmem:[#allocation8 + $0xc0] sm:$0xff]
          %v482 = vld [vmem:[#allocation8 + $0xc8] sm:$0xff]
          %v483 = vld [vmem:[#allocation8 + $0xd0] sm:$0xff]
          %v484 = vld [vmem:[#allocation8 + $0xd8] sm:$0xff]
          %v485 = vld [vmem:[#allocation8 + $0xe0] sm:$0xff]
          %v486 = vld [vmem:[#allocation8 + $0xe8] sm:$0xff]
          %v487 = vld [vmem:[#allocation8 + $0xf0] sm:$0xff]
          %v488 = vld [vmem:[#allocation8 + $0xf8] sm:$0xff]
          %v489 = vld [vmem:[#allocation8 + $0x100] sm:$0xff]
          %v490 = vld [vmem:[#allocation8 + $0x108] sm:$0xff]
          %v491 = vld [vmem:[#allocation8 + $0x110] sm:$0xff]
          %v492 = vld [vmem:[#allocation8 + $0x118] sm:$0xff]
          %v493 = vld [vmem:[#allocation8 + $0x120] sm:$0xff]
          %v494 = vld [vmem:[#allocation8 + $0x128] sm:$0xff]
          %v495 = vld [vmem:[#allocation8 + $0x130] sm:$0xff]
          %v496 = vld [vmem:[#allocation8 + $0x138] sm:$0xff]
          %v497 = vld [vmem:[#allocation8 + $0x140] sm:$0xff]
          %v498 = vld [vmem:[#allocation8 + $0x148] sm:$0xff]
          %v499 = vld [vmem:[#allocation8 + $0x150] sm:$0xff]
          %v500 = vld [vmem:[#allocation8 + $0x158] sm:$0xff]
          %v501 = vld [vmem:[#allocation8 + $0x160] sm:$0xff]
          %v502 = vld [vmem:[#allocation8 + $0x168] sm:$0xff]
          %v503 = vld [vmem:[#allocation8 + $0x170] sm:$0xff]
          %v504 = vld [vmem:[#allocation8 + $0x178] sm:$0xff]
          %v505 = vld [vmem:[#allocation10] sm:$0x7]
          %v507 = vperm.slane %v505, 0
          %v508 = vperm.slane %v505, 1
          %v509 = vperm.slane %v505, 2
          %513 = vmatpush.msra.mxu0 %v502
          %514 = vmatpush.msra.mxu0 %v499
          %515 = vmatpush.msra.mxu0 %v496
          %516 = vmatpush.msra.mxu0 %v493
          %517 = vmatpush.msra.mxu0 %v490
          %518 = vmatpush.msra.mxu0 %v487
          %519 = vmatpush.msra.mxu0 %v484
          %520 = vmatpush.msra.mxu0 %v481
          %521 = vmatpush.msra.mxu0 %v478
          %522 = vmatpush.msra.mxu0 %v475
          %523 = vmatpush.msra.mxu0 %v472
          %524 = vmatpush.msra.mxu0 %v469
          %525 = vmatpush.msra.mxu0 %v466
          %526 = vmatpush.msra.mxu0 %v463
          %527 = vmatpush.msra.mxu0 %v460
          %528 = vmatpush.msra.mxu0 %v457
          %529 = vmatmul.f32.gmra.mxu0 %v393
          %v530 = vpop.f32.mrf.mxu0
          %v531 = vadd.f32 %v507, %v530
          %532 = vmatmul.f32.gmra.mxu0 %v394
          %v533 = vpop.f32.mrf.mxu0
          %v534 = vadd.f32 %v507, %v533
          %535 = vmatmul.f32.gmra.mxu0 %v395
          %v536 = vpop.f32.mrf.mxu0
          %v537 = vadd.f32 %v507, %v536
          %538 = vmatmul.f32.gmra.mxu0 %v396
          %v539 = vpop.f32.mrf.mxu0
          %v540 = vadd.f32 %v507, %v539
          %541 = vmatmul.f32.gmra.mxu0 %v397
          %v542 = vpop.f32.mrf.mxu0
          %v543 = vadd.f32 %v507, %v542
          %544 = vmatmul.f32.gmra.mxu0 %v398
          %v545 = vpop.f32.mrf.mxu0
          %v546 = vadd.f32 %v507, %v545
          %547 = vmatmul.f32.gmra.mxu0 %v399
          %v548 = vpop.f32.mrf.mxu0
          %v549 = vadd.f32 %v507, %v548
          %550 = vmatmul.f32.gmra.mxu0 %v400
          %v551 = vpop.f32.mrf.mxu0
          %v552 = vadd.f32 %v507, %v551
          %553 = vmatmul.f32.gmra.mxu0 %v401
          %v554 = vpop.f32.mrf.mxu0
          %v555 = vadd.f32 %v507, %v554
          %556 = vmatmul.f32.gmra.mxu0 %v402
          %v557 = vpop.f32.mrf.mxu0
          %v558 = vadd.f32 %v507, %v557
          %559 = vmatmul.f32.gmra.mxu0 %v403
          %v560 = vpop.f32.mrf.mxu0
          %v561 = vadd.f32 %v507, %v560
          %562 = vmatmul.f32.gmra.mxu0 %v404
          %v563 = vpop.f32.mrf.mxu0
          %v564 = vadd.f32 %v507, %v563
          %565 = vmatmul.f32.gmra.mxu0 %v405
          %v566 = vpop.f32.mrf.mxu0
          %v567 = vadd.f32 %v507, %v566
          %568 = vmatmul.f32.gmra.mxu0 %v406
          %v569 = vpop.f32.mrf.mxu0
          %v570 = vadd.f32 %v507, %v569
          %571 = vmatmul.f32.gmra.mxu0 %v407
          %v572 = vpop.f32.mrf.mxu0
          %v573 = vadd.f32 %v507, %v572
          %574 = vmatmul.f32.gmra.mxu0 %v408
          %v575 = vpop.f32.mrf.mxu0
          %v576 = vadd.f32 %v507, %v575
          %577 = vmatmul.f32.gmra.mxu0 %v409
          %v578 = vpop.f32.mrf.mxu0
          %v579 = vadd.f32 %v507, %v578
          %580 = vmatmul.f32.gmra.mxu0 %v410
          %v581 = vpop.f32.mrf.mxu0
          %v582 = vadd.f32 %v507, %v581
          %583 = vmatmul.f32.gmra.mxu0 %v411
          %v584 = vpop.f32.mrf.mxu0
          %v585 = vadd.f32 %v507, %v584
          %586 = vmatmul.f32.gmra.mxu0 %v412
          %v587 = vpop.f32.mrf.mxu0
          %v588 = vadd.f32 %v507, %v587
          %589 = vmatmul.f32.gmra.mxu0 %v413
          %v590 = vpop.f32.mrf.mxu0
          %v591 = vadd.f32 %v507, %v590
          %592 = vmatmul.f32.gmra.mxu0 %v414
          %v593 = vpop.f32.mrf.mxu0
          %v594 = vadd.f32 %v507, %v593
          %595 = vmatmul.f32.gmra.mxu0 %v415
          %v596 = vpop.f32.mrf.mxu0
          %v597 = vadd.f32 %v507, %v596
          %598 = vmatmul.f32.gmra.mxu0 %v416
          %v599 = vpop.f32.mrf.mxu0
          %v600 = vadd.f32 %v507, %v599
          %601 = vmatmul.f32.gmra.mxu0 %v417
          %v602 = vpop.f32.mrf.mxu0
          %v603 = vadd.f32 %v507, %v602
          %604 = vmatmul.f32.gmra.mxu0 %v418
          %v605 = vpop.f32.mrf.mxu0
          %v606 = vadd.f32 %v507, %v605
          %607 = vmatmul.f32.gmra.mxu0 %v419
          %v608 = vpop.f32.mrf.mxu0
          %v609 = vadd.f32 %v507, %v608
          %610 = vmatmul.f32.gmra.mxu0 %v420
          %v611 = vpop.f32.mrf.mxu0
          %v612 = vadd.f32 %v507, %v611
          %613 = vmatmul.f32.gmra.mxu0 %v421
          %v614 = vpop.f32.mrf.mxu0
          %v615 = vadd.f32 %v507, %v614
          %616 = vmatmul.f32.gmra.mxu0 %v422
          %v617 = vpop.f32.mrf.mxu0
          %v618 = vadd.f32 %v507, %v617
          %619 = vmatmul.f32.gmra.mxu0 %v423
          %v620 = vpop.f32.mrf.mxu0
          %v621 = vadd.f32 %v507, %v620
          %622 = vmatmul.f32.gmra.mxu0 %v424
          %v623 = vpop.f32.mrf.mxu0
          %v624 = vadd.f32 %v507, %v623
          %625 = vmatmul.f32.gmra.mxu0 %v425
          %v626 = vpop.f32.mrf.mxu0
          %v627 = vadd.f32 %v507, %v626
          %628 = vmatmul.f32.gmra.mxu0 %v426
          %v629 = vpop.f32.mrf.mxu0
          %v630 = vadd.f32 %v507, %v629
          %631 = vmatmul.f32.gmra.mxu0 %v427
          %v632 = vpop.f32.mrf.mxu0
          %v633 = vadd.f32 %v507, %v632
          %634 = vmatmul.f32.gmra.mxu0 %v428
          %v635 = vpop.f32.mrf.mxu0
          %v636 = vadd.f32 %v507, %v635
          %637 = vmatmul.f32.gmra.mxu0 %v429
          %v638 = vpop.f32.mrf.mxu0
          %v639 = vadd.f32 %v507, %v638
          %640 = vmatmul.f32.gmra.mxu0 %v430
          %v641 = vpop.f32.mrf.mxu0
          %v642 = vadd.f32 %v507, %v641
          %643 = vmatmul.f32.gmra.mxu0 %v431
          %v644 = vpop.f32.mrf.mxu0
          %v645 = vadd.f32 %v507, %v644
          %646 = vmatmul.f32.gmra.mxu0 %v432
          %v647 = vpop.f32.mrf.mxu0
          %v648 = vadd.f32 %v507, %v647
          %649 = vmatmul.f32.gmra.mxu0 %v433
          %v650 = vpop.f32.mrf.mxu0
          %v651 = vadd.f32 %v507, %v650
          %652 = vmatmul.f32.gmra.mxu0 %v434
          %v653 = vpop.f32.mrf.mxu0
          %v654 = vadd.f32 %v507, %v653
          %655 = vmatmul.f32.gmra.mxu0 %v435
          %v656 = vpop.f32.mrf.mxu0
          %v657 = vadd.f32 %v507, %v656
          %658 = vmatmul.f32.gmra.mxu0 %v436
          %v659 = vpop.f32.mrf.mxu0
          %v660 = vadd.f32 %v507, %v659
          %661 = vmatmul.f32.gmra.mxu0 %v437
          %v662 = vpop.f32.mrf.mxu0
          %v663 = vadd.f32 %v507, %v662
          %664 = vmatmul.f32.gmra.mxu0 %v438
          %v665 = vpop.f32.mrf.mxu0
          %v666 = vadd.f32 %v507, %v665
          %667 = vmatmul.f32.gmra.mxu0 %v439
          %v668 = vpop.f32.mrf.mxu0
          %v669 = vadd.f32 %v507, %v668
          %670 = vmatmul.f32.gmra.mxu0 %v440
          %v671 = vpop.f32.mrf.mxu0
          %v672 = vadd.f32 %v507, %v671
          %673 = vmatmul.f32.gmra.mxu0 %v441
          %v674 = vpop.f32.mrf.mxu0
          %v675 = vadd.f32 %v507, %v674
          %676 = vmatmul.f32.gmra.mxu0 %v442
          %v677 = vpop.f32.mrf.mxu0
          %v678 = vadd.f32 %v507, %v677
          %679 = vmatmul.f32.gmra.mxu0 %v443
          %v680 = vpop.f32.mrf.mxu0
          %v681 = vadd.f32 %v507, %v680
          %682 = vmatmul.f32.gmra.mxu0 %v444
          %v683 = vpop.f32.mrf.mxu0
          %v684 = vadd.f32 %v507, %v683
          %685 = vmatmul.f32.gmra.mxu0 %v445
          %v686 = vpop.f32.mrf.mxu0
          %v687 = vadd.f32 %v507, %v686
          %688 = vmatmul.f32.gmra.mxu0 %v446
          %v689 = vpop.f32.mrf.mxu0
          %v690 = vadd.f32 %v507, %v689
          %691 = vmatmul.f32.gmra.mxu0 %v447
          %v692 = vpop.f32.mrf.mxu0
          %v693 = vadd.f32 %v507, %v692
          %694 = vmatmul.f32.gmra.mxu0 %v448
          %v695 = vpop.f32.mrf.mxu0
          %v696 = vadd.f32 %v507, %v695
          %697 = vmatmul.f32.gmra.mxu0 %v449
          %v698 = vpop.f32.mrf.mxu0
          %v699 = vadd.f32 %v507, %v698
          %700 = vmatmul.f32.gmra.mxu0 %v450
          %v701 = vpop.f32.mrf.mxu0
          %v702 = vadd.f32 %v507, %v701
          %703 = vmatmul.f32.gmra.mxu0 %v451
          %v704 = vpop.f32.mrf.mxu0
          %v705 = vadd.f32 %v507, %v704
          %706 = vmatmul.f32.gmra.mxu0 %v452
          %v707 = vpop.f32.mrf.mxu0
          %v708 = vadd.f32 %v507, %v707
          %709 = vmatmul.f32.gmra.mxu0 %v453
          %v710 = vpop.f32.mrf.mxu0
          %v711 = vadd.f32 %v507, %v710
          %712 = vmatmul.f32.gmra.mxu0 %v454
          %v713 = vpop.f32.mrf.mxu0
          %v714 = vadd.f32 %v507, %v713
          %715 = vmatmul.f32.gmra.mxu0 %v455
          %v716 = vpop.f32.mrf.mxu0
          %v717 = vadd.f32 %v507, %v716
          %718 = vmatmul.f32.gmra.mxu0 %v456
          %v719 = vpop.f32.mrf.mxu0
          %v720 = vadd.f32 %v507, %v719
          %721 = vdwg.mxu0
          %722 = vmatpush.msra.mxu0 %v503
          %723 = vmatpush.msra.mxu0 %v500
          %724 = vmatpush.msra.mxu0 %v497
          %725 = vmatpush.msra.mxu0 %v494
          %726 = vmatpush.msra.mxu0 %v491
          %727 = vmatpush.msra.mxu0 %v488
          %728 = vmatpush.msra.mxu0 %v485
          %729 = vmatpush.msra.mxu0 %v482
          %730 = vmatpush.msra.mxu0 %v479
          %731 = vmatpush.msra.mxu0 %v476
          %732 = vmatpush.msra.mxu0 %v473
          %733 = vmatpush.msra.mxu0 %v470
          %734 = vmatpush.msra.mxu0 %v467
          %735 = vmatpush.msra.mxu0 %v464
          %736 = vmatpush.msra.mxu0 %v461
          %737 = vmatpush.msra.mxu0 %v458
          %738 = vmatmul.f32.gmra.mxu0 %v393
          %v739 = vpop.f32.mrf.mxu0
          %v740 = vadd.f32 %v508, %v739
          %741 = vmatmul.f32.gmra.mxu0 %v394
          %v742 = vpop.f32.mrf.mxu0
          %v743 = vadd.f32 %v508, %v742
          %744 = vmatmul.f32.gmra.mxu0 %v395
          %v745 = vpop.f32.mrf.mxu0
          %v746 = vadd.f32 %v508, %v745
          %747 = vmatmul.f32.gmra.mxu0 %v396
          %v748 = vpop.f32.mrf.mxu0
          %v749 = vadd.f32 %v508, %v748
          %750 = vmatmul.f32.gmra.mxu0 %v397
          %v751 = vpop.f32.mrf.mxu0
          %v752 = vadd.f32 %v508, %v751
          %753 = vmatmul.f32.gmra.mxu0 %v398
          %v754 = vpop.f32.mrf.mxu0
          %v755 = vadd.f32 %v508, %v754
          %756 = vmatmul.f32.gmra.mxu0 %v399
          %v757 = vpop.f32.mrf.mxu0
          %v758 = vadd.f32 %v508, %v757
          %759 = vmatmul.f32.gmra.mxu0 %v400
          %v760 = vpop.f32.mrf.mxu0
          %v761 = vadd.f32 %v508, %v760
          %762 = vmatmul.f32.gmra.mxu0 %v401
          %v763 = vpop.f32.mrf.mxu0
          %v764 = vadd.f32 %v508, %v763
          %765 = vmatmul.f32.gmra.mxu0 %v402
          %v766 = vpop.f32.mrf.mxu0
          %v767 = vadd.f32 %v508, %v766
          %768 = vmatmul.f32.gmra.mxu0 %v403
          %v769 = vpop.f32.mrf.mxu0
          %v770 = vadd.f32 %v508, %v769
          %771 = vmatmul.f32.gmra.mxu0 %v404
          %v772 = vpop.f32.mrf.mxu0
          %v773 = vadd.f32 %v508, %v772
          %774 = vmatmul.f32.gmra.mxu0 %v405
          %v775 = vpop.f32.mrf.mxu0
          %v776 = vadd.f32 %v508, %v775
          %777 = vmatmul.f32.gmra.mxu0 %v406
          %v778 = vpop.f32.mrf.mxu0
          %v779 = vadd.f32 %v508, %v778
          %780 = vmatmul.f32.gmra.mxu0 %v407
          %v781 = vpop.f32.mrf.mxu0
          %v782 = vadd.f32 %v508, %v781
          %783 = vmatmul.f32.gmra.mxu0 %v408
          %v784 = vpop.f32.mrf.mxu0
          %v785 = vadd.f32 %v508, %v784
          %786 = vmatmul.f32.gmra.mxu0 %v409
          %v787 = vpop.f32.mrf.mxu0
          %v788 = vadd.f32 %v508, %v787
          %789 = vmatmul.f32.gmra.mxu0 %v410
          %v790 = vpop.f32.mrf.mxu0
          %v791 = vadd.f32 %v508, %v790
          %792 = vmatmul.f32.gmra.mxu0 %v411
          %v793 = vpop.f32.mrf.mxu0
          %v794 = vadd.f32 %v508, %v793
          %795 = vmatmul.f32.gmra.mxu0 %v412
          %v796 = vpop.f32.mrf.mxu0
          %v797 = vadd.f32 %v508, %v796
          %798 = vmatmul.f32.gmra.mxu0 %v413
          %v799 = vpop.f32.mrf.mxu0
          %v800 = vadd.f32 %v508, %v799
          %801 = vmatmul.f32.gmra.mxu0 %v414
          %v802 = vpop.f32.mrf.mxu0
          %v803 = vadd.f32 %v508, %v802
          %804 = vmatmul.f32.gmra.mxu0 %v415
          %v805 = vpop.f32.mrf.mxu0
          %v806 = vadd.f32 %v508, %v805
          %807 = vmatmul.f32.gmra.mxu0 %v416
          %v808 = vpop.f32.mrf.mxu0
          %v809 = vadd.f32 %v508, %v808
          %810 = vmatmul.f32.gmra.mxu0 %v417
          %v811 = vpop.f32.mrf.mxu0
          %v812 = vadd.f32 %v508, %v811
          %813 = vmatmul.f32.gmra.mxu0 %v418
          %v814 = vpop.f32.mrf.mxu0
          %v815 = vadd.f32 %v508, %v814
          %816 = vmatmul.f32.gmra.mxu0 %v419
          %v817 = vpop.f32.mrf.mxu0
          %v818 = vadd.f32 %v508, %v817
          %819 = vmatmul.f32.gmra.mxu0 %v420
          %v820 = vpop.f32.mrf.mxu0
          %v821 = vadd.f32 %v508, %v820
          %822 = vmatmul.f32.gmra.mxu0 %v421
          %v823 = vpop.f32.mrf.mxu0
          %v824 = vadd.f32 %v508, %v823
          %825 = vmatmul.f32.gmra.mxu0 %v422
          %v826 = vpop.f32.mrf.mxu0
          %v827 = vadd.f32 %v508, %v826
          %828 = vmatmul.f32.gmra.mxu0 %v423
          %v829 = vpop.f32.mrf.mxu0
          %v830 = vadd.f32 %v508, %v829
          %831 = vmatmul.f32.gmra.mxu0 %v424
          %v832 = vpop.f32.mrf.mxu0
          %v833 = vadd.f32 %v508, %v832
          %834 = vmatmul.f32.gmra.mxu0 %v425
          %v835 = vpop.f32.mrf.mxu0
          %v836 = vadd.f32 %v508, %v835
          %837 = vmatmul.f32.gmra.mxu0 %v426
          %v838 = vpop.f32.mrf.mxu0
          %v839 = vadd.f32 %v508, %v838
          %840 = vmatmul.f32.gmra.mxu0 %v427
          %v841 = vpop.f32.mrf.mxu0
          %v842 = vadd.f32 %v508, %v841
          %843 = vmatmul.f32.gmra.mxu0 %v428
          %v844 = vpop.f32.mrf.mxu0
          %v845 = vadd.f32 %v508, %v844
          %846 = vmatmul.f32.gmra.mxu0 %v429
          %v847 = vpop.f32.mrf.mxu0
          %v848 = vadd.f32 %v508, %v847
          %849 = vmatmul.f32.gmra.mxu0 %v430
          %v850 = vpop.f32.mrf.mxu0
          %v851 = vadd.f32 %v508, %v850
          %852 = vmatmul.f32.gmra.mxu0 %v431
          %v853 = vpop.f32.mrf.mxu0
          %v854 = vadd.f32 %v508, %v853
          %855 = vmatmul.f32.gmra.mxu0 %v432
          %v856 = vpop.f32.mrf.mxu0
          %v857 = vadd.f32 %v508, %v856
          %858 = vmatmul.f32.gmra.mxu0 %v433
          %v859 = vpop.f32.mrf.mxu0
          %v860 = vadd.f32 %v508, %v859
          %861 = vmatmul.f32.gmra.mxu0 %v434
          %v862 = vpop.f32.mrf.mxu0
          %v863 = vadd.f32 %v508, %v862
          %864 = vmatmul.f32.gmra.mxu0 %v435
          %v865 = vpop.f32.mrf.mxu0
          %v866 = vadd.f32 %v508, %v865
          %867 = vmatmul.f32.gmra.mxu0 %v436
          %v868 = vpop.f32.mrf.mxu0
          %v869 = vadd.f32 %v508, %v868
          %870 = vmatmul.f32.gmra.mxu0 %v437
          %v871 = vpop.f32.mrf.mxu0
          %v872 = vadd.f32 %v508, %v871
          %873 = vmatmul.f32.gmra.mxu0 %v438
          %v874 = vpop.f32.mrf.mxu0
          %v875 = vadd.f32 %v508, %v874
          %876 = vmatmul.f32.gmra.mxu0 %v439
          %v877 = vpop.f32.mrf.mxu0
          %v878 = vadd.f32 %v508, %v877
          %879 = vmatmul.f32.gmra.mxu0 %v440
          %v880 = vpop.f32.mrf.mxu0
          %v881 = vadd.f32 %v508, %v880
          %882 = vmatmul.f32.gmra.mxu0 %v441
          %v883 = vpop.f32.mrf.mxu0
          %v884 = vadd.f32 %v508, %v883
          %885 = vmatmul.f32.gmra.mxu0 %v442
          %v886 = vpop.f32.mrf.mxu0
          %v887 = vadd.f32 %v508, %v886
          %888 = vmatmul.f32.gmra.mxu0 %v443
          %v889 = vpop.f32.mrf.mxu0
          %v890 = vadd.f32 %v508, %v889
          %891 = vmatmul.f32.gmra.mxu0 %v444
          %v892 = vpop.f32.mrf.mxu0
          %v893 = vadd.f32 %v508, %v892
          %894 = vmatmul.f32.gmra.mxu0 %v445
          %v895 = vpop.f32.mrf.mxu0
          %v896 = vadd.f32 %v508, %v895
          %897 = vmatmul.f32.gmra.mxu0 %v446
          %v898 = vpop.f32.mrf.mxu0
          %v899 = vadd.f32 %v508, %v898
          %900 = vmatmul.f32.gmra.mxu0 %v447
          %v901 = vpop.f32.mrf.mxu0
          %v902 = vadd.f32 %v508, %v901
          %903 = vmatmul.f32.gmra.mxu0 %v448
          %v904 = vpop.f32.mrf.mxu0
          %v905 = vadd.f32 %v508, %v904
          %906 = vmatmul.f32.gmra.mxu0 %v449
          %v907 = vpop.f32.mrf.mxu0
          %v908 = vadd.f32 %v508, %v907
          %909 = vmatmul.f32.gmra.mxu0 %v450
          %v910 = vpop.f32.mrf.mxu0
          %v911 = vadd.f32 %v508, %v910
          %912 = vmatmul.f32.gmra.mxu0 %v451
          %v913 = vpop.f32.mrf.mxu0
          %v914 = vadd.f32 %v508, %v913
          %915 = vmatmul.f32.gmra.mxu0 %v452
          %v916 = vpop.f32.mrf.mxu0
          %v917 = vadd.f32 %v508, %v916
          %918 = vmatmul.f32.gmra.mxu0 %v453
          %v919 = vpop.f32.mrf.mxu0
          %v920 = vadd.f32 %v508, %v919
          %921 = vmatmul.f32.gmra.mxu0 %v454
          %v922 = vpop.f32.mrf.mxu0
          %v923 = vadd.f32 %v508, %v922
          %924 = vmatmul.f32.gmra.mxu0 %v455
          %v925 = vpop.f32.mrf.mxu0
          %v926 = vadd.f32 %v508, %v925
          %927 = vmatmul.f32.gmra.mxu0 %v456
          %v928 = vpop.f32.mrf.mxu0
          %v929 = vadd.f32 %v508, %v928
          %930 = vdwg.mxu0
          %931 = vmatpush.msra.mxu0 %v504
          %932 = vmatpush.msra.mxu0 %v501
          %933 = vmatpush.msra.mxu0 %v498
          %934 = vmatpush.msra.mxu0 %v495
          %935 = vmatpush.msra.mxu0 %v492
          %936 = vmatpush.msra.mxu0 %v489
          %937 = vmatpush.msra.mxu0 %v486
          %938 = vmatpush.msra.mxu0 %v483
          %939 = vmatpush.msra.mxu0 %v480
          %940 = vmatpush.msra.mxu0 %v477
          %941 = vmatpush.msra.mxu0 %v474
          %942 = vmatpush.msra.mxu0 %v471
          %943 = vmatpush.msra.mxu0 %v468
          %944 = vmatpush.msra.mxu0 %v465
          %945 = vmatpush.msra.mxu0 %v462
          %946 = vmatpush.msra.mxu0 %v459
          %947 = vmatmul.f32.gmra.mxu0 %v393
          %v948 = vpop.f32.mrf.mxu0
          %v949 = vadd.f32 %v509, %v948
          %950 = vmatmul.f32.gmra.mxu0 %v394
          %v951 = vpop.f32.mrf.mxu0
          %v952 = vadd.f32 %v509, %v951
          %953 = vmatmul.f32.gmra.mxu0 %v395
          %v954 = vpop.f32.mrf.mxu0
          %v955 = vadd.f32 %v509, %v954
          %956 = vmatmul.f32.gmra.mxu0 %v396
          %v957 = vpop.f32.mrf.mxu0
          %v958 = vadd.f32 %v509, %v957
          %959 = vmatmul.f32.gmra.mxu0 %v397
          %v960 = vpop.f32.mrf.mxu0
          %v961 = vadd.f32 %v509, %v960
          %962 = vmatmul.f32.gmra.mxu0 %v398
          %v963 = vpop.f32.mrf.mxu0
          %v964 = vadd.f32 %v509, %v963
          %965 = vmatmul.f32.gmra.mxu0 %v399
          %v966 = vpop.f32.mrf.mxu0
          %v967 = vadd.f32 %v509, %v966
          %968 = vmatmul.f32.gmra.mxu0 %v400
          %v969 = vpop.f32.mrf.mxu0
          %v970 = vadd.f32 %v509, %v969
          %971 = vmatmul.f32.gmra.mxu0 %v401
          %v972 = vpop.f32.mrf.mxu0
          %v973 = vadd.f32 %v509, %v972
          %974 = vmatmul.f32.gmra.mxu0 %v402
          %v975 = vpop.f32.mrf.mxu0
          %v976 = vadd.f32 %v509, %v975
          %977 = vmatmul.f32.gmra.mxu0 %v403
          %v978 = vpop.f32.mrf.mxu0
          %v979 = vadd.f32 %v509, %v978
          %980 = vmatmul.f32.gmra.mxu0 %v404
          %v981 = vpop.f32.mrf.mxu0
          %v982 = vadd.f32 %v509, %v981
          %983 = vmatmul.f32.gmra.mxu0 %v405
          %v984 = vpop.f32.mrf.mxu0
          %v985 = vadd.f32 %v509, %v984
          %986 = vmatmul.f32.gmra.mxu0 %v406
          %v987 = vpop.f32.mrf.mxu0
          %v988 = vadd.f32 %v509, %v987
          %989 = vmatmul.f32.gmra.mxu0 %v407
          %v990 = vpop.f32.mrf.mxu0
          %v991 = vadd.f32 %v509, %v990
          %992 = vmatmul.f32.gmra.mxu0 %v408
          %v993 = vpop.f32.mrf.mxu0
          %v994 = vadd.f32 %v509, %v993
          %995 = vmatmul.f32.gmra.mxu0 %v409
          %v996 = vpop.f32.mrf.mxu0
          %v997 = vadd.f32 %v509, %v996
          %998 = vmatmul.f32.gmra.mxu0 %v410
          %v999 = vpop.f32.mrf.mxu0
          %v1000 = vadd.f32 %v509, %v999
          %1001 = vmatmul.f32.gmra.mxu0 %v411
          %v1002 = vpop.f32.mrf.mxu0
          %v1003 = vadd.f32 %v509, %v1002
          %1004 = vmatmul.f32.gmra.mxu0 %v412
          %v1005 = vpop.f32.mrf.mxu0
          %v1006 = vadd.f32 %v509, %v1005
          %1007 = vmatmul.f32.gmra.mxu0 %v413
          %v1008 = vpop.f32.mrf.mxu0
          %v1009 = vadd.f32 %v509, %v1008
          %1010 = vmatmul.f32.gmra.mxu0 %v414
          %v1011 = vpop.f32.mrf.mxu0
          %v1012 = vadd.f32 %v509, %v1011
          %1013 = vmatmul.f32.gmra.mxu0 %v415
          %v1014 = vpop.f32.mrf.mxu0
          %v1015 = vadd.f32 %v509, %v1014
          %1016 = vmatmul.f32.gmra.mxu0 %v416
          %v1017 = vpop.f32.mrf.mxu0
          %v1018 = vadd.f32 %v509, %v1017
          %1019 = vmatmul.f32.gmra.mxu0 %v417
          %v1020 = vpop.f32.mrf.mxu0
          %v1021 = vadd.f32 %v509, %v1020
          %1022 = vmatmul.f32.gmra.mxu0 %v418
          %v1023 = vpop.f32.mrf.mxu0
          %v1024 = vadd.f32 %v509, %v1023
          %1025 = vmatmul.f32.gmra.mxu0 %v419
          %v1026 = vpop.f32.mrf.mxu0
          %v1027 = vadd.f32 %v509, %v1026
          %1028 = vmatmul.f32.gmra.mxu0 %v420
          %v1029 = vpop.f32.mrf.mxu0
          %v1030 = vadd.f32 %v509, %v1029
          %1031 = vmatmul.f32.gmra.mxu0 %v421
          %v1032 = vpop.f32.mrf.mxu0
          %v1033 = vadd.f32 %v509, %v1032
          %1034 = vmatmul.f32.gmra.mxu0 %v422
          %v1035 = vpop.f32.mrf.mxu0
          %v1036 = vadd.f32 %v509, %v1035
          %1037 = vmatmul.f32.gmra.mxu0 %v423
          %v1038 = vpop.f32.mrf.mxu0
          %v1039 = vadd.f32 %v509, %v1038
          %1040 = vmatmul.f32.gmra.mxu0 %v424
          %v1041 = vpop.f32.mrf.mxu0
          %v1042 = vadd.f32 %v509, %v1041
          %1043 = vmatmul.f32.gmra.mxu0 %v425
          %v1044 = vpop.f32.mrf.mxu0
          %v1045 = vadd.f32 %v509, %v1044
          %1046 = vmatmul.f32.gmra.mxu0 %v426
          %v1047 = vpop.f32.mrf.mxu0
          %v1048 = vadd.f32 %v509, %v1047
          %1049 = vmatmul.f32.gmra.mxu0 %v427
          %v1050 = vpop.f32.mrf.mxu0
          %v1051 = vadd.f32 %v509, %v1050
          %1052 = vmatmul.f32.gmra.mxu0 %v428
          %v1053 = vpop.f32.mrf.mxu0
          %v1054 = vadd.f32 %v509, %v1053
          %1055 = vmatmul.f32.gmra.mxu0 %v429
          %v1056 = vpop.f32.mrf.mxu0
          %v1057 = vadd.f32 %v509, %v1056
          %1058 = vmatmul.f32.gmra.mxu0 %v430
          %v1059 = vpop.f32.mrf.mxu0
          %v1060 = vadd.f32 %v509, %v1059
          %1061 = vmatmul.f32.gmra.mxu0 %v431
          %v1062 = vpop.f32.mrf.mxu0
          %v1063 = vadd.f32 %v509, %v1062
          %1064 = vmatmul.f32.gmra.mxu0 %v432
          %v1065 = vpop.f32.mrf.mxu0
          %v1066 = vadd.f32 %v509, %v1065
          %1067 = vmatmul.f32.gmra.mxu0 %v433
          %v1068 = vpop.f32.mrf.mxu0
          %v1069 = vadd.f32 %v509, %v1068
          %1070 = vmatmul.f32.gmra.mxu0 %v434
          %v1071 = vpop.f32.mrf.mxu0
          %v1072 = vadd.f32 %v509, %v1071
          %1073 = vmatmul.f32.gmra.mxu0 %v435
          %v1074 = vpop.f32.mrf.mxu0
          %v1075 = vadd.f32 %v509, %v1074
          %1076 = vmatmul.f32.gmra.mxu0 %v436
          %v1077 = vpop.f32.mrf.mxu0
          %v1078 = vadd.f32 %v509, %v1077
          %1079 = vmatmul.f32.gmra.mxu0 %v437
          %v1080 = vpop.f32.mrf.mxu0
          %v1081 = vadd.f32 %v509, %v1080
          %1082 = vmatmul.f32.gmra.mxu0 %v438
          %v1083 = vpop.f32.mrf.mxu0
          %v1084 = vadd.f32 %v509, %v1083
          %1085 = vmatmul.f32.gmra.mxu0 %v439
          %v1086 = vpop.f32.mrf.mxu0
          %v1087 = vadd.f32 %v509, %v1086
          %1088 = vmatmul.f32.gmra.mxu0 %v440
          %v1089 = vpop.f32.mrf.mxu0
          %v1090 = vadd.f32 %v509, %v1089
          %1091 = vmatmul.f32.gmra.mxu0 %v441
          %v1092 = vpop.f32.mrf.mxu0
          %v1093 = vadd.f32 %v509, %v1092
          %1094 = vmatmul.f32.gmra.mxu0 %v442
          %v1095 = vpop.f32.mrf.mxu0
          %v1096 = vadd.f32 %v509, %v1095
          %1097 = vmatmul.f32.gmra.mxu0 %v443
          %v1098 = vpop.f32.mrf.mxu0
          %v1099 = vadd.f32 %v509, %v1098
          %1100 = vmatmul.f32.gmra.mxu0 %v444
          %v1101 = vpop.f32.mrf.mxu0
          %v1102 = vadd.f32 %v509, %v1101
          %1103 = vmatmul.f32.gmra.mxu0 %v445
          %v1104 = vpop.f32.mrf.mxu0
          %v1105 = vadd.f32 %v509, %v1104
          %1106 = vmatmul.f32.gmra.mxu0 %v446
          %v1107 = vpop.f32.mrf.mxu0
          %v1108 = vadd.f32 %v509, %v1107
          %1109 = vmatmul.f32.gmra.mxu0 %v447
          %v1110 = vpop.f32.mrf.mxu0
          %v1111 = vadd.f32 %v509, %v1110
          %1112 = vmatmul.f32.gmra.mxu0 %v448
          %v1113 = vpop.f32.mrf.mxu0
          %v1114 = vadd.f32 %v509, %v1113
          %1115 = vmatmul.f32.gmra.mxu0 %v449
          %v1116 = vpop.f32.mrf.mxu0
          %v1117 = vadd.f32 %v509, %v1116
          %1118 = vmatmul.f32.gmra.mxu0 %v450
          %v1119 = vpop.f32.mrf.mxu0
          %v1120 = vadd.f32 %v509, %v1119
          %1121 = vmatmul.f32.gmra.mxu0 %v451
          %v1122 = vpop.f32.mrf.mxu0
          %v1123 = vadd.f32 %v509, %v1122
          %1124 = vmatmul.f32.gmra.mxu0 %v452
          %v1125 = vpop.f32.mrf.mxu0
          %v1126 = vadd.f32 %v509, %v1125
          %1127 = vmatmul.f32.gmra.mxu0 %v453
          %v1128 = vpop.f32.mrf.mxu0
          %v1129 = vadd.f32 %v509, %v1128
          %1130 = vmatmul.f32.gmra.mxu0 %v454
          %v1131 = vpop.f32.mrf.mxu0
          %v1132 = vadd.f32 %v509, %v1131
          %1133 = vmatmul.f32.gmra.mxu0 %v455
          %v1134 = vpop.f32.mrf.mxu0
          %v1135 = vadd.f32 %v509, %v1134
          %1136 = vmatmul.f32.gmra.mxu0 %v456
          %v1137 = vpop.f32.mrf.mxu0
          %v1138 = vadd.f32 %v509, %v1137
          %1139 = vdwg.mxu0
          %v1140 = vpack.c.bf16 %v531, %v531
          %v1141 = vpack.c.bf16 %v534, %v534
          %v1142 = vpack.c.bf16 %v537, %v537
          %v1143 = vpack.c.bf16 %v540, %v540
          %v1144 = vpack.c.bf16 %v543, %v543
          %v1145 = vpack.c.bf16 %v546, %v546
          %v1146 = vpack.c.bf16 %v549, %v549
          %v1147 = vpack.c.bf16 %v552, %v552
          %v1148 = vpack.c.bf16 %v555, %v555
          %v1149 = vpack.c.bf16 %v558, %v558
          %v1150 = vpack.c.bf16 %v561, %v561
          %v1151 = vpack.c.bf16 %v564, %v564
          %v1152 = vpack.c.bf16 %v567, %v567
          %v1153 = vpack.c.bf16 %v570, %v570
          %v1154 = vpack.c.bf16 %v573, %v573
          %v1155 = vpack.c.bf16 %v576, %v576
          %v1156 = vpack.c.bf16 %v579, %v579
          %v1157 = vpack.c.bf16 %v582, %v582
          %v1158 = vpack.c.bf16 %v585, %v585
          %v1159 = vpack.c.bf16 %v588, %v588
          %v1160 = vpack.c.bf16 %v591, %v591
          %v1161 = vpack.c.bf16 %v594, %v594
          %v1162 = vpack.c.bf16 %v597, %v597
          %v1163 = vpack.c.bf16 %v600, %v600
          %v1164 = vpack.c.bf16 %v603, %v603
          %v1165 = vpack.c.bf16 %v606, %v606
          %v1166 = vpack.c.bf16 %v609, %v609
          %v1167 = vpack.c.bf16 %v612, %v612
          %v1168 = vpack.c.bf16 %v615, %v615
          %v1169 = vpack.c.bf16 %v618, %v618
          %v1170 = vpack.c.bf16 %v621, %v621
          %v1171 = vpack.c.bf16 %v624, %v624
          %v1172 = vpack.c.bf16 %v627, %v627
          %v1173 = vpack.c.bf16 %v630, %v630
          %v1174 = vpack.c.bf16 %v633, %v633
          %v1175 = vpack.c.bf16 %v636, %v636
          %v1176 = vpack.c.bf16 %v639, %v639
          %v1177 = vpack.c.bf16 %v642, %v642
          %v1178 = vpack.c.bf16 %v645, %v645
          %v1179 = vpack.c.bf16 %v648, %v648
          %v1180 = vpack.c.bf16 %v651, %v651
          %v1181 = vpack.c.bf16 %v654, %v654
          %v1182 = vpack.c.bf16 %v657, %v657
          %v1183 = vpack.c.bf16 %v660, %v660
          %v1184 = vpack.c.bf16 %v663, %v663
          %v1185 = vpack.c.bf16 %v666, %v666
          %v1186 = vpack.c.bf16 %v669, %v669
          %v1187 = vpack.c.bf16 %v672, %v672
          %v1188 = vpack.c.bf16 %v675, %v675
          %v1189 = vpack.c.bf16 %v678, %v678
          %v1190 = vpack.c.bf16 %v681, %v681
          %v1191 = vpack.c.bf16 %v684, %v684
          %v1192 = vpack.c.bf16 %v687, %v687
          %v1193 = vpack.c.bf16 %v690, %v690
          %v1194 = vpack.c.bf16 %v693, %v693
          %v1195 = vpack.c.bf16 %v696, %v696
          %v1196 = vpack.c.bf16 %v699, %v699
          %v1197 = vpack.c.bf16 %v702, %v702
          %v1198 = vpack.c.bf16 %v705, %v705
          %v1199 = vpack.c.bf16 %v708, %v708
          %v1200 = vpack.c.bf16 %v711, %v711
          %v1201 = vpack.c.bf16 %v714, %v714
          %v1202 = vpack.c.bf16 %v717, %v717
          %v1203 = vpack.c.bf16 %v720, %v720
          %1204 = vst [vmem:[#allocation2] sm:$0xf] %v1140
          %1205 = vst [vmem:[#allocation2 + $0x4] sm:$0xf] %v1141
          %1206 = vst [vmem:[#allocation2 + $0x8] sm:$0xf] %v1142
          %1207 = vst [vmem:[#allocation2 + $0xc] sm:$0xf] %v1143
          %1208 = vst [vmem:[#allocation2 + $0x10] sm:$0xf] %v1144
          %1209 = vst [vmem:[#allocation2 + $0x14] sm:$0xf] %v1145
          %1210 = vst [vmem:[#allocation2 + $0x18] sm:$0xf] %v1146
          %1211 = vst [vmem:[#allocation2 + $0x1c] sm:$0xf] %v1147
          %1212 = vst [vmem:[#allocation2 + $0x20] sm:$0xf] %v1148
          %1213 = vst [vmem:[#allocation2 + $0x24] sm:$0xf] %v1149
          %1214 = vst [vmem:[#allocation2 + $0x28] sm:$0xf] %v1150
          %1215 = vst [vmem:[#allocation2 + $0x2c] sm:$0xf] %v1151
          %1216 = vst [vmem:[#allocation2 + $0x30] sm:$0xf] %v1152
          %1217 = vst [vmem:[#allocation2 + $0x34] sm:$0xf] %v1153
          %1218 = vst [vmem:[#allocation2 + $0x38] sm:$0xf] %v1154
          %1219 = vst [vmem:[#allocation2 + $0x3c] sm:$0xf] %v1155
          %1220 = vst [vmem:[#allocation2 + $0x40] sm:$0xf] %v1156
          %1221 = vst [vmem:[#allocation2 + $0x44] sm:$0xf] %v1157
          %1222 = vst [vmem:[#allocation2 + $0x48] sm:$0xf] %v1158
          %1223 = vst [vmem:[#allocation2 + $0x4c] sm:$0xf] %v1159
          %1224 = vst [vmem:[#allocation2 + $0x50] sm:$0xf] %v1160
          %1225 = vst [vmem:[#allocation2 + $0x54] sm:$0xf] %v1161
          %1226 = vst [vmem:[#allocation2 + $0x58] sm:$0xf] %v1162
          %1227 = vst [vmem:[#allocation2 + $0x5c] sm:$0xf] %v1163
          %1228 = vst [vmem:[#allocation2 + $0x60] sm:$0xf] %v1164
          %1229 = vst [vmem:[#allocation2 + $0x64] sm:$0xf] %v1165
          %1230 = vst [vmem:[#allocation2 + $0x68] sm:$0xf] %v1166
          %1231 = vst [vmem:[#allocation2 + $0x6c] sm:$0xf] %v1167
          %1232 = vst [vmem:[#allocation2 + $0x70] sm:$0xf] %v1168
          %1233 = vst [vmem:[#allocation2 + $0x74] sm:$0xf] %v1169
          %1234 = vst [vmem:[#allocation2 + $0x78] sm:$0xf] %v1170
          %1235 = vst [vmem:[#allocation2 + $0x7c] sm:$0xf] %v1171
          %1236 = vst [vmem:[#allocation2 + $0x80] sm:$0xf] %v1172
          %1237 = vst [vmem:[#allocation2 + $0x84] sm:$0xf] %v1173
          %1238 = vst [vmem:[#allocation2 + $0x88] sm:$0xf] %v1174
          %1239 = vst [vmem:[#allocation2 + $0x8c] sm:$0xf] %v1175
          %1240 = vst [vmem:[#allocation2 + $0x90] sm:$0xf] %v1176
          %1241 = vst [vmem:[#allocation2 + $0x94] sm:$0xf] %v1177
          %1242 = vst [vmem:[#allocation2 + $0x98] sm:$0xf] %v1178
          %1243 = vst [vmem:[#allocation2 + $0x9c] sm:$0xf] %v1179
          %1244 = vst [vmem:[#allocation2 + $0xa0] sm:$0xf] %v1180
          %1245 = vst [vmem:[#allocation2 + $0xa4] sm:$0xf] %v1181
          %1246 = vst [vmem:[#allocation2 + $0xa8] sm:$0xf] %v1182
          %1247 = vst [vmem:[#allocation2 + $0xac] sm:$0xf] %v1183
          %1248 = vst [vmem:[#allocation2 + $0xb0] sm:$0xf] %v1184
          %1249 = vst [vmem:[#allocation2 + $0xb4] sm:$0xf] %v1185
          %1250 = vst [vmem:[#allocation2 + $0xb8] sm:$0xf] %v1186
          %1251 = vst [vmem:[#allocation2 + $0xbc] sm:$0xf] %v1187
          %1252 = vst [vmem:[#allocation2 + $0xc0] sm:$0xf] %v1188
          %1253 = vst [vmem:[#allocation2 + $0xc4] sm:$0xf] %v1189
          %1254 = vst [vmem:[#allocation2 + $0xc8] sm:$0xf] %v1190
          %1255 = vst [vmem:[#allocation2 + $0xcc] sm:$0xf] %v1191
          %1256 = vst [vmem:[#allocation2 + $0xd0] sm:$0xf] %v1192
          %1257 = vst [vmem:[#allocation2 + $0xd4] sm:$0xf] %v1193
          %1258 = vst [vmem:[#allocation2 + $0xd8] sm:$0xf] %v1194
          %1259 = vst [vmem:[#allocation2 + $0xdc] sm:$0xf] %v1195
          %1260 = vst [vmem:[#allocation2 + $0xe0] sm:$0xf] %v1196
          %1261 = vst [vmem:[#allocation2 + $0xe4] sm:$0xf] %v1197
          %1262 = vst [vmem:[#allocation2 + $0xe8] sm:$0xf] %v1198
          %1263 = vst [vmem:[#allocation2 + $0xec] sm:$0xf] %v1199
          %1264 = vst [vmem:[#allocation2 + $0xf0] sm:$0xf] %v1200
          %1265 = vst [vmem:[#allocation2 + $0xf4] sm:$0xf] %v1201
          %1266 = vst [vmem:[#allocation2 + $0xf8] sm:$0xf] %v1202
          %1267 = vst [vmem:[#allocation2 + $0xfc] sm:$0xf] %v1203
          %v1268 = vpack.c.bf16 %v740, %v740
          %v1269 = vpack.c.bf16 %v743, %v743
          %v1270 = vpack.c.bf16 %v746, %v746
          %v1271 = vpack.c.bf16 %v749, %v749
          %v1272 = vpack.c.bf16 %v752, %v752
          %v1273 = vpack.c.bf16 %v755, %v755
          %v1274 = vpack.c.bf16 %v758, %v758
          %v1275 = vpack.c.bf16 %v761, %v761
          %v1276 = vpack.c.bf16 %v764, %v764
          %v1277 = vpack.c.bf16 %v767, %v767
          %v1278 = vpack.c.bf16 %v770, %v770
          %v1279 = vpack.c.bf16 %v773, %v773
          %v1280 = vpack.c.bf16 %v776, %v776
          %v1281 = vpack.c.bf16 %v779, %v779
          %v1282 = vpack.c.bf16 %v782, %v782
          %v1283 = vpack.c.bf16 %v785, %v785
          %v1284 = vpack.c.bf16 %v788, %v788
          %v1285 = vpack.c.bf16 %v791, %v791
          %v1286 = vpack.c.bf16 %v794, %v794
          %v1287 = vpack.c.bf16 %v797, %v797
          %v1288 = vpack.c.bf16 %v800, %v800
          %v1289 = vpack.c.bf16 %v803, %v803
          %v1290 = vpack.c.bf16 %v806, %v806
          %v1291 = vpack.c.bf16 %v809, %v809
          %v1292 = vpack.c.bf16 %v812, %v812
          %v1293 = vpack.c.bf16 %v815, %v815
          %v1294 = vpack.c.bf16 %v818, %v818
          %v1295 = vpack.c.bf16 %v821, %v821
          %v1296 = vpack.c.bf16 %v824, %v824
          %v1297 = vpack.c.bf16 %v827, %v827
          %v1298 = vpack.c.bf16 %v830, %v830
          %v1299 = vpack.c.bf16 %v833, %v833
          %v1300 = vpack.c.bf16 %v836, %v836
          %v1301 = vpack.c.bf16 %v839, %v839
          %v1302 = vpack.c.bf16 %v842, %v842
          %v1303 = vpack.c.bf16 %v845, %v845
          %v1304 = vpack.c.bf16 %v848, %v848
          %v1305 = vpack.c.bf16 %v851, %v851
          %v1306 = vpack.c.bf16 %v854, %v854
          %v1307 = vpack.c.bf16 %v857, %v857
          %v1308 = vpack.c.bf16 %v860, %v860
          %v1309 = vpack.c.bf16 %v863, %v863
          %v1310 = vpack.c.bf16 %v866, %v866
          %v1311 = vpack.c.bf16 %v869, %v869
          %v1312 = vpack.c.bf16 %v872, %v872
          %v1313 = vpack.c.bf16 %v875, %v875
          %v1314 = vpack.c.bf16 %v878, %v878
          %v1315 = vpack.c.bf16 %v881, %v881
          %v1316 = vpack.c.bf16 %v884, %v884
          %v1317 = vpack.c.bf16 %v887, %v887
          %v1318 = vpack.c.bf16 %v890, %v890
          %v1319 = vpack.c.bf16 %v893, %v893
          %v1320 = vpack.c.bf16 %v896, %v896
          %v1321 = vpack.c.bf16 %v899, %v899
          %v1322 = vpack.c.bf16 %v902, %v902
          %v1323 = vpack.c.bf16 %v905, %v905
          %v1324 = vpack.c.bf16 %v908, %v908
          %v1325 = vpack.c.bf16 %v911, %v911
          %v1326 = vpack.c.bf16 %v914, %v914
          %v1327 = vpack.c.bf16 %v917, %v917
          %v1328 = vpack.c.bf16 %v920, %v920
          %v1329 = vpack.c.bf16 %v923, %v923
          %v1330 = vpack.c.bf16 %v926, %v926
          %v1331 = vpack.c.bf16 %v929, %v929
          %1332 = vst [vmem:[#allocation3] sm:$0xf] %v1268
          %1333 = vst [vmem:[#allocation3 + $0x4] sm:$0xf] %v1269
          %1334 = vst [vmem:[#allocation3 + $0x8] sm:$0xf] %v1270
          %1335 = vst [vmem:[#allocation3 + $0xc] sm:$0xf] %v1271
          %1336 = vst [vmem:[#allocation3 + $0x10] sm:$0xf] %v1272
          %1337 = vst [vmem:[#allocation3 + $0x14] sm:$0xf] %v1273
          %1338 = vst [vmem:[#allocation3 + $0x18] sm:$0xf] %v1274
          %1339 = vst [vmem:[#allocation3 + $0x1c] sm:$0xf] %v1275
          %1340 = vst [vmem:[#allocation3 + $0x20] sm:$0xf] %v1276
          %1341 = vst [vmem:[#allocation3 + $0x24] sm:$0xf] %v1277
          %1342 = vst [vmem:[#allocation3 + $0x28] sm:$0xf] %v1278
          %1343 = vst [vmem:[#allocation3 + $0x2c] sm:$0xf] %v1279
          %1344 = vst [vmem:[#allocation3 + $0x30] sm:$0xf] %v1280
          %1345 = vst [vmem:[#allocation3 + $0x34] sm:$0xf] %v1281
          %1346 = vst [vmem:[#allocation3 + $0x38] sm:$0xf] %v1282
          %1347 = vst [vmem:[#allocation3 + $0x3c] sm:$0xf] %v1283
          %1348 = vst [vmem:[#allocation3 + $0x40] sm:$0xf] %v1284
          %1349 = vst [vmem:[#allocation3 + $0x44] sm:$0xf] %v1285
          %1350 = vst [vmem:[#allocation3 + $0x48] sm:$0xf] %v1286
          %1351 = vst [vmem:[#allocation3 + $0x4c] sm:$0xf] %v1287
          %1352 = vst [vmem:[#allocation3 + $0x50] sm:$0xf] %v1288
          %1353 = vst [vmem:[#allocation3 + $0x54] sm:$0xf] %v1289
          %1354 = vst [vmem:[#allocation3 + $0x58] sm:$0xf] %v1290
          %1355 = vst [vmem:[#allocation3 + $0x5c] sm:$0xf] %v1291
          %1356 = vst [vmem:[#allocation3 + $0x60] sm:$0xf] %v1292
          %1357 = vst [vmem:[#allocation3 + $0x64] sm:$0xf] %v1293
          %1358 = vst [vmem:[#allocation3 + $0x68] sm:$0xf] %v1294
          %1359 = vst [vmem:[#allocation3 + $0x6c] sm:$0xf] %v1295
          %1360 = vst [vmem:[#allocation3 + $0x70] sm:$0xf] %v1296
          %1361 = vst [vmem:[#allocation3 + $0x74] sm:$0xf] %v1297
          %1362 = vst [vmem:[#allocation3 + $0x78] sm:$0xf] %v1298
          %1363 = vst [vmem:[#allocation3 + $0x7c] sm:$0xf] %v1299
          %1364 = vst [vmem:[#allocation3 + $0x80] sm:$0xf] %v1300
          %1365 = vst [vmem:[#allocation3 + $0x84] sm:$0xf] %v1301
          %1366 = vst [vmem:[#allocation3 + $0x88] sm:$0xf] %v1302
          %1367 = vst [vmem:[#allocation3 + $0x8c] sm:$0xf] %v1303
          %1368 = vst [vmem:[#allocation3 + $0x90] sm:$0xf] %v1304
          %1369 = vst [vmem:[#allocation3 + $0x94] sm:$0xf] %v1305
          %1370 = vst [vmem:[#allocation3 + $0x98] sm:$0xf] %v1306
          %1371 = vst [vmem:[#allocation3 + $0x9c] sm:$0xf] %v1307
          %1372 = vst [vmem:[#allocation3 + $0xa0] sm:$0xf] %v1308
          %1373 = vst [vmem:[#allocation3 + $0xa4] sm:$0xf] %v1309
          %1374 = vst [vmem:[#allocation3 + $0xa8] sm:$0xf] %v1310
          %1375 = vst [vmem:[#allocation3 + $0xac] sm:$0xf] %v1311
          %1376 = vst [vmem:[#allocation3 + $0xb0] sm:$0xf] %v1312
          %1377 = vst [vmem:[#allocation3 + $0xb4] sm:$0xf] %v1313
          %1378 = vst [vmem:[#allocation3 + $0xb8] sm:$0xf] %v1314
          %1379 = vst [vmem:[#allocation3 + $0xbc] sm:$0xf] %v1315
          %1380 = vst [vmem:[#allocation3 + $0xc0] sm:$0xf] %v1316
          %1381 = vst [vmem:[#allocation3 + $0xc4] sm:$0xf] %v1317
          %1382 = vst [vmem:[#allocation3 + $0xc8] sm:$0xf] %v1318
          %1383 = vst [vmem:[#allocation3 + $0xcc] sm:$0xf] %v1319
          %1384 = vst [vmem:[#allocation3 + $0xd0] sm:$0xf] %v1320
          %1385 = vst [vmem:[#allocation3 + $0xd4] sm:$0xf] %v1321
          %1386 = vst [vmem:[#allocation3 + $0xd8] sm:$0xf] %v1322
          %1387 = vst [vmem:[#allocation3 + $0xdc] sm:$0xf] %v1323
          %1388 = vst [vmem:[#allocation3 + $0xe0] sm:$0xf] %v1324
          %1389 = vst [vmem:[#allocation3 + $0xe4] sm:$0xf] %v1325
          %1390 = vst [vmem:[#allocation3 + $0xe8] sm:$0xf] %v1326
          %1391 = vst [vmem:[#allocation3 + $0xec] sm:$0xf] %v1327
          %1392 = vst [vmem:[#allocation3 + $0xf0] sm:$0xf] %v1328
          %1393 = vst [vmem:[#allocation3 + $0xf4] sm:$0xf] %v1329
          %1394 = vst [vmem:[#allocation3 + $0xf8] sm:$0xf] %v1330
          %1395 = vst [vmem:[#allocation3 + $0xfc] sm:$0xf] %v1331
          %v1396 = vpack.c.bf16 %v949, %v949
          %v1397 = vpack.c.bf16 %v952, %v952
          %v1398 = vpack.c.bf16 %v955, %v955
          %v1399 = vpack.c.bf16 %v958, %v958
          %v1400 = vpack.c.bf16 %v961, %v961
          %v1401 = vpack.c.bf16 %v964, %v964
          %v1402 = vpack.c.bf16 %v967, %v967
          %v1403 = vpack.c.bf16 %v970, %v970
          %v1404 = vpack.c.bf16 %v973, %v973
          %v1405 = vpack.c.bf16 %v976, %v976
          %v1406 = vpack.c.bf16 %v979, %v979
          %v1407 = vpack.c.bf16 %v982, %v982
          %v1408 = vpack.c.bf16 %v985, %v985
          %v1409 = vpack.c.bf16 %v988, %v988
          %v1410 = vpack.c.bf16 %v991, %v991
          %v1411 = vpack.c.bf16 %v994, %v994
          %v1412 = vpack.c.bf16 %v997, %v997
          %v1413 = vpack.c.bf16 %v1000, %v1000
          %v1414 = vpack.c.bf16 %v1003, %v1003
          %v1415 = vpack.c.bf16 %v1006, %v1006
          %v1416 = vpack.c.bf16 %v1009, %v1009
          %v1417 = vpack.c.bf16 %v1012, %v1012
          %v1418 = vpack.c.bf16 %v1015, %v1015
          %v1419 = vpack.c.bf16 %v1018, %v1018
          %v1420 = vpack.c.bf16 %v1021, %v1021
          %v1421 = vpack.c.bf16 %v1024, %v1024
          %v1422 = vpack.c.bf16 %v1027, %v1027
          %v1423 = vpack.c.bf16 %v1030, %v1030
          %v1424 = vpack.c.bf16 %v1033, %v1033
          %v1425 = vpack.c.bf16 %v1036, %v1036
          %v1426 = vpack.c.bf16 %v1039, %v1039
          %v1427 = vpack.c.bf16 %v1042, %v1042
          %v1428 = vpack.c.bf16 %v1045, %v1045
          %v1429 = vpack.c.bf16 %v1048, %v1048
          %v1430 = vpack.c.bf16 %v1051, %v1051
          %v1431 = vpack.c.bf16 %v1054, %v1054
          %v1432 = vpack.c.bf16 %v1057, %v1057
          %v1433 = vpack.c.bf16 %v1060, %v1060
          %v1434 = vpack.c.bf16 %v1063, %v1063
          %v1435 = vpack.c.bf16 %v1066, %v1066
          %v1436 = vpack.c.bf16 %v1069, %v1069
          %v1437 = vpack.c.bf16 %v1072, %v1072
          %v1438 = vpack.c.bf16 %v1075, %v1075
          %v1439 = vpack.c.bf16 %v1078, %v1078
          %v1440 = vpack.c.bf16 %v1081, %v1081
          %v1441 = vpack.c.bf16 %v1084, %v1084
          %v1442 = vpack.c.bf16 %v1087, %v1087
          %v1443 = vpack.c.bf16 %v1090, %v1090
          %v1444 = vpack.c.bf16 %v1093, %v1093
          %v1445 = vpack.c.bf16 %v1096, %v1096
          %v1446 = vpack.c.bf16 %v1099, %v1099
          %v1447 = vpack.c.bf16 %v1102, %v1102
          %v1448 = vpack.c.bf16 %v1105, %v1105
          %v1449 = vpack.c.bf16 %v1108, %v1108
          %v1450 = vpack.c.bf16 %v1111, %v1111
          %v1451 = vpack.c.bf16 %v1114, %v1114
          %v1452 = vpack.c.bf16 %v1117, %v1117
          %v1453 = vpack.c.bf16 %v1120, %v1120
          %v1454 = vpack.c.bf16 %v1123, %v1123
          %v1455 = vpack.c.bf16 %v1126, %v1126
          %v1456 = vpack.c.bf16 %v1129, %v1129
          %v1457 = vpack.c.bf16 %v1132, %v1132
          %v1458 = vpack.c.bf16 %v1135, %v1135
          %v1459 = vpack.c.bf16 %v1138, %v1138
          %1460 = vst [vmem:[#allocation4] sm:$0xf] %v1396
          %1461 = vst [vmem:[#allocation4 + $0x4] sm:$0xf] %v1397
          %1462 = vst [vmem:[#allocation4 + $0x8] sm:$0xf] %v1398
          %1463 = vst [vmem:[#allocation4 + $0xc] sm:$0xf] %v1399
          %1464 = vst [vmem:[#allocation4 + $0x10] sm:$0xf] %v1400
          %1465 = vst [vmem:[#allocation4 + $0x14] sm:$0xf] %v1401
          %1466 = vst [vmem:[#allocation4 + $0x18] sm:$0xf] %v1402
          %1467 = vst [vmem:[#allocation4 + $0x1c] sm:$0xf] %v1403
          %1468 = vst [vmem:[#allocation4 + $0x20] sm:$0xf] %v1404
          %1469 = vst [vmem:[#allocation4 + $0x24] sm:$0xf] %v1405
          %1470 = vst [vmem:[#allocation4 + $0x28] sm:$0xf] %v1406
          %1471 = vst [vmem:[#allocation4 + $0x2c] sm:$0xf] %v1407
          %1472 = vst [vmem:[#allocation4 + $0x30] sm:$0xf] %v1408
          %1473 = vst [vmem:[#allocation4 + $0x34] sm:$0xf] %v1409
          %1474 = vst [vmem:[#allocation4 + $0x38] sm:$0xf] %v1410
          %1475 = vst [vmem:[#allocation4 + $0x3c] sm:$0xf] %v1411
          %1476 = vst [vmem:[#allocation4 + $0x40] sm:$0xf] %v1412
          %1477 = vst [vmem:[#allocation4 + $0x44] sm:$0xf] %v1413
          %1478 = vst [vmem:[#allocation4 + $0x48] sm:$0xf] %v1414
          %1479 = vst [vmem:[#allocation4 + $0x4c] sm:$0xf] %v1415
          %1480 = vst [vmem:[#allocation4 + $0x50] sm:$0xf] %v1416
          %1481 = vst [vmem:[#allocation4 + $0x54] sm:$0xf] %v1417
          %1482 = vst [vmem:[#allocation4 + $0x58] sm:$0xf] %v1418
          %1483 = vst [vmem:[#allocation4 + $0x5c] sm:$0xf] %v1419
          %1484 = vst [vmem:[#allocation4 + $0x60] sm:$0xf] %v1420
          %1485 = vst [vmem:[#allocation4 + $0x64] sm:$0xf] %v1421
          %1486 = vst [vmem:[#allocation4 + $0x68] sm:$0xf] %v1422
          %1487 = vst [vmem:[#allocation4 + $0x6c] sm:$0xf] %v1423
          %1488 = vst [vmem:[#allocation4 + $0x70] sm:$0xf] %v1424
          %1489 = vst [vmem:[#allocation4 + $0x74] sm:$0xf] %v1425
          %1490 = vst [vmem:[#allocation4 + $0x78] sm:$0xf] %v1426
          %1491 = vst [vmem:[#allocation4 + $0x7c] sm:$0xf] %v1427
          %1492 = vst [vmem:[#allocation4 + $0x80] sm:$0xf] %v1428
          %1493 = vst [vmem:[#allocation4 + $0x84] sm:$0xf] %v1429
          %1494 = vst [vmem:[#allocation4 + $0x88] sm:$0xf] %v1430
          %1495 = vst [vmem:[#allocation4 + $0x8c] sm:$0xf] %v1431
          %1496 = vst [vmem:[#allocation4 + $0x90] sm:$0xf] %v1432
          %1497 = vst [vmem:[#allocation4 + $0x94] sm:$0xf] %v1433
          %1498 = vst [vmem:[#allocation4 + $0x98] sm:$0xf] %v1434
          %1499 = vst [vmem:[#allocation4 + $0x9c] sm:$0xf] %v1435
          %1500 = vst [vmem:[#allocation4 + $0xa0] sm:$0xf] %v1436
          %1501 = vst [vmem:[#allocation4 + $0xa4] sm:$0xf] %v1437
          %1502 = vst [vmem:[#allocation4 + $0xa8] sm:$0xf] %v1438
          %1503 = vst [vmem:[#allocation4 + $0xac] sm:$0xf] %v1439
          %1504 = vst [vmem:[#allocation4 + $0xb0] sm:$0xf] %v1440
          %1505 = vst [vmem:[#allocation4 + $0xb4] sm:$0xf] %v1441
          %1506 = vst [vmem:[#allocation4 + $0xb8] sm:$0xf] %v1442
          %1507 = vst [vmem:[#allocation4 + $0xbc] sm:$0xf] %v1443
          %1508 = vst [vmem:[#allocation4 + $0xc0] sm:$0xf] %v1444
          %1509 = vst [vmem:[#allocation4 + $0xc4] sm:$0xf] %v1445
          %1510 = vst [vmem:[#allocation4 + $0xc8] sm:$0xf] %v1446
          %1511 = vst [vmem:[#allocation4 + $0xcc] sm:$0xf] %v1447
          %1512 = vst [vmem:[#allocation4 + $0xd0] sm:$0xf] %v1448
          %1513 = vst [vmem:[#allocation4 + $0xd4] sm:$0xf] %v1449
          %1514 = vst [vmem:[#allocation4 + $0xd8] sm:$0xf] %v1450
          %1515 = vst [vmem:[#allocation4 + $0xdc] sm:$0xf] %v1451
          %1516 = vst [vmem:[#allocation4 + $0xe0] sm:$0xf] %v1452
          %1517 = vst [vmem:[#allocation4 + $0xe4] sm:$0xf] %v1453
          %1518 = vst [vmem:[#allocation4 + $0xe8] sm:$0xf] %v1454
          %1519 = vst [vmem:[#allocation4 + $0xec] sm:$0xf] %v1455
          %1520 = vst [vmem:[#allocation4 + $0xf0] sm:$0xf] %v1456
          %1521 = vst [vmem:[#allocation4 + $0xf4] sm:$0xf] %v1457
          %1522 = vst [vmem:[#allocation4 + $0xf8] sm:$0xf] %v1458
          %1523 = vst [vmem:[#allocation4 + $0xfc] sm:$0xf] %v1459
        $region72: #{tpu_custom_call.1} parent=51 // pred_fallthru
          _
        %s1524 = smul.u32 %s32, 256
        %s1525 = sshra.s32 %s1524, 3
        %s1526 = sand.u32 %s1524, 7
        %s1527 = smul.addr %s1525, 4
        %s1528 = scalar_lea.vmem [#allocation2], %s1527
        %v1529 = vld [vmem:[%s1528] sm:$0xf]
        %v1530 = vld [vmem:[%s1528 + $0x4] sm:$0xf]
        %v1531 = vld [vmem:[%s1528 + $0x8] sm:$0xf]
        %v1532 = vld [vmem:[%s1528 + $0xc] sm:$0xf]
        %v1533 = vld [vmem:[%s1528 + $0x10] sm:$0xf]
        %v1534 = vld [vmem:[%s1528 + $0x14] sm:$0xf]
        %v1535 = vld [vmem:[%s1528 + $0x18] sm:$0xf]
        %v1536 = vld [vmem:[%s1528 + $0x1c] sm:$0xf]
        %v1537 = vld [vmem:[%s1528 + $0x20] sm:$0xf]
        %v1538 = vld [vmem:[%s1528 + $0x24] sm:$0xf]
        %v1539 = vld [vmem:[%s1528 + $0x28] sm:$0xf]
        %v1540 = vld [vmem:[%s1528 + $0x2c] sm:$0xf]
        %v1541 = vld [vmem:[%s1528 + $0x30] sm:$0xf]
        %v1542 = vld [vmem:[%s1528 + $0x34] sm:$0xf]
        %v1543 = vld [vmem:[%s1528 + $0x38] sm:$0xf]
        %v1544 = vld [vmem:[%s1528 + $0x3c] sm:$0xf]
        %v1545 = vld [vmem:[%s1528 + $0x40] sm:$0xf]
        %v1546 = vld [vmem:[%s1528 + $0x44] sm:$0xf]
        %v1547 = vld [vmem:[%s1528 + $0x48] sm:$0xf]
        %v1548 = vld [vmem:[%s1528 + $0x4c] sm:$0xf]
        %v1549 = vld [vmem:[%s1528 + $0x50] sm:$0xf]
        %v1550 = vld [vmem:[%s1528 + $0x54] sm:$0xf]
        %v1551 = vld [vmem:[%s1528 + $0x58] sm:$0xf]
        %v1552 = vld [vmem:[%s1528 + $0x5c] sm:$0xf]
        %v1553 = vld [vmem:[%s1528 + $0x60] sm:$0xf]
        %v1554 = vld [vmem:[%s1528 + $0x64] sm:$0xf]
        %v1555 = vld [vmem:[%s1528 + $0x68] sm:$0xf]
        %v1556 = vld [vmem:[%s1528 + $0x6c] sm:$0xf]
        %v1557 = vld [vmem:[%s1528 + $0x70] sm:$0xf]
        %v1558 = vld [vmem:[%s1528 + $0x74] sm:$0xf]
        %v1559 = vld [vmem:[%s1528 + $0x78] sm:$0xf]
        %v1560 = vld [vmem:[%s1528 + $0x7c] sm:$0xf]
        %v1561 = vld [vmem:[#allocation3] sm:$0xf]
        %v1562 = vld [vmem:[#allocation3 + $0x4] sm:$0xf]
        %v1563 = vld [vmem:[#allocation3 + $0x8] sm:$0xf]
        %v1564 = vld [vmem:[#allocation3 + $0xc] sm:$0xf]
        %v1565 = vld [vmem:[#allocation3 + $0x10] sm:$0xf]
        %v1566 = vld [vmem:[#allocation3 + $0x14] sm:$0xf]
        %v1567 = vld [vmem:[#allocation3 + $0x18] sm:$0xf]
        %v1568 = vld [vmem:[#allocation3 + $0x1c] sm:$0xf]
        %v1569 = vld [vmem:[#allocation3 + $0x20] sm:$0xf]
        %v1570 = vld [vmem:[#allocation3 + $0x24] sm:$0xf]
        %v1571 = vld [vmem:[#allocation3 + $0x28] sm:$0xf]
        %v1572 = vld [vmem:[#allocation3 + $0x2c] sm:$0xf]
        %v1573 = vld [vmem:[#allocation3 + $0x30] sm:$0xf]
        %v1574 = vld [vmem:[#allocation3 + $0x34] sm:$0xf]
        %v1575 = vld [vmem:[#allocation3 + $0x38] sm:$0xf]
        %v1576 = vld [vmem:[#allocation3 + $0x3c] sm:$0xf]
        %v1577 = vld [vmem:[#allocation3 + $0x40] sm:$0xf]
        %v1578 = vld [vmem:[#allocation3 + $0x44] sm:$0xf]
        %v1579 = vld [vmem:[#allocation3 + $0x48] sm:$0xf]
        %v1580 = vld [vmem:[#allocation3 + $0x4c] sm:$0xf]
        %v1581 = vld [vmem:[#allocation3 + $0x50] sm:$0xf]
        %v1582 = vld [vmem:[#allocation3 + $0x54] sm:$0xf]
        %v1583 = vld [vmem:[#allocation3 + $0x58] sm:$0xf]
        %v1584 = vld [vmem:[#allocation3 + $0x5c] sm:$0xf]
        %v1585 = vld [vmem:[#allocation3 + $0x60] sm:$0xf]
        %v1586 = vld [vmem:[#allocation3 + $0x64] sm:$0xf]
        %v1587 = vld [vmem:[#allocation3 + $0x68] sm:$0xf]
        %v1588 = vld [vmem:[#allocation3 + $0x6c] sm:$0xf]
        %v1589 = vld [vmem:[#allocation3 + $0x70] sm:$0xf]
        %v1590 = vld [vmem:[#allocation3 + $0x74] sm:$0xf]
        %v1591 = vld [vmem:[#allocation3 + $0x78] sm:$0xf]
        %v1592 = vld [vmem:[#allocation3 + $0x7c] sm:$0xf]
        %v1593 = vld [vmem:[#allocation3 + $0x80] sm:$0xf]
        %v1594 = vld [vmem:[#allocation3 + $0x84] sm:$0xf]
        %v1595 = vld [vmem:[#allocation3 + $0x88] sm:$0xf]
        %v1596 = vld [vmem:[#allocation3 + $0x8c] sm:$0xf]
        %v1597 = vld [vmem:[#allocation3 + $0x90] sm:$0xf]
        %v1598 = vld [vmem:[#allocation3 + $0x94] sm:$0xf]
        %v1599 = vld [vmem:[#allocation3 + $0x98] sm:$0xf]
        %v1600 = vld [vmem:[#allocation3 + $0x9c] sm:$0xf]
        %v1601 = vld [vmem:[#allocation3 + $0xa0] sm:$0xf]
        %v1602 = vld [vmem:[#allocation3 + $0xa4] sm:$0xf]
        %v1603 = vld [vmem:[#allocation3 + $0xa8] sm:$0xf]
        %v1604 = vld [vmem:[#allocation3 + $0xac] sm:$0xf]
        %v1605 = vld [vmem:[#allocation3 + $0xb0] sm:$0xf]
        %v1606 = vld [vmem:[#allocation3 + $0xb4] sm:$0xf]
        %v1607 = vld [vmem:[#allocation3 + $0xb8] sm:$0xf]
        %v1608 = vld [vmem:[#allocation3 + $0xbc] sm:$0xf]
        %v1609 = vld [vmem:[#allocation3 + $0xc0] sm:$0xf]
        %v1610 = vld [vmem:[#allocation3 + $0xc4] sm:$0xf]
        %v1611 = vld [vmem:[#allocation3 + $0xc8] sm:$0xf]
        %v1612 = vld [vmem:[#allocation3 + $0xcc] sm:$0xf]
        %v1613 = vld [vmem:[#allocation3 + $0xd0] sm:$0xf]
        %v1614 = vld [vmem:[#allocation3 + $0xd4] sm:$0xf]
        %v1615 = vld [vmem:[#allocation3 + $0xd8] sm:$0xf]
        %v1616 = vld [vmem:[#allocation3 + $0xdc] sm:$0xf]
        %v1617 = vld [vmem:[#allocation3 + $0xe0] sm:$0xf]
        %v1618 = vld [vmem:[#allocation3 + $0xe4] sm:$0xf]
        %v1619 = vld [vmem:[#allocation3 + $0xe8] sm:$0xf]
        %v1620 = vld [vmem:[#allocation3 + $0xec] sm:$0xf]
        %v1621 = vld [vmem:[#allocation3 + $0xf0] sm:$0xf]
        %v1622 = vld [vmem:[#allocation3 + $0xf4] sm:$0xf]
        %v1623 = vld [vmem:[#allocation3 + $0xf8] sm:$0xf]
        %v1624 = vld [vmem:[#allocation3 + $0xfc] sm:$0xf]
        %v1657 = vunpack.c.l.b16 %v1529
        %v1658 = vunpack.c.l.b16 %v1530
        %v1659 = vunpack.c.l.b16 %v1531
        %v1660 = vunpack.c.l.b16 %v1532
        %v1661 = vunpack.c.l.b16 %v1533
        %v1662 = vunpack.c.l.b16 %v1534
        %v1663 = vunpack.c.l.b16 %v1535
        %v1664 = vunpack.c.l.b16 %v1536
        %v1665 = vunpack.c.l.b16 %v1537
        %v1666 = vunpack.c.l.b16 %v1538
        %v1667 = vunpack.c.l.b16 %v1539
        %v1668 = vunpack.c.l.b16 %v1540
        %v1669 = vunpack.c.l.b16 %v1541
        %v1670 = vunpack.c.l.b16 %v1542
        %v1671 = vunpack.c.l.b16 %v1543
        %v1672 = vunpack.c.l.b16 %v1544
        %v1673 = vunpack.c.l.b16 %v1545
        %v1674 = vunpack.c.l.b16 %v1546
        %v1675 = vunpack.c.l.b16 %v1547
        %v1676 = vunpack.c.l.b16 %v1548
        %v1677 = vunpack.c.l.b16 %v1549
        %v1678 = vunpack.c.l.b16 %v1550
        %v1679 = vunpack.c.l.b16 %v1551
        %v1680 = vunpack.c.l.b16 %v1552
        %v1681 = vunpack.c.l.b16 %v1553
        %v1682 = vunpack.c.l.b16 %v1554
        %v1683 = vunpack.c.l.b16 %v1555
        %v1684 = vunpack.c.l.b16 %v1556
        %v1685 = vunpack.c.l.b16 %v1557
        %v1686 = vunpack.c.l.b16 %v1558
        %v1687 = vunpack.c.l.b16 %v1559
        %v1688 = vunpack.c.l.b16 %v1560
        %v1689 = vpack.c.b16 %v1658, %v1657
        %v1690 = vpack.c.b16 %v1660, %v1659
        %v1691 = vpack.c.b16 %v1662, %v1661
        %v1692 = vpack.c.b16 %v1664, %v1663
        %v1693 = vpack.c.b16 %v1666, %v1665
        %v1694 = vpack.c.b16 %v1668, %v1667
        %v1695 = vpack.c.b16 %v1670, %v1669
        %v1696 = vpack.c.b16 %v1672, %v1671
        %v1697 = vpack.c.b16 %v1674, %v1673
        %v1698 = vpack.c.b16 %v1676, %v1675
        %v1699 = vpack.c.b16 %v1678, %v1677
        %v1700 = vpack.c.b16 %v1680, %v1679
        %v1701 = vpack.c.b16 %v1682, %v1681
        %v1702 = vpack.c.b16 %v1684, %v1683
        %v1703 = vpack.c.b16 %v1686, %v1685
        %v1704 = vpack.c.b16 %v1688, %v1687
        %v1785 = vunpack.c.l.b16 %v1561
        %v1786 = vunpack.c.l.b16 %v1562
        %v1787 = vunpack.c.l.b16 %v1563
        %v1788 = vunpack.c.l.b16 %v1564
        %v1789 = vunpack.c.l.b16 %v1565
        %v1790 = vunpack.c.l.b16 %v1566
        %v1791 = vunpack.c.l.b16 %v1567
        %v1792 = vunpack.c.l.b16 %v1568
        %v1793 = vunpack.c.l.b16 %v1569
        %v1794 = vunpack.c.l.b16 %v1570
        %v1795 = vunpack.c.l.b16 %v1571
        %v1796 = vunpack.c.l.b16 %v1572
        %v1797 = vunpack.c.l.b16 %v1573
        %v1798 = vunpack.c.l.b16 %v1574
        %v1799 = vunpack.c.l.b16 %v1575
        %v1800 = vunpack.c.l.b16 %v1576
        %v1801 = vunpack.c.l.b16 %v1577
        %v1802 = vunpack.c.l.b16 %v1578
        %v1803 = vunpack.c.l.b16 %v1579
        %v1804 = vunpack.c.l.b16 %v1580
        %v1805 = vunpack.c.l.b16 %v1581
        %v1806 = vunpack.c.l.b16 %v1582
        %v1807 = vunpack.c.l.b16 %v1583
        %v1808 = vunpack.c.l.b16 %v1584
        %v1809 = vunpack.c.l.b16 %v1585
        %v1810 = vunpack.c.l.b16 %v1586
        %v1811 = vunpack.c.l.b16 %v1587
        %v1812 = vunpack.c.l.b16 %v1588
        %v1813 = vunpack.c.l.b16 %v1589
        %v1814 = vunpack.c.l.b16 %v1590
        %v1815 = vunpack.c.l.b16 %v1591
        %v1816 = vunpack.c.l.b16 %v1592
        %v1817 = vunpack.c.l.b16 %v1593
        %v1818 = vunpack.c.l.b16 %v1594
        %v1819 = vunpack.c.l.b16 %v1595
        %v1820 = vunpack.c.l.b16 %v1596
        %v1821 = vunpack.c.l.b16 %v1597
        %v1822 = vunpack.c.l.b16 %v1598
        %v1823 = vunpack.c.l.b16 %v1599
        %v1824 = vunpack.c.l.b16 %v1600
        %v1825 = vunpack.c.l.b16 %v1601
        %v1826 = vunpack.c.l.b16 %v1602
        %v1827 = vunpack.c.l.b16 %v1603
        %v1828 = vunpack.c.l.b16 %v1604
        %v1829 = vunpack.c.l.b16 %v1605
        %v1830 = vunpack.c.l.b16 %v1606
        %v1831 = vunpack.c.l.b16 %v1607
        %v1832 = vunpack.c.l.b16 %v1608
        %v1833 = vunpack.c.l.b16 %v1609
        %v1834 = vunpack.c.l.b16 %v1610
        %v1835 = vunpack.c.l.b16 %v1611
        %v1836 = vunpack.c.l.b16 %v1612
        %v1837 = vunpack.c.l.b16 %v1613
        %v1838 = vunpack.c.l.b16 %v1614
        %v1839 = vunpack.c.l.b16 %v1615
        %v1840 = vunpack.c.l.b16 %v1616
        %v1841 = vunpack.c.l.b16 %v1617
        %v1842 = vunpack.c.l.b16 %v1618
        %v1843 = vunpack.c.l.b16 %v1619
        %v1844 = vunpack.c.l.b16 %v1620
        %v1845 = vunpack.c.l.b16 %v1621
        %v1846 = vunpack.c.l.b16 %v1622
        %v1847 = vunpack.c.l.b16 %v1623
        %v1848 = vunpack.c.l.b16 %v1624
        %v1849 = vpack.c.b16 %v1786, %v1785
        %v1850 = vpack.c.b16 %v1788, %v1787
        %v1851 = vpack.c.b16 %v1790, %v1789
        %v1852 = vpack.c.b16 %v1792, %v1791
        %v1853 = vpack.c.b16 %v1794, %v1793
        %v1854 = vpack.c.b16 %v1796, %v1795
        %v1855 = vpack.c.b16 %v1798, %v1797
        %v1856 = vpack.c.b16 %v1800, %v1799
        %v1857 = vpack.c.b16 %v1802, %v1801
        %v1858 = vpack.c.b16 %v1804, %v1803
        %v1859 = vpack.c.b16 %v1806, %v1805
        %v1860 = vpack.c.b16 %v1808, %v1807
        %v1861 = vpack.c.b16 %v1810, %v1809
        %v1862 = vpack.c.b16 %v1812, %v1811
        %v1863 = vpack.c.b16 %v1814, %v1813
        %v1864 = vpack.c.b16 %v1816, %v1815
        %v1865 = vpack.c.b16 %v1818, %v1817
        %v1866 = vpack.c.b16 %v1820, %v1819
        %v1867 = vpack.c.b16 %v1822, %v1821
        %v1868 = vpack.c.b16 %v1824, %v1823
        %v1869 = vpack.c.b16 %v1826, %v1825
        %v1870 = vpack.c.b16 %v1828, %v1827
        %v1871 = vpack.c.b16 %v1830, %v1829
        %v1872 = vpack.c.b16 %v1832, %v1831
        %v1873 = vpack.c.b16 %v1834, %v1833
        %v1874 = vpack.c.b16 %v1836, %v1835
        %v1875 = vpack.c.b16 %v1838, %v1837
        %v1876 = vpack.c.b16 %v1840, %v1839
        %v1877 = vpack.c.b16 %v1842, %v1841
        %v1878 = vpack.c.b16 %v1844, %v1843
        %v1879 = vpack.c.b16 %v1846, %v1845
        %v1880 = vpack.c.b16 %v1848, %v1847
        %1913 = vmatpush.bf16.xpose.msra.mxu0 %v1856
        %1914 = vmatpush.bf16.xpose.msra.mxu0 %v1855
        %1915 = vmatpush.bf16.xpose.msra.mxu0 %v1854
        %1916 = vmatpush.bf16.xpose.msra.mxu0 %v1853
        %1917 = vmatpush.bf16.xpose.msra.mxu0 %v1852
        %1918 = vmatpush.bf16.xpose.msra.mxu0 %v1851
        %1919 = vmatpush.bf16.xpose.msra.mxu0 %v1850
        %1920 = vmatpush.bf16.xpose.msra.mxu0 %v1849
        %1921 = vmatmul.bf16.gmra.mxu0 %v1689
        %v1922 = vpop.f32.mrf.mxu0
        %v1923 = vadd.f32 0.0, %v1922
        %v1924 = vpop.f32.mrf.mxu0
        %v1925 = vadd.f32 0.0, %v1924
        %1926 = vmatmul.bf16.gmra.mxu0 %v1690
        %v1927 = vpop.f32.mrf.mxu0
        %v1928 = vadd.f32 0.0, %v1927
        %v1929 = vpop.f32.mrf.mxu0
        %v1930 = vadd.f32 0.0, %v1929
        %1931 = vmatmul.bf16.gmra.mxu0 %v1691
        %v1932 = vpop.f32.mrf.mxu0
        %v1933 = vadd.f32 0.0, %v1932
        %v1934 = vpop.f32.mrf.mxu0
        %v1935 = vadd.f32 0.0, %v1934
        %1936 = vmatmul.bf16.gmra.mxu0 %v1692
        %v1937 = vpop.f32.mrf.mxu0
        %v1938 = vadd.f32 0.0, %v1937
        %v1939 = vpop.f32.mrf.mxu0
        %v1940 = vadd.f32 0.0, %v1939
        %1941 = vmatmul.bf16.gmra.mxu0 %v1693
        %v1942 = vpop.f32.mrf.mxu0
        %v1943 = vadd.f32 0.0, %v1942
        %v1944 = vpop.f32.mrf.mxu0
        %v1945 = vadd.f32 0.0, %v1944
        %1946 = vmatmul.bf16.gmra.mxu0 %v1694
        %v1947 = vpop.f32.mrf.mxu0
        %v1948 = vadd.f32 0.0, %v1947
        %v1949 = vpop.f32.mrf.mxu0
        %v1950 = vadd.f32 0.0, %v1949
        %1951 = vmatmul.bf16.gmra.mxu0 %v1695
        %v1952 = vpop.f32.mrf.mxu0
        %v1953 = vadd.f32 0.0, %v1952
        %v1954 = vpop.f32.mrf.mxu0
        %v1955 = vadd.f32 0.0, %v1954
        %1956 = vmatmul.bf16.gmra.mxu0 %v1696
        %v1957 = vpop.f32.mrf.mxu0
        %v1958 = vadd.f32 0.0, %v1957
        %v1959 = vpop.f32.mrf.mxu0
        %v1960 = vadd.f32 0.0, %v1959
        %1961 = vmatmul.bf16.gmra.mxu0 %v1697
        %v1962 = vpop.f32.mrf.mxu0
        %v1963 = vadd.f32 0.0, %v1962
        %v1964 = vpop.f32.mrf.mxu0
        %v1965 = vadd.f32 0.0, %v1964
        %1966 = vmatmul.bf16.gmra.mxu0 %v1698
        %v1967 = vpop.f32.mrf.mxu0
        %v1968 = vadd.f32 0.0, %v1967
        %v1969 = vpop.f32.mrf.mxu0
        %v1970 = vadd.f32 0.0, %v1969
        %1971 = vmatmul.bf16.gmra.mxu0 %v1699
        %v1972 = vpop.f32.mrf.mxu0
        %v1973 = vadd.f32 0.0, %v1972
        %v1974 = vpop.f32.mrf.mxu0
        %v1975 = vadd.f32 0.0, %v1974
        %1976 = vmatmul.bf16.gmra.mxu0 %v1700
        %v1977 = vpop.f32.mrf.mxu0
        %v1978 = vadd.f32 0.0, %v1977
        %v1979 = vpop.f32.mrf.mxu0
        %v1980 = vadd.f32 0.0, %v1979
        %1981 = vmatmul.bf16.gmra.mxu0 %v1701
        %v1982 = vpop.f32.mrf.mxu0
        %v1983 = vadd.f32 0.0, %v1982
        %v1984 = vpop.f32.mrf.mxu0
        %v1985 = vadd.f32 0.0, %v1984
        %1986 = vmatmul.bf16.gmra.mxu0 %v1702
        %v1987 = vpop.f32.mrf.mxu0
        %v1988 = vadd.f32 0.0, %v1987
        %v1989 = vpop.f32.mrf.mxu0
        %v1990 = vadd.f32 0.0, %v1989
        %1991 = vmatmul.bf16.gmra.mxu0 %v1703
        %v1992 = vpop.f32.mrf.mxu0
        %v1993 = vadd.f32 0.0, %v1992
        %v1994 = vpop.f32.mrf.mxu0
        %v1995 = vadd.f32 0.0, %v1994
        %1996 = vmatmul.bf16.gmra.mxu0 %v1704
        %v1997 = vpop.f32.mrf.mxu0
        %v1998 = vadd.f32 0.0, %v1997
        %v1999 = vpop.f32.mrf.mxu0
        %v2000 = vadd.f32 0.0, %v1999
        %2001 = vdwg.mxu0
        %2002 = vmatpush.bf16.xpose.msra.mxu0 %v1864
        %2003 = vmatpush.bf16.xpose.msra.mxu0 %v1863
        %2004 = vmatpush.bf16.xpose.msra.mxu0 %v1862
        %2005 = vmatpush.bf16.xpose.msra.mxu0 %v1861
        %2006 = vmatpush.bf16.xpose.msra.mxu0 %v1860
        %2007 = vmatpush.bf16.xpose.msra.mxu0 %v1859
        %2008 = vmatpush.bf16.xpose.msra.mxu0 %v1858
        %2009 = vmatpush.bf16.xpose.msra.mxu0 %v1857
        %2010 = vmatmul.bf16.gmra.mxu0 %v1689
        %v2011 = vpop.f32.mrf.mxu0
        %v2012 = vadd.f32 0.0, %v2011
        %v2013 = vpop.f32.mrf.mxu0
        %v2014 = vadd.f32 0.0, %v2013
        %2015 = vmatmul.bf16.gmra.mxu0 %v1690
        %v2016 = vpop.f32.mrf.mxu0
        %v2017 = vadd.f32 0.0, %v2016
        %v2018 = vpop.f32.mrf.mxu0
        %v2019 = vadd.f32 0.0, %v2018
        %2020 = vmatmul.bf16.gmra.mxu0 %v1691
        %v2021 = vpop.f32.mrf.mxu0
        %v2022 = vadd.f32 0.0, %v2021
        %v2023 = vpop.f32.mrf.mxu0
        %v2024 = vadd.f32 0.0, %v2023
        %2025 = vmatmul.bf16.gmra.mxu0 %v1692
        %v2026 = vpop.f32.mrf.mxu0
        %v2027 = vadd.f32 0.0, %v2026
        %v2028 = vpop.f32.mrf.mxu0
        %v2029 = vadd.f32 0.0, %v2028
        %2030 = vmatmul.bf16.gmra.mxu0 %v1693
        %v2031 = vpop.f32.mrf.mxu0
        %v2032 = vadd.f32 0.0, %v2031
        %v2033 = vpop.f32.mrf.mxu0
        %v2034 = vadd.f32 0.0, %v2033
        %2035 = vmatmul.bf16.gmra.mxu0 %v1694
        %v2036 = vpop.f32.mrf.mxu0
        %v2037 = vadd.f32 0.0, %v2036
        %v2038 = vpop.f32.mrf.mxu0
        %v2039 = vadd.f32 0.0, %v2038
        %2040 = vmatmul.bf16.gmra.mxu0 %v1695
        %v2041 = vpop.f32.mrf.mxu0
        %v2042 = vadd.f32 0.0, %v2041
        %v2043 = vpop.f32.mrf.mxu0
        %v2044 = vadd.f32 0.0, %v2043
        %2045 = vmatmul.bf16.gmra.mxu0 %v1696
        %v2046 = vpop.f32.mrf.mxu0
        %v2047 = vadd.f32 0.0, %v2046
        %v2048 = vpop.f32.mrf.mxu0
        %v2049 = vadd.f32 0.0, %v2048
        %2050 = vmatmul.bf16.gmra.mxu0 %v1697
        %v2051 = vpop.f32.mrf.mxu0
        %v2052 = vadd.f32 0.0, %v2051
        %v2053 = vpop.f32.mrf.mxu0
        %v2054 = vadd.f32 0.0, %v2053
        %2055 = vmatmul.bf16.gmra.mxu0 %v1698
        %v2056 = vpop.f32.mrf.mxu0
        %v2057 = vadd.f32 0.0, %v2056
        %v2058 = vpop.f32.mrf.mxu0
        %v2059 = vadd.f32 0.0, %v2058
        %2060 = vmatmul.bf16.gmra.mxu0 %v1699
        %v2061 = vpop.f32.mrf.mxu0
        %v2062 = vadd.f32 0.0, %v2061
        %v2063 = vpop.f32.mrf.mxu0
        %v2064 = vadd.f32 0.0, %v2063
        %2065 = vmatmul.bf16.gmra.mxu0 %v1700
        %v2066 = vpop.f32.mrf.mxu0
        %v2067 = vadd.f32 0.0, %v2066
        %v2068 = vpop.f32.mrf.mxu0
        %v2069 = vadd.f32 0.0, %v2068
        %2070 = vmatmul.bf16.gmra.mxu0 %v1701
        %v2071 = vpop.f32.mrf.mxu0
        %v2072 = vadd.f32 0.0, %v2071
        %v2073 = vpop.f32.mrf.mxu0
        %v2074 = vadd.f32 0.0, %v2073
        %2075 = vmatmul.bf16.gmra.mxu0 %v1702
        %v2076 = vpop.f32.mrf.mxu0
        %v2077 = vadd.f32 0.0, %v2076
        %v2078 = vpop.f32.mrf.mxu0
        %v2079 = vadd.f32 0.0, %v2078
        %2080 = vmatmul.bf16.gmra.mxu0 %v1703
        %v2081 = vpop.f32.mrf.mxu0
        %v2082 = vadd.f32 0.0, %v2081
        %v2083 = vpop.f32.mrf.mxu0
        %v2084 = vadd.f32 0.0, %v2083
        %2085 = vmatmul.bf16.gmra.mxu0 %v1704
        %v2086 = vpop.f32.mrf.mxu0
        %v2087 = vadd.f32 0.0, %v2086
        %v2088 = vpop.f32.mrf.mxu0
        %v2089 = vadd.f32 0.0, %v2088
        %2090 = vdwg.mxu0
        %2091 = vmatpush.bf16.xpose.msra.mxu0 %v1872
        %2092 = vmatpush.bf16.xpose.msra.mxu0 %v1871
        %2093 = vmatpush.bf16.xpose.msra.mxu0 %v1870
        %2094 = vmatpush.bf16.xpose.msra.mxu0 %v1869
        %2095 = vmatpush.bf16.xpose.msra.mxu0 %v1868
        %2096 = vmatpush.bf16.xpose.msra.mxu0 %v1867
        %2097 = vmatpush.bf16.xpose.msra.mxu0 %v1866
        %2098 = vmatpush.bf16.xpose.msra.mxu0 %v1865
        %2099 = vmatmul.bf16.gmra.mxu0 %v1689
        %v2100 = vpop.f32.mrf.mxu0
        %v2101 = vadd.f32 0.0, %v2100
        %v2102 = vpop.f32.mrf.mxu0
        %v2103 = vadd.f32 0.0, %v2102
        %2104 = vmatmul.bf16.gmra.mxu0 %v1690
        %v2105 = vpop.f32.mrf.mxu0
        %v2106 = vadd.f32 0.0, %v2105
        %v2107 = vpop.f32.mrf.mxu0
        %v2108 = vadd.f32 0.0, %v2107
        %2109 = vmatmul.bf16.gmra.mxu0 %v1691
        %v2110 = vpop.f32.mrf.mxu0
        %v2111 = vadd.f32 0.0, %v2110
        %v2112 = vpop.f32.mrf.mxu0
        %v2113 = vadd.f32 0.0, %v2112
        %2114 = vmatmul.bf16.gmra.mxu0 %v1692
        %v2115 = vpop.f32.mrf.mxu0
        %v2116 = vadd.f32 0.0, %v2115
        %v2117 = vpop.f32.mrf.mxu0
        %v2118 = vadd.f32 0.0, %v2117
        %2119 = vmatmul.bf16.gmra.mxu0 %v1693
        %v2120 = vpop.f32.mrf.mxu0
        %v2121 = vadd.f32 0.0, %v2120
        %v2122 = vpop.f32.mrf.mxu0
        %v2123 = vadd.f32 0.0, %v2122
        %2124 = vmatmul.bf16.gmra.mxu0 %v1694
        %v2125 = vpop.f32.mrf.mxu0
        %v2126 = vadd.f32 0.0, %v2125
        %v2127 = vpop.f32.mrf.mxu0
        %v2128 = vadd.f32 0.0, %v2127
        %2129 = vmatmul.bf16.gmra.mxu0 %v1695
        %v2130 = vpop.f32.mrf.mxu0
        %v2131 = vadd.f32 0.0, %v2130
        %v2132 = vpop.f32.mrf.mxu0
        %v2133 = vadd.f32 0.0, %v2132
        %2134 = vmatmul.bf16.gmra.mxu0 %v1696
        %v2135 = vpop.f32.mrf.mxu0
        %v2136 = vadd.f32 0.0, %v2135
        %v2137 = vpop.f32.mrf.mxu0
        %v2138 = vadd.f32 0.0, %v2137
        %2139 = vmatmul.bf16.gmra.mxu0 %v1697
        %v2140 = vpop.f32.mrf.mxu0
        %v2141 = vadd.f32 0.0, %v2140
        %v2142 = vpop.f32.mrf.mxu0
        %v2143 = vadd.f32 0.0, %v2142
        %2144 = vmatmul.bf16.gmra.mxu0 %v1698
        %v2145 = vpop.f32.mrf.mxu0
        %v2146 = vadd.f32 0.0, %v2145
        %v2147 = vpop.f32.mrf.mxu0
        %v2148 = vadd.f32 0.0, %v2147
        %2149 = vmatmul.bf16.gmra.mxu0 %v1699
        %v2150 = vpop.f32.mrf.mxu0
        %v2151 = vadd.f32 0.0, %v2150
        %v2152 = vpop.f32.mrf.mxu0
        %v2153 = vadd.f32 0.0, %v2152
        %2154 = vmatmul.bf16.gmra.mxu0 %v1700
        %v2155 = vpop.f32.mrf.mxu0
        %v2156 = vadd.f32 0.0, %v2155
        %v2157 = vpop.f32.mrf.mxu0
        %v2158 = vadd.f32 0.0, %v2157
        %2159 = vmatmul.bf16.gmra.mxu0 %v1701
        %v2160 = vpop.f32.mrf.mxu0
        %v2161 = vadd.f32 0.0, %v2160
        %v2162 = vpop.f32.mrf.mxu0
        %v2163 = vadd.f32 0.0, %v2162
        %2164 = vmatmul.bf16.gmra.mxu0 %v1702
        %v2165 = vpop.f32.mrf.mxu0
        %v2166 = vadd.f32 0.0, %v2165
        %v2167 = vpop.f32.mrf.mxu0
        %v2168 = vadd.f32 0.0, %v2167
        %2169 = vmatmul.bf16.gmra.mxu0 %v1703
        %v2170 = vpop.f32.mrf.mxu0
        %v2171 = vadd.f32 0.0, %v2170
        %v2172 = vpop.f32.mrf.mxu0
        %v2173 = vadd.f32 0.0, %v2172
        %2174 = vmatmul.bf16.gmra.mxu0 %v1704
        %v2175 = vpop.f32.mrf.mxu0
        %v2176 = vadd.f32 0.0, %v2175
        %v2177 = vpop.f32.mrf.mxu0
        %v2178 = vadd.f32 0.0, %v2177
        %2179 = vdwg.mxu0
        %2180 = vmatpush.bf16.xpose.msra.mxu0 %v1880
        %2181 = vmatpush.bf16.xpose.msra.mxu0 %v1879
        %2182 = vmatpush.bf16.xpose.msra.mxu0 %v1878
        %2183 = vmatpush.bf16.xpose.msra.mxu0 %v1877
        %2184 = vmatpush.bf16.xpose.msra.mxu0 %v1876
        %2185 = vmatpush.bf16.xpose.msra.mxu0 %v1875
        %2186 = vmatpush.bf16.xpose.msra.mxu0 %v1874
        %2187 = vmatpush.bf16.xpose.msra.mxu0 %v1873
        %2188 = vmatmul.bf16.gmra.mxu0 %v1689
        %v2189 = vpop.f32.mrf.mxu0
        %v2190 = vadd.f32 0.0, %v2189
        %v2191 = vpop.f32.mrf.mxu0
        %v2192 = vadd.f32 0.0, %v2191
        %2193 = vmatmul.bf16.gmra.mxu0 %v1690
        %v2194 = vpop.f32.mrf.mxu0
        %v2195 = vadd.f32 0.0, %v2194
        %v2196 = vpop.f32.mrf.mxu0
        %v2197 = vadd.f32 0.0, %v2196
        %2198 = vmatmul.bf16.gmra.mxu0 %v1691
        %v2199 = vpop.f32.mrf.mxu0
        %v2200 = vadd.f32 0.0, %v2199
        %v2201 = vpop.f32.mrf.mxu0
        %v2202 = vadd.f32 0.0, %v2201
        %2203 = vmatmul.bf16.gmra.mxu0 %v1692
        %v2204 = vpop.f32.mrf.mxu0
        %v2205 = vadd.f32 0.0, %v2204
        %v2206 = vpop.f32.mrf.mxu0
        %v2207 = vadd.f32 0.0, %v2206
        %2208 = vmatmul.bf16.gmra.mxu0 %v1693
        %v2209 = vpop.f32.mrf.mxu0
        %v2210 = vadd.f32 0.0, %v2209
        %v2211 = vpop.f32.mrf.mxu0
        %v2212 = vadd.f32 0.0, %v2211
        %2213 = vmatmul.bf16.gmra.mxu0 %v1694
        %v2214 = vpop.f32.mrf.mxu0
        %v2215 = vadd.f32 0.0, %v2214
        %v2216 = vpop.f32.mrf.mxu0
        %v2217 = vadd.f32 0.0, %v2216
        %2218 = vmatmul.bf16.gmra.mxu0 %v1695
        %v2219 = vpop.f32.mrf.mxu0
        %v2220 = vadd.f32 0.0, %v2219
        %v2221 = vpop.f32.mrf.mxu0
        %v2222 = vadd.f32 0.0, %v2221
        %2223 = vmatmul.bf16.gmra.mxu0 %v1696
        %v2224 = vpop.f32.mrf.mxu0
        %v2225 = vadd.f32 0.0, %v2224
        %v2226 = vpop.f32.mrf.mxu0
        %v2227 = vadd.f32 0.0, %v2226
        %2228 = vmatmul.bf16.gmra.mxu0 %v1697
        %v2229 = vpop.f32.mrf.mxu0
        %v2230 = vadd.f32 0.0, %v2229
        %v2231 = vpop.f32.mrf.mxu0
        %v2232 = vadd.f32 0.0, %v2231
        %2233 = vmatmul.bf16.gmra.mxu0 %v1698
        %v2234 = vpop.f32.mrf.mxu0
        %v2235 = vadd.f32 0.0, %v2234
        %v2236 = vpop.f32.mrf.mxu0
        %v2237 = vadd.f32 0.0, %v2236
        %2238 = vmatmul.bf16.gmra.mxu0 %v1699
        %v2239 = vpop.f32.mrf.mxu0
        %v2240 = vadd.f32 0.0, %v2239
        %v2241 = vpop.f32.mrf.mxu0
        %v2242 = vadd.f32 0.0, %v2241
        %2243 = vmatmul.bf16.gmra.mxu0 %v1700
        %v2244 = vpop.f32.mrf.mxu0
        %v2245 = vadd.f32 0.0, %v2244
        %v2246 = vpop.f32.mrf.mxu0
        %v2247 = vadd.f32 0.0, %v2246
        %2248 = vmatmul.bf16.gmra.mxu0 %v1701
        %v2249 = vpop.f32.mrf.mxu0
        %v2250 = vadd.f32 0.0, %v2249
        %v2251 = vpop.f32.mrf.mxu0
        %v2252 = vadd.f32 0.0, %v2251
        %2253 = vmatmul.bf16.gmra.mxu0 %v1702
        %v2254 = vpop.f32.mrf.mxu0
        %v2255 = vadd.f32 0.0, %v2254
        %v2256 = vpop.f32.mrf.mxu0
        %v2257 = vadd.f32 0.0, %v2256
        %2258 = vmatmul.bf16.gmra.mxu0 %v1703
        %v2259 = vpop.f32.mrf.mxu0
        %v2260 = vadd.f32 0.0, %v2259
        %v2261 = vpop.f32.mrf.mxu0
        %v2262 = vadd.f32 0.0, %v2261
        %2263 = vmatmul.bf16.gmra.mxu0 %v1704
        %v2264 = vpop.f32.mrf.mxu0
        %v2265 = vadd.f32 0.0, %v2264
        %v2266 = vpop.f32.mrf.mxu0
        %v2267 = vadd.f32 0.0, %v2266
        %2268 = vdwg.mxu0
        %v2269 = vmax.f32 %v1923, %v2012
        %v2270 = vmax.f32 %v2269, %v2101
        %v2271 = vmax.f32 %v2270, %v2190
        %2272 = vmax.xlane.f32.xlu0 %v2271
        %v2273 = vpop.xlane.xlu0 %2272
        %v2274 = vmax.f32 %v1925, %v2014
        %v2275 = vmax.f32 %v2274, %v2103
        %v2276 = vmax.f32 %v2275, %v2192
        %2277 = vmax.xlane.f32.xlu0 %v2276
        %v2278 = vpop.xlane.xlu0 %2277
        %v2279 = vmax.f32 %v1928, %v2017
        %v2280 = vmax.f32 %v2279, %v2106
        %v2281 = vmax.f32 %v2280, %v2195
        %2282 = vmax.xlane.f32.xlu0 %v2281
        %v2283 = vpop.xlane.xlu0 %2282
        %v2284 = vmax.f32 %v1930, %v2019
        %v2285 = vmax.f32 %v2284, %v2108
        %v2286 = vmax.f32 %v2285, %v2197
        %2287 = vmax.xlane.f32.xlu0 %v2286
        %v2288 = vpop.xlane.xlu0 %2287
        %v2289 = vmax.f32 %v1933, %v2022
        %v2290 = vmax.f32 %v2289, %v2111
        %v2291 = vmax.f32 %v2290, %v2200
        %2292 = vmax.xlane.f32.xlu0 %v2291
        %v2293 = vpop.xlane.xlu0 %2292
        %v2294 = vmax.f32 %v1935, %v2024
        %v2295 = vmax.f32 %v2294, %v2113
        %v2296 = vmax.f32 %v2295, %v2202
        %2297 = vmax.xlane.f32.xlu0 %v2296
        %v2298 = vpop.xlane.xlu0 %2297
        %v2299 = vmax.f32 %v1938, %v2027
        %v2300 = vmax.f32 %v2299, %v2116
        %v2301 = vmax.f32 %v2300, %v2205
        %2302 = vmax.xlane.f32.xlu0 %v2301
        %v2303 = vpop.xlane.xlu0 %2302
        %v2304 = vmax.f32 %v1940, %v2029
        %v2305 = vmax.f32 %v2304, %v2118
        %v2306 = vmax.f32 %v2305, %v2207
        %2307 = vmax.xlane.f32.xlu0 %v2306
        %v2308 = vpop.xlane.xlu0 %2307
        %v2309 = vmax.f32 %v1943, %v2032
        %v2310 = vmax.f32 %v2309, %v2121
        %v2311 = vmax.f32 %v2310, %v2210
        %2312 = vmax.xlane.f32.xlu0 %v2311
        %v2313 = vpop.xlane.xlu0 %2312
        %v2314 = vmax.f32 %v1945, %v2034
        %v2315 = vmax.f32 %v2314, %v2123
        %v2316 = vmax.f32 %v2315, %v2212
        %2317 = vmax.xlane.f32.xlu0 %v2316
        %v2318 = vpop.xlane.xlu0 %2317
        %v2319 = vmax.f32 %v1948, %v2037
        %v2320 = vmax.f32 %v2319, %v2126
        %v2321 = vmax.f32 %v2320, %v2215
        %2322 = vmax.xlane.f32.xlu0 %v2321
        %v2323 = vpop.xlane.xlu0 %2322
        %v2324 = vmax.f32 %v1950, %v2039
        %v2325 = vmax.f32 %v2324, %v2128
        %v2326 = vmax.f32 %v2325, %v2217
        %2327 = vmax.xlane.f32.xlu0 %v2326
        %v2328 = vpop.xlane.xlu0 %2327
        %v2329 = vmax.f32 %v1953, %v2042
        %v2330 = vmax.f32 %v2329, %v2131
        %v2331 = vmax.f32 %v2330, %v2220
        %2332 = vmax.xlane.f32.xlu0 %v2331
        %v2333 = vpop.xlane.xlu0 %2332
        %v2334 = vmax.f32 %v1955, %v2044
        %v2335 = vmax.f32 %v2334, %v2133
        %v2336 = vmax.f32 %v2335, %v2222
        %2337 = vmax.xlane.f32.xlu0 %v2336
        %v2338 = vpop.xlane.xlu0 %2337
        %v2339 = vmax.f32 %v1958, %v2047
        %v2340 = vmax.f32 %v2339, %v2136
        %v2341 = vmax.f32 %v2340, %v2225
        %2342 = vmax.xlane.f32.xlu0 %v2341
        %v2343 = vpop.xlane.xlu0 %2342
        %v2344 = vmax.f32 %v1960, %v2049
        %v2345 = vmax.f32 %v2344, %v2138
        %v2346 = vmax.f32 %v2345, %v2227
        %2347 = vmax.xlane.f32.xlu0 %v2346
        %v2348 = vpop.xlane.xlu0 %2347
        %v2349 = vmax.f32 %v1963, %v2052
        %v2350 = vmax.f32 %v2349, %v2141
        %v2351 = vmax.f32 %v2350, %v2230
        %2352 = vmax.xlane.f32.xlu0 %v2351
        %v2353 = vpop.xlane.xlu0 %2352
        %v2354 = vmax.f32 %v1965, %v2054
        %v2355 = vmax.f32 %v2354, %v2143
        %v2356 = vmax.f32 %v2355, %v2232
        %2357 = vmax.xlane.f32.xlu0 %v2356
        %v2358 = vpop.xlane.xlu0 %2357
        %v2359 = vmax.f32 %v1968, %v2057
        %v2360 = vmax.f32 %v2359, %v2146
        %v2361 = vmax.f32 %v2360, %v2235
        %2362 = vmax.xlane.f32.xlu0 %v2361
        %v2363 = vpop.xlane.xlu0 %2362
        %v2364 = vmax.f32 %v1970, %v2059
        %v2365 = vmax.f32 %v2364, %v2148
        %v2366 = vmax.f32 %v2365, %v2237
        %2367 = vmax.xlane.f32.xlu0 %v2366
        %v2368 = vpop.xlane.xlu0 %2367
        %v2369 = vmax.f32 %v1973, %v2062
        %v2370 = vmax.f32 %v2369, %v2151
        %v2371 = vmax.f32 %v2370, %v2240
        %2372 = vmax.xlane.f32.xlu0 %v2371
        %v2373 = vpop.xlane.xlu0 %2372
        %v2374 = vmax.f32 %v1975, %v2064
        %v2375 = vmax.f32 %v2374, %v2153
        %v2376 = vmax.f32 %v2375, %v2242
        %2377 = vmax.xlane.f32.xlu0 %v2376
        %v2378 = vpop.xlane.xlu0 %2377
        %v2379 = vmax.f32 %v1978, %v2067
        %v2380 = vmax.f32 %v2379, %v2156
        %v2381 = vmax.f32 %v2380, %v2245
        %2382 = vmax.xlane.f32.xlu0 %v2381
        %v2383 = vpop.xlane.xlu0 %2382
        %v2384 = vmax.f32 %v1980, %v2069
        %v2385 = vmax.f32 %v2384, %v2158
        %v2386 = vmax.f32 %v2385, %v2247
        %2387 = vmax.xlane.f32.xlu0 %v2386
        %v2388 = vpop.xlane.xlu0 %2387
        %v2389 = vmax.f32 %v1983, %v2072
        %v2390 = vmax.f32 %v2389, %v2161
        %v2391 = vmax.f32 %v2390, %v2250
        %2392 = vmax.xlane.f32.xlu0 %v2391
        %v2393 = vpop.xlane.xlu0 %2392
        %v2394 = vmax.f32 %v1985, %v2074
        %v2395 = vmax.f32 %v2394, %v2163
        %v2396 = vmax.f32 %v2395, %v2252
        %2397 = vmax.xlane.f32.xlu0 %v2396
        %v2398 = vpop.xlane.xlu0 %2397
        %v2399 = vmax.f32 %v1988, %v2077
        %v2400 = vmax.f32 %v2399, %v2166
        %v2401 = vmax.f32 %v2400, %v2255
        %2402 = vmax.xlane.f32.xlu0 %v2401
        %v2403 = vpop.xlane.xlu0 %2402
        %v2404 = vmax.f32 %v1990, %v2079
        %v2405 = vmax.f32 %v2404, %v2168
        %v2406 = vmax.f32 %v2405, %v2257
        %2407 = vmax.xlane.f32.xlu0 %v2406
        %v2408 = vpop.xlane.xlu0 %2407
        %v2409 = vmax.f32 %v1993, %v2082
        %v2410 = vmax.f32 %v2409, %v2171
        %v2411 = vmax.f32 %v2410, %v2260
        %2412 = vmax.xlane.f32.xlu0 %v2411
        %v2413 = vpop.xlane.xlu0 %2412
        %v2414 = vmax.f32 %v1995, %v2084
        %v2415 = vmax.f32 %v2414, %v2173
        %v2416 = vmax.f32 %v2415, %v2262
        %2417 = vmax.xlane.f32.xlu0 %v2416
        %v2418 = vpop.xlane.xlu0 %2417
        %v2419 = vmax.f32 %v1998, %v2087
        %v2420 = vmax.f32 %v2419, %v2176
        %v2421 = vmax.f32 %v2420, %v2265
        %2422 = vmax.xlane.f32.xlu0 %v2421
        %v2423 = vpop.xlane.xlu0 %2422
        %v2424 = vmax.f32 %v2000, %v2089
        %v2425 = vmax.f32 %v2424, %v2178
        %v2426 = vmax.f32 %v2425, %v2267
        %2427 = vmax.xlane.f32.xlu0 %v2426
        %v2428 = vpop.xlane.xlu0 %2427
        %v2429 = vsub.f32 %v1923, %v2273
        %v2430 = vsub.f32 %v2012, %v2273
        %v2431 = vsub.f32 %v2101, %v2273
        %v2432 = vsub.f32 %v2190, %v2273
        %v2433 = vsub.f32 %v1925, %v2278
        %v2434 = vsub.f32 %v2014, %v2278
        %v2435 = vsub.f32 %v2103, %v2278
        %v2436 = vsub.f32 %v2192, %v2278
        %v2437 = vsub.f32 %v1928, %v2283
        %v2438 = vsub.f32 %v2017, %v2283
        %v2439 = vsub.f32 %v2106, %v2283
        %v2440 = vsub.f32 %v2195, %v2283
        %v2441 = vsub.f32 %v1930, %v2288
        %v2442 = vsub.f32 %v2019, %v2288
        %v2443 = vsub.f32 %v2108, %v2288
        %v2444 = vsub.f32 %v2197, %v2288
        %v2445 = vsub.f32 %v1933, %v2293
        %v2446 = vsub.f32 %v2022, %v2293
        %v2447 = vsub.f32 %v2111, %v2293
        %v2448 = vsub.f32 %v2200, %v2293
        %v2449 = vsub.f32 %v1935, %v2298
        %v2450 = vsub.f32 %v2024, %v2298
        %v2451 = vsub.f32 %v2113, %v2298
        %v2452 = vsub.f32 %v2202, %v2298
        %v2453 = vsub.f32 %v1938, %v2303
        %v2454 = vsub.f32 %v2027, %v2303
        %v2455 = vsub.f32 %v2116, %v2303
        %v2456 = vsub.f32 %v2205, %v2303
        %v2457 = vsub.f32 %v1940, %v2308
        %v2458 = vsub.f32 %v2029, %v2308
        %v2459 = vsub.f32 %v2118, %v2308
        %v2460 = vsub.f32 %v2207, %v2308
        %v2461 = vsub.f32 %v1943, %v2313
        %v2462 = vsub.f32 %v2032, %v2313
        %v2463 = vsub.f32 %v2121, %v2313
        %v2464 = vsub.f32 %v2210, %v2313
        %v2465 = vsub.f32 %v1945, %v2318
        %v2466 = vsub.f32 %v2034, %v2318
        %v2467 = vsub.f32 %v2123, %v2318
        %v2468 = vsub.f32 %v2212, %v2318
        %v2469 = vsub.f32 %v1948, %v2323
        %v2470 = vsub.f32 %v2037, %v2323
        %v2471 = vsub.f32 %v2126, %v2323
        %v2472 = vsub.f32 %v2215, %v2323
        %v2473 = vsub.f32 %v1950, %v2328
        %v2474 = vsub.f32 %v2039, %v2328
        %v2475 = vsub.f32 %v2128, %v2328
        %v2476 = vsub.f32 %v2217, %v2328
        %v2477 = vsub.f32 %v1953, %v2333
        %v2478 = vsub.f32 %v2042, %v2333
        %v2479 = vsub.f32 %v2131, %v2333
        %v2480 = vsub.f32 %v2220, %v2333
        %v2481 = vsub.f32 %v1955, %v2338
        %v2482 = vsub.f32 %v2044, %v2338
        %v2483 = vsub.f32 %v2133, %v2338
        %v2484 = vsub.f32 %v2222, %v2338
        %v2485 = vsub.f32 %v1958, %v2343
        %v2486 = vsub.f32 %v2047, %v2343
        %v2487 = vsub.f32 %v2136, %v2343
        %v2488 = vsub.f32 %v2225, %v2343
        %v2489 = vsub.f32 %v1960, %v2348
        %v2490 = vsub.f32 %v2049, %v2348
        %v2491 = vsub.f32 %v2138, %v2348
        %v2492 = vsub.f32 %v2227, %v2348
        %v2493 = vsub.f32 %v1963, %v2353
        %v2494 = vsub.f32 %v2052, %v2353
        %v2495 = vsub.f32 %v2141, %v2353
        %v2496 = vsub.f32 %v2230, %v2353
        %v2497 = vsub.f32 %v1965, %v2358
        %v2498 = vsub.f32 %v2054, %v2358
        %v2499 = vsub.f32 %v2143, %v2358
        %v2500 = vsub.f32 %v2232, %v2358
        %v2501 = vsub.f32 %v1968, %v2363
        %v2502 = vsub.f32 %v2057, %v2363
        %v2503 = vsub.f32 %v2146, %v2363
        %v2504 = vsub.f32 %v2235, %v2363
        %v2505 = vsub.f32 %v1970, %v2368
        %v2506 = vsub.f32 %v2059, %v2368
        %v2507 = vsub.f32 %v2148, %v2368
        %v2508 = vsub.f32 %v2237, %v2368
        %v2509 = vsub.f32 %v1973, %v2373
        %v2510 = vsub.f32 %v2062, %v2373
        %v2511 = vsub.f32 %v2151, %v2373
        %v2512 = vsub.f32 %v2240, %v2373
        %v2513 = vsub.f32 %v1975, %v2378
        %v2514 = vsub.f32 %v2064, %v2378
        %v2515 = vsub.f32 %v2153, %v2378
        %v2516 = vsub.f32 %v2242, %v2378
        %v2517 = vsub.f32 %v1978, %v2383
        %v2518 = vsub.f32 %v2067, %v2383
        %v2519 = vsub.f32 %v2156, %v2383
        %v2520 = vsub.f32 %v2245, %v2383
        %v2521 = vsub.f32 %v1980, %v2388
        %v2522 = vsub.f32 %v2069, %v2388
        %v2523 = vsub.f32 %v2158, %v2388
        %v2524 = vsub.f32 %v2247, %v2388
        %v2525 = vsub.f32 %v1983, %v2393
        %v2526 = vsub.f32 %v2072, %v2393
        %v2527 = vsub.f32 %v2161, %v2393
        %v2528 = vsub.f32 %v2250, %v2393
        %v2529 = vsub.f32 %v1985, %v2398
        %v2530 = vsub.f32 %v2074, %v2398
        %v2531 = vsub.f32 %v2163, %v2398
        %v2532 = vsub.f32 %v2252, %v2398
        %v2533 = vsub.f32 %v1988, %v2403
        %v2534 = vsub.f32 %v2077, %v2403
        %v2535 = vsub.f32 %v2166, %v2403
        %v2536 = vsub.f32 %v2255, %v2403
        %v2537 = vsub.f32 %v1990, %v2408
        %v2538 = vsub.f32 %v2079, %v2408
        %v2539 = vsub.f32 %v2168, %v2408
        %v2540 = vsub.f32 %v2257, %v2408
        %v2541 = vsub.f32 %v1993, %v2413
        %v2542 = vsub.f32 %v2082, %v2413
        %v2543 = vsub.f32 %v2171, %v2413
        %v2544 = vsub.f32 %v2260, %v2413
        %v2545 = vsub.f32 %v1995, %v2418
        %v2546 = vsub.f32 %v2084, %v2418
        %v2547 = vsub.f32 %v2173, %v2418
        %v2548 = vsub.f32 %v2262, %v2418
        %v2549 = vsub.f32 %v1998, %v2423
        %v2550 = vsub.f32 %v2087, %v2423
        %v2551 = vsub.f32 %v2176, %v2423
        %v2552 = vsub.f32 %v2265, %v2423
        %v2553 = vsub.f32 %v2000, %v2428
        %v2554 = vsub.f32 %v2089, %v2428
        %v2555 = vsub.f32 %v2178, %v2428
        %v2556 = vsub.f32 %v2267, %v2428
        %v2557 = vmul.f32 %v2429, 1.442695
        %v2558 = vpow.pop %v2557
        %v2559 = vmul.f32 %v2430, 1.442695
        %v2560 = vpow.pop %v2559
        %v2561 = vmul.f32 %v2431, 1.442695
        %v2562 = vpow.pop %v2561
        %v2563 = vmul.f32 %v2432, 1.442695
        %v2564 = vpow.pop %v2563
        %v2565 = vmul.f32 %v2433, 1.442695
        %v2566 = vpow.pop %v2565
        %v2567 = vmul.f32 %v2434, 1.442695
        %v2568 = vpow.pop %v2567
        %v2569 = vmul.f32 %v2435, 1.442695
        %v2570 = vpow.pop %v2569
        %v2571 = vmul.f32 %v2436, 1.442695
        %v2572 = vpow.pop %v2571
        %v2573 = vmul.f32 %v2437, 1.442695
        %v2574 = vpow.pop %v2573
        %v2575 = vmul.f32 %v2438, 1.442695
        %v2576 = vpow.pop %v2575
        %v2577 = vmul.f32 %v2439, 1.442695
        %v2578 = vpow.pop %v2577
        %v2579 = vmul.f32 %v2440, 1.442695
        %v2580 = vpow.pop %v2579
        %v2581 = vmul.f32 %v2441, 1.442695
        %v2582 = vpow.pop %v2581
        %v2583 = vmul.f32 %v2442, 1.442695
        %v2584 = vpow.pop %v2583
        %v2585 = vmul.f32 %v2443, 1.442695
        %v2586 = vpow.pop %v2585
        %v2587 = vmul.f32 %v2444, 1.442695
        %v2588 = vpow.pop %v2587
        %v2589 = vmul.f32 %v2445, 1.442695
        %v2590 = vpow.pop %v2589
        %v2591 = vmul.f32 %v2446, 1.442695
        %v2592 = vpow.pop %v2591
        %v2593 = vmul.f32 %v2447, 1.442695
        %v2594 = vpow.pop %v2593
        %v2595 = vmul.f32 %v2448, 1.442695
        %v2596 = vpow.pop %v2595
        %v2597 = vmul.f32 %v2449, 1.442695
        %v2598 = vpow.pop %v2597
        %v2599 = vmul.f32 %v2450, 1.442695
        %v2600 = vpow.pop %v2599
        %v2601 = vmul.f32 %v2451, 1.442695
        %v2602 = vpow.pop %v2601
        %v2603 = vmul.f32 %v2452, 1.442695
        %v2604 = vpow.pop %v2603
        %v2605 = vmul.f32 %v2453, 1.442695
        %v2606 = vpow.pop %v2605
        %v2607 = vmul.f32 %v2454, 1.442695
        %v2608 = vpow.pop %v2607
        %v2609 = vmul.f32 %v2455, 1.442695
        %v2610 = vpow.pop %v2609
        %v2611 = vmul.f32 %v2456, 1.442695
        %v2612 = vpow.pop %v2611
        %v2613 = vmul.f32 %v2457, 1.442695
        %v2614 = vpow.pop %v2613
        %v2615 = vmul.f32 %v2458, 1.442695
        %v2616 = vpow.pop %v2615
        %v2617 = vmul.f32 %v2459, 1.442695
        %v2618 = vpow.pop %v2617
        %v2619 = vmul.f32 %v2460, 1.442695
        %v2620 = vpow.pop %v2619
        %v2621 = vmul.f32 %v2461, 1.442695
        %v2622 = vpow.pop %v2621
        %v2623 = vmul.f32 %v2462, 1.442695
        %v2624 = vpow.pop %v2623
        %v2625 = vmul.f32 %v2463, 1.442695
        %v2626 = vpow.pop %v2625
        %v2627 = vmul.f32 %v2464, 1.442695
        %v2628 = vpow.pop %v2627
        %v2629 = vmul.f32 %v2465, 1.442695
        %v2630 = vpow.pop %v2629
        %v2631 = vmul.f32 %v2466, 1.442695
        %v2632 = vpow.pop %v2631
        %v2633 = vmul.f32 %v2467, 1.442695
        %v2634 = vpow.pop %v2633
        %v2635 = vmul.f32 %v2468, 1.442695
        %v2636 = vpow.pop %v2635
        %v2637 = vmul.f32 %v2469, 1.442695
        %v2638 = vpow.pop %v2637
        %v2639 = vmul.f32 %v2470, 1.442695
        %v2640 = vpow.pop %v2639
        %v2641 = vmul.f32 %v2471, 1.442695
        %v2642 = vpow.pop %v2641
        %v2643 = vmul.f32 %v2472, 1.442695
        %v2644 = vpow.pop %v2643
        %v2645 = vmul.f32 %v2473, 1.442695
        %v2646 = vpow.pop %v2645
        %v2647 = vmul.f32 %v2474, 1.442695
        %v2648 = vpow.pop %v2647
        %v2649 = vmul.f32 %v2475, 1.442695
        %v2650 = vpow.pop %v2649
        %v2651 = vmul.f32 %v2476, 1.442695
        %v2652 = vpow.pop %v2651
        %v2653 = vmul.f32 %v2477, 1.442695
        %v2654 = vpow.pop %v2653
        %v2655 = vmul.f32 %v2478, 1.442695
        %v2656 = vpow.pop %v2655
        %v2657 = vmul.f32 %v2479, 1.442695
        %v2658 = vpow.pop %v2657
        %v2659 = vmul.f32 %v2480, 1.442695
        %v2660 = vpow.pop %v2659
        %v2661 = vmul.f32 %v2481, 1.442695
        %v2662 = vpow.pop %v2661
        %v2663 = vmul.f32 %v2482, 1.442695
        %v2664 = vpow.pop %v2663
        %v2665 = vmul.f32 %v2483, 1.442695
        %v2666 = vpow.pop %v2665
        %v2667 = vmul.f32 %v2484, 1.442695
        %v2668 = vpow.pop %v2667
        %v2669 = vmul.f32 %v2485, 1.442695
        %v2670 = vpow.pop %v2669
        %v2671 = vmul.f32 %v2486, 1.442695
        %v2672 = vpow.pop %v2671
        %v2673 = vmul.f32 %v2487, 1.442695
        %v2674 = vpow.pop %v2673
        %v2675 = vmul.f32 %v2488, 1.442695
        %v2676 = vpow.pop %v2675
        %v2677 = vmul.f32 %v2489, 1.442695
        %v2678 = vpow.pop %v2677
        %v2679 = vmul.f32 %v2490, 1.442695
        %v2680 = vpow.pop %v2679
        %v2681 = vmul.f32 %v2491, 1.442695
        %v2682 = vpow.pop %v2681
        %v2683 = vmul.f32 %v2492, 1.442695
        %v2684 = vpow.pop %v2683
        %v2685 = vmul.f32 %v2493, 1.442695
        %v2686 = vpow.pop %v2685
        %v2687 = vmul.f32 %v2494, 1.442695
        %v2688 = vpow.pop %v2687
        %v2689 = vmul.f32 %v2495, 1.442695
        %v2690 = vpow.pop %v2689
        %v2691 = vmul.f32 %v2496, 1.442695
        %v2692 = vpow.pop %v2691
        %v2693 = vmul.f32 %v2497, 1.442695
        %v2694 = vpow.pop %v2693
        %v2695 = vmul.f32 %v2498, 1.442695
        %v2696 = vpow.pop %v2695
        %v2697 = vmul.f32 %v2499, 1.442695
        %v2698 = vpow.pop %v2697
        %v2699 = vmul.f32 %v2500, 1.442695
        %v2700 = vpow.pop %v2699
        %v2701 = vmul.f32 %v2501, 1.442695
        %v2702 = vpow.pop %v2701
        %v2703 = vmul.f32 %v2502, 1.442695
        %v2704 = vpow.pop %v2703
        %v2705 = vmul.f32 %v2503, 1.442695
        %v2706 = vpow.pop %v2705
        %v2707 = vmul.f32 %v2504, 1.442695
        %v2708 = vpow.pop %v2707
        %v2709 = vmul.f32 %v2505, 1.442695
        %v2710 = vpow.pop %v2709
        %v2711 = vmul.f32 %v2506, 1.442695
        %v2712 = vpow.pop %v2711
        %v2713 = vmul.f32 %v2507, 1.442695
        %v2714 = vpow.pop %v2713
        %v2715 = vmul.f32 %v2508, 1.442695
        %v2716 = vpow.pop %v2715
        %v2717 = vmul.f32 %v2509, 1.442695
        %v2718 = vpow.pop %v2717
        %v2719 = vmul.f32 %v2510, 1.442695
        %v2720 = vpow.pop %v2719
        %v2721 = vmul.f32 %v2511, 1.442695
        %v2722 = vpow.pop %v2721
        %v2723 = vmul.f32 %v2512, 1.442695
        %v2724 = vpow.pop %v2723
        %v2725 = vmul.f32 %v2513, 1.442695
        %v2726 = vpow.pop %v2725
        %v2727 = vmul.f32 %v2514, 1.442695
        %v2728 = vpow.pop %v2727
        %v2729 = vmul.f32 %v2515, 1.442695
        %v2730 = vpow.pop %v2729
        %v2731 = vmul.f32 %v2516, 1.442695
        %v2732 = vpow.pop %v2731
        %v2733 = vmul.f32 %v2517, 1.442695
        %v2734 = vpow.pop %v2733
        %v2735 = vmul.f32 %v2518, 1.442695
        %v2736 = vpow.pop %v2735
        %v2737 = vmul.f32 %v2519, 1.442695
        %v2738 = vpow.pop %v2737
        %v2739 = vmul.f32 %v2520, 1.442695
        %v2740 = vpow.pop %v2739
        %v2741 = vmul.f32 %v2521, 1.442695
        %v2742 = vpow.pop %v2741
        %v2743 = vmul.f32 %v2522, 1.442695
        %v2744 = vpow.pop %v2743
        %v2745 = vmul.f32 %v2523, 1.442695
        %v2746 = vpow.pop %v2745
        %v2747 = vmul.f32 %v2524, 1.442695
        %v2748 = vpow.pop %v2747
        %v2749 = vmul.f32 %v2525, 1.442695
        %v2750 = vpow.pop %v2749
        %v2751 = vmul.f32 %v2526, 1.442695
        %v2752 = vpow.pop %v2751
        %v2753 = vmul.f32 %v2527, 1.442695
        %v2754 = vpow.pop %v2753
        %v2755 = vmul.f32 %v2528, 1.442695
        %v2756 = vpow.pop %v2755
        %v2757 = vmul.f32 %v2529, 1.442695
        %v2758 = vpow.pop %v2757
        %v2759 = vmul.f32 %v2530, 1.442695
        %v2760 = vpow.pop %v2759
        %v2761 = vmul.f32 %v2531, 1.442695
        %v2762 = vpow.pop %v2761
        %v2763 = vmul.f32 %v2532, 1.442695
        %v2764 = vpow.pop %v2763
        %v2765 = vmul.f32 %v2533, 1.442695
        %v2766 = vpow.pop %v2765
        %v2767 = vmul.f32 %v2534, 1.442695
        %v2768 = vpow.pop %v2767
        %v2769 = vmul.f32 %v2535, 1.442695
        %v2770 = vpow.pop %v2769
        %v2771 = vmul.f32 %v2536, 1.442695
        %v2772 = vpow.pop %v2771
        %v2773 = vmul.f32 %v2537, 1.442695
        %v2774 = vpow.pop %v2773
        %v2775 = vmul.f32 %v2538, 1.442695
        %v2776 = vpow.pop %v2775
        %v2777 = vmul.f32 %v2539, 1.442695
        %v2778 = vpow.pop %v2777
        %v2779 = vmul.f32 %v2540, 1.442695
        %v2780 = vpow.pop %v2779
        %v2781 = vmul.f32 %v2541, 1.442695
        %v2782 = vpow.pop %v2781
        %v2783 = vmul.f32 %v2542, 1.442695
        %v2784 = vpow.pop %v2783
        %v2785 = vmul.f32 %v2543, 1.442695
        %v2786 = vpow.pop %v2785
        %v2787 = vmul.f32 %v2544, 1.442695
        %v2788 = vpow.pop %v2787
        %v2789 = vmul.f32 %v2545, 1.442695
        %v2790 = vpow.pop %v2789
        %v2791 = vmul.f32 %v2546, 1.442695
        %v2792 = vpow.pop %v2791
        %v2793 = vmul.f32 %v2547, 1.442695
        %v2794 = vpow.pop %v2793
        %v2795 = vmul.f32 %v2548, 1.442695
        %v2796 = vpow.pop %v2795
        %v2797 = vmul.f32 %v2549, 1.442695
        %v2798 = vpow.pop %v2797
        %v2799 = vmul.f32 %v2550, 1.442695
        %v2800 = vpow.pop %v2799
        %v2801 = vmul.f32 %v2551, 1.442695
        %v2802 = vpow.pop %v2801
        %v2803 = vmul.f32 %v2552, 1.442695
        %v2804 = vpow.pop %v2803
        %v2805 = vmul.f32 %v2553, 1.442695
        %v2806 = vpow.pop %v2805
        %v2807 = vmul.f32 %v2554, 1.442695
        %v2808 = vpow.pop %v2807
        %v2809 = vmul.f32 %v2555, 1.442695
        %v2810 = vpow.pop %v2809
        %v2811 = vmul.f32 %v2556, 1.442695
        %v2812 = vpow.pop %v2811
        %v2813 = vadd.f32 %v2558, %v2560
        %v2814 = vadd.f32 %v2813, %v2562
        %v2815 = vadd.f32 %v2814, %v2564
        %2816 = vadd.xlane.f32.xlu0 %v2815
        %v2817 = vpop.xlane.xlu0 %2816
        %v2818 = vadd.f32 %v2566, %v2568
        %v2819 = vadd.f32 %v2818, %v2570
        %v2820 = vadd.f32 %v2819, %v2572
        %2821 = vadd.xlane.f32.xlu0 %v2820
        %v2822 = vpop.xlane.xlu0 %2821
        %v2823 = vadd.f32 %v2574, %v2576
        %v2824 = vadd.f32 %v2823, %v2578
        %v2825 = vadd.f32 %v2824, %v2580
        %2826 = vadd.xlane.f32.xlu0 %v2825
        %v2827 = vpop.xlane.xlu0 %2826
        %v2828 = vadd.f32 %v2582, %v2584
        %v2829 = vadd.f32 %v2828, %v2586
        %v2830 = vadd.f32 %v2829, %v2588
        %2831 = vadd.xlane.f32.xlu0 %v2830
        %v2832 = vpop.xlane.xlu0 %2831
        %v2833 = vadd.f32 %v2590, %v2592
        %v2834 = vadd.f32 %v2833, %v2594
        %v2835 = vadd.f32 %v2834, %v2596
        %2836 = vadd.xlane.f32.xlu0 %v2835
        %v2837 = vpop.xlane.xlu0 %2836
        %v2838 = vadd.f32 %v2598, %v2600
        %v2839 = vadd.f32 %v2838, %v2602
        %v2840 = vadd.f32 %v2839, %v2604
        %2841 = vadd.xlane.f32.xlu0 %v2840
        %v2842 = vpop.xlane.xlu0 %2841
        %v2843 = vadd.f32 %v2606, %v2608
        %v2844 = vadd.f32 %v2843, %v2610
        %v2845 = vadd.f32 %v2844, %v2612
        %2846 = vadd.xlane.f32.xlu0 %v2845
        %v2847 = vpop.xlane.xlu0 %2846
        %v2848 = vadd.f32 %v2614, %v2616
        %v2849 = vadd.f32 %v2848, %v2618
        %v2850 = vadd.f32 %v2849, %v2620
        %2851 = vadd.xlane.f32.xlu0 %v2850
        %v2852 = vpop.xlane.xlu0 %2851
        %v2853 = vadd.f32 %v2622, %v2624
        %v2854 = vadd.f32 %v2853, %v2626
        %v2855 = vadd.f32 %v2854, %v2628
        %2856 = vadd.xlane.f32.xlu0 %v2855
        %v2857 = vpop.xlane.xlu0 %2856
        %v2858 = vadd.f32 %v2630, %v2632
        %v2859 = vadd.f32 %v2858, %v2634
        %v2860 = vadd.f32 %v2859, %v2636
        %2861 = vadd.xlane.f32.xlu0 %v2860
        %v2862 = vpop.xlane.xlu0 %2861
        %v2863 = vadd.f32 %v2638, %v2640
        %v2864 = vadd.f32 %v2863, %v2642
        %v2865 = vadd.f32 %v2864, %v2644
        %2866 = vadd.xlane.f32.xlu0 %v2865
        %v2867 = vpop.xlane.xlu0 %2866
        %v2868 = vadd.f32 %v2646, %v2648
        %v2869 = vadd.f32 %v2868, %v2650
        %v2870 = vadd.f32 %v2869, %v2652
        %2871 = vadd.xlane.f32.xlu0 %v2870
        %v2872 = vpop.xlane.xlu0 %2871
        %v2873 = vadd.f32 %v2654, %v2656
        %v2874 = vadd.f32 %v2873, %v2658
        %v2875 = vadd.f32 %v2874, %v2660
        %2876 = vadd.xlane.f32.xlu0 %v2875
        %v2877 = vpop.xlane.xlu0 %2876
        %v2878 = vadd.f32 %v2662, %v2664
        %v2879 = vadd.f32 %v2878, %v2666
        %v2880 = vadd.f32 %v2879, %v2668
        %2881 = vadd.xlane.f32.xlu0 %v2880
        %v2882 = vpop.xlane.xlu0 %2881
        %v2883 = vadd.f32 %v2670, %v2672
        %v2884 = vadd.f32 %v2883, %v2674
        %v2885 = vadd.f32 %v2884, %v2676
        %2886 = vadd.xlane.f32.xlu0 %v2885
        %v2887 = vpop.xlane.xlu0 %2886
        %v2888 = vadd.f32 %v2678, %v2680
        %v2889 = vadd.f32 %v2888, %v2682
        %v2890 = vadd.f32 %v2889, %v2684
        %2891 = vadd.xlane.f32.xlu0 %v2890
        %v2892 = vpop.xlane.xlu0 %2891
        %v2893 = vadd.f32 %v2686, %v2688
        %v2894 = vadd.f32 %v2893, %v2690
        %v2895 = vadd.f32 %v2894, %v2692
        %2896 = vadd.xlane.f32.xlu0 %v2895
        %v2897 = vpop.xlane.xlu0 %2896
        %v2898 = vadd.f32 %v2694, %v2696
        %v2899 = vadd.f32 %v2898, %v2698
        %v2900 = vadd.f32 %v2899, %v2700
        %2901 = vadd.xlane.f32.xlu0 %v2900
        %v2902 = vpop.xlane.xlu0 %2901
        %v2903 = vadd.f32 %v2702, %v2704
        %v2904 = vadd.f32 %v2903, %v2706
        %v2905 = vadd.f32 %v2904, %v2708
        %2906 = vadd.xlane.f32.xlu0 %v2905
        %v2907 = vpop.xlane.xlu0 %2906
        %v2908 = vadd.f32 %v2710, %v2712
        %v2909 = vadd.f32 %v2908, %v2714
        %v2910 = vadd.f32 %v2909, %v2716
        %2911 = vadd.xlane.f32.xlu0 %v2910
        %v2912 = vpop.xlane.xlu0 %2911
        %v2913 = vadd.f32 %v2718, %v2720
        %v2914 = vadd.f32 %v2913, %v2722
        %v2915 = vadd.f32 %v2914, %v2724
        %2916 = vadd.xlane.f32.xlu0 %v2915
        %v2917 = vpop.xlane.xlu0 %2916
        %v2918 = vadd.f32 %v2726, %v2728
        %v2919 = vadd.f32 %v2918, %v2730
        %v2920 = vadd.f32 %v2919, %v2732
        %2921 = vadd.xlane.f32.xlu0 %v2920
        %v2922 = vpop.xlane.xlu0 %2921
        %v2923 = vadd.f32 %v2734, %v2736
        %v2924 = vadd.f32 %v2923, %v2738
        %v2925 = vadd.f32 %v2924, %v2740
        %2926 = vadd.xlane.f32.xlu0 %v2925
        %v2927 = vpop.xlane.xlu0 %2926
        %v2928 = vadd.f32 %v2742, %v2744
        %v2929 = vadd.f32 %v2928, %v2746
        %v2930 = vadd.f32 %v2929, %v2748
        %2931 = vadd.xlane.f32.xlu0 %v2930
        %v2932 = vpop.xlane.xlu0 %2931
        %v2933 = vadd.f32 %v2750, %v2752
        %v2934 = vadd.f32 %v2933, %v2754
        %v2935 = vadd.f32 %v2934, %v2756
        %2936 = vadd.xlane.f32.xlu0 %v2935
        %v2937 = vpop.xlane.xlu0 %2936
        %v2938 = vadd.f32 %v2758, %v2760
        %v2939 = vadd.f32 %v2938, %v2762
        %v2940 = vadd.f32 %v2939, %v2764
        %2941 = vadd.xlane.f32.xlu0 %v2940
        %v2942 = vpop.xlane.xlu0 %2941
        %v2943 = vadd.f32 %v2766, %v2768
        %v2944 = vadd.f32 %v2943, %v2770
        %v2945 = vadd.f32 %v2944, %v2772
        %2946 = vadd.xlane.f32.xlu0 %v2945
        %v2947 = vpop.xlane.xlu0 %2946
        %v2948 = vadd.f32 %v2774, %v2776
        %v2949 = vadd.f32 %v2948, %v2778
        %v2950 = vadd.f32 %v2949, %v2780
        %2951 = vadd.xlane.f32.xlu0 %v2950
        %v2952 = vpop.xlane.xlu0 %2951
        %v2953 = vadd.f32 %v2782, %v2784
        %v2954 = vadd.f32 %v2953, %v2786
        %v2955 = vadd.f32 %v2954, %v2788
        %2956 = vadd.xlane.f32.xlu0 %v2955
        %v2957 = vpop.xlane.xlu0 %2956
        %v2958 = vadd.f32 %v2790, %v2792
        %v2959 = vadd.f32 %v2958, %v2794
        %v2960 = vadd.f32 %v2959, %v2796
        %2961 = vadd.xlane.f32.xlu0 %v2960
        %v2962 = vpop.xlane.xlu0 %2961
        %v2963 = vadd.f32 %v2798, %v2800
        %v2964 = vadd.f32 %v2963, %v2802
        %v2965 = vadd.f32 %v2964, %v2804
        %2966 = vadd.xlane.f32.xlu0 %v2965
        %v2967 = vpop.xlane.xlu0 %2966
        %v2968 = vadd.f32 %v2806, %v2808
        %v2969 = vadd.f32 %v2968, %v2810
        %v2970 = vadd.f32 %v2969, %v2812
        %2971 = vadd.xlane.f32.xlu0 %v2970
        %v2972 = vpop.xlane.xlu0 %2971
        %v2973 = vpack.c.bf16 %v2566, %v2558
        %v2974 = vpack.c.bf16 %v2568, %v2560
        %v2975 = vpack.c.bf16 %v2570, %v2562
        %v2976 = vpack.c.bf16 %v2572, %v2564
        %v2977 = vpack.c.bf16 %v2582, %v2574
        %v2978 = vpack.c.bf16 %v2584, %v2576
        %v2979 = vpack.c.bf16 %v2586, %v2578
        %v2980 = vpack.c.bf16 %v2588, %v2580
        %v2981 = vpack.c.bf16 %v2598, %v2590
        %v2982 = vpack.c.bf16 %v2600, %v2592
        %v2983 = vpack.c.bf16 %v2602, %v2594
        %v2984 = vpack.c.bf16 %v2604, %v2596
        %v2985 = vpack.c.bf16 %v2614, %v2606
        %v2986 = vpack.c.bf16 %v2616, %v2608
        %v2987 = vpack.c.bf16 %v2618, %v2610
        %v2988 = vpack.c.bf16 %v2620, %v2612
        %v2989 = vpack.c.bf16 %v2630, %v2622
        %v2990 = vpack.c.bf16 %v2632, %v2624
        %v2991 = vpack.c.bf16 %v2634, %v2626
        %v2992 = vpack.c.bf16 %v2636, %v2628
        %v2993 = vpack.c.bf16 %v2646, %v2638
        %v2994 = vpack.c.bf16 %v2648, %v2640
        %v2995 = vpack.c.bf16 %v2650, %v2642
        %v2996 = vpack.c.bf16 %v2652, %v2644
        %v2997 = vpack.c.bf16 %v2662, %v2654
        %v2998 = vpack.c.bf16 %v2664, %v2656
        %v2999 = vpack.c.bf16 %v2666, %v2658
        %v3000 = vpack.c.bf16 %v2668, %v2660
        %v3001 = vpack.c.bf16 %v2678, %v2670
        %v3002 = vpack.c.bf16 %v2680, %v2672
        %v3003 = vpack.c.bf16 %v2682, %v2674
        %v3004 = vpack.c.bf16 %v2684, %v2676
        %v3005 = vpack.c.bf16 %v2694, %v2686
        %v3006 = vpack.c.bf16 %v2696, %v2688
        %v3007 = vpack.c.bf16 %v2698, %v2690
        %v3008 = vpack.c.bf16 %v2700, %v2692
        %v3009 = vpack.c.bf16 %v2710, %v2702
        %v3010 = vpack.c.bf16 %v2712, %v2704
        %v3011 = vpack.c.bf16 %v2714, %v2706
        %v3012 = vpack.c.bf16 %v2716, %v2708
        %v3013 = vpack.c.bf16 %v2726, %v2718
        %v3014 = vpack.c.bf16 %v2728, %v2720
        %v3015 = vpack.c.bf16 %v2730, %v2722
        %v3016 = vpack.c.bf16 %v2732, %v2724
        %v3017 = vpack.c.bf16 %v2742, %v2734
        %v3018 = vpack.c.bf16 %v2744, %v2736
        %v3019 = vpack.c.bf16 %v2746, %v2738
        %v3020 = vpack.c.bf16 %v2748, %v2740
        %v3021 = vpack.c.bf16 %v2758, %v2750
        %v3022 = vpack.c.bf16 %v2760, %v2752
        %v3023 = vpack.c.bf16 %v2762, %v2754
        %v3024 = vpack.c.bf16 %v2764, %v2756
        %v3025 = vpack.c.bf16 %v2774, %v2766
        %v3026 = vpack.c.bf16 %v2776, %v2768
        %v3027 = vpack.c.bf16 %v2778, %v2770
        %v3028 = vpack.c.bf16 %v2780, %v2772
        %v3029 = vpack.c.bf16 %v2790, %v2782
        %v3030 = vpack.c.bf16 %v2792, %v2784
        %v3031 = vpack.c.bf16 %v2794, %v2786
        %v3032 = vpack.c.bf16 %v2796, %v2788
        %v3033 = vpack.c.bf16 %v2806, %v2798
        %v3034 = vpack.c.bf16 %v2808, %v2800
        %v3035 = vpack.c.bf16 %v2810, %v2802
        %v3036 = vpack.c.bf16 %v2812, %v2804
        %v3037 = vld [vmem:[#allocation4] sm:$0xf]
        %v3038 = vld [vmem:[#allocation4 + $0x4] sm:$0xf]
        %v3039 = vld [vmem:[#allocation4 + $0x8] sm:$0xf]
        %v3040 = vld [vmem:[#allocation4 + $0xc] sm:$0xf]
        %v3041 = vld [vmem:[#allocation4 + $0x10] sm:$0xf]
        %v3042 = vld [vmem:[#allocation4 + $0x14] sm:$0xf]
        %v3043 = vld [vmem:[#allocation4 + $0x18] sm:$0xf]
        %v3044 = vld [vmem:[#allocation4 + $0x1c] sm:$0xf]
        %v3045 = vld [vmem:[#allocation4 + $0x20] sm:$0xf]
        %v3046 = vld [vmem:[#allocation4 + $0x24] sm:$0xf]
        %v3047 = vld [vmem:[#allocation4 + $0x28] sm:$0xf]
        %v3048 = vld [vmem:[#allocation4 + $0x2c] sm:$0xf]
        %v3049 = vld [vmem:[#allocation4 + $0x30] sm:$0xf]
        %v3050 = vld [vmem:[#allocation4 + $0x34] sm:$0xf]
        %v3051 = vld [vmem:[#allocation4 + $0x38] sm:$0xf]
        %v3052 = vld [vmem:[#allocation4 + $0x3c] sm:$0xf]
        %v3053 = vld [vmem:[#allocation4 + $0x40] sm:$0xf]
        %v3054 = vld [vmem:[#allocation4 + $0x44] sm:$0xf]
        %v3055 = vld [vmem:[#allocation4 + $0x48] sm:$0xf]
        %v3056 = vld [vmem:[#allocation4 + $0x4c] sm:$0xf]
        %v3057 = vld [vmem:[#allocation4 + $0x50] sm:$0xf]
        %v3058 = vld [vmem:[#allocation4 + $0x54] sm:$0xf]
        %v3059 = vld [vmem:[#allocation4 + $0x58] sm:$0xf]
        %v3060 = vld [vmem:[#allocation4 + $0x5c] sm:$0xf]
        %v3061 = vld [vmem:[#allocation4 + $0x60] sm:$0xf]
        %v3062 = vld [vmem:[#allocation4 + $0x64] sm:$0xf]
        %v3063 = vld [vmem:[#allocation4 + $0x68] sm:$0xf]
        %v3064 = vld [vmem:[#allocation4 + $0x6c] sm:$0xf]
        %v3065 = vld [vmem:[#allocation4 + $0x70] sm:$0xf]
        %v3066 = vld [vmem:[#allocation4 + $0x74] sm:$0xf]
        %v3067 = vld [vmem:[#allocation4 + $0x78] sm:$0xf]
        %v3068 = vld [vmem:[#allocation4 + $0x7c] sm:$0xf]
        %v3069 = vld [vmem:[#allocation4 + $0x80] sm:$0xf]
        %v3070 = vld [vmem:[#allocation4 + $0x84] sm:$0xf]
        %v3071 = vld [vmem:[#allocation4 + $0x88] sm:$0xf]
        %v3072 = vld [vmem:[#allocation4 + $0x8c] sm:$0xf]
        %v3073 = vld [vmem:[#allocation4 + $0x90] sm:$0xf]
        %v3074 = vld [vmem:[#allocation4 + $0x94] sm:$0xf]
        %v3075 = vld [vmem:[#allocation4 + $0x98] sm:$0xf]
        %v3076 = vld [vmem:[#allocation4 + $0x9c] sm:$0xf]
        %v3077 = vld [vmem:[#allocation4 + $0xa0] sm:$0xf]
        %v3078 = vld [vmem:[#allocation4 + $0xa4] sm:$0xf]
        %v3079 = vld [vmem:[#allocation4 + $0xa8] sm:$0xf]
        %v3080 = vld [vmem:[#allocation4 + $0xac] sm:$0xf]
        %v3081 = vld [vmem:[#allocation4 + $0xb0] sm:$0xf]
        %v3082 = vld [vmem:[#allocation4 + $0xb4] sm:$0xf]
        %v3083 = vld [vmem:[#allocation4 + $0xb8] sm:$0xf]
        %v3084 = vld [vmem:[#allocation4 + $0xbc] sm:$0xf]
        %v3085 = vld [vmem:[#allocation4 + $0xc0] sm:$0xf]
        %v3086 = vld [vmem:[#allocation4 + $0xc4] sm:$0xf]
        %v3087 = vld [vmem:[#allocation4 + $0xc8] sm:$0xf]
        %v3088 = vld [vmem:[#allocation4 + $0xcc] sm:$0xf]
        %v3089 = vld [vmem:[#allocation4 + $0xd0] sm:$0xf]
        %v3090 = vld [vmem:[#allocation4 + $0xd4] sm:$0xf]
        %v3091 = vld [vmem:[#allocation4 + $0xd8] sm:$0xf]
        %v3092 = vld [vmem:[#allocation4 + $0xdc] sm:$0xf]
        %v3093 = vld [vmem:[#allocation4 + $0xe0] sm:$0xf]
        %v3094 = vld [vmem:[#allocation4 + $0xe4] sm:$0xf]
        %v3095 = vld [vmem:[#allocation4 + $0xe8] sm:$0xf]
        %v3096 = vld [vmem:[#allocation4 + $0xec] sm:$0xf]
        %v3097 = vld [vmem:[#allocation4 + $0xf0] sm:$0xf]
        %v3098 = vld [vmem:[#allocation4 + $0xf4] sm:$0xf]
        %v3099 = vld [vmem:[#allocation4 + $0xf8] sm:$0xf]
        %v3100 = vld [vmem:[#allocation4 + $0xfc] sm:$0xf]
        %v3165 = vunpack.c.l.b16 %v3037
        %v3166 = vunpack.c.l.b16 %v3038
        %v3167 = vunpack.c.l.b16 %v3039
        %v3168 = vunpack.c.l.b16 %v3040
        %v3169 = vunpack.c.l.b16 %v3041
        %v3170 = vunpack.c.l.b16 %v3042
        %v3171 = vunpack.c.l.b16 %v3043
        %v3172 = vunpack.c.l.b16 %v3044
        %v3173 = vunpack.c.l.b16 %v3045
        %v3174 = vunpack.c.l.b16 %v3046
        %v3175 = vunpack.c.l.b16 %v3047
        %v3176 = vunpack.c.l.b16 %v3048
        %v3177 = vunpack.c.l.b16 %v3049
        %v3178 = vunpack.c.l.b16 %v3050
        %v3179 = vunpack.c.l.b16 %v3051
        %v3180 = vunpack.c.l.b16 %v3052
        %v3181 = vunpack.c.l.b16 %v3053
        %v3182 = vunpack.c.l.b16 %v3054
        %v3183 = vunpack.c.l.b16 %v3055
        %v3184 = vunpack.c.l.b16 %v3056
        %v3185 = vunpack.c.l.b16 %v3057
        %v3186 = vunpack.c.l.b16 %v3058
        %v3187 = vunpack.c.l.b16 %v3059
        %v3188 = vunpack.c.l.b16 %v3060
        %v3189 = vunpack.c.l.b16 %v3061
        %v3190 = vunpack.c.l.b16 %v3062
        %v3191 = vunpack.c.l.b16 %v3063
        %v3192 = vunpack.c.l.b16 %v3064
        %v3193 = vunpack.c.l.b16 %v3065
        %v3194 = vunpack.c.l.b16 %v3066
        %v3195 = vunpack.c.l.b16 %v3067
        %v3196 = vunpack.c.l.b16 %v3068
        %v3197 = vunpack.c.l.b16 %v3069
        %v3198 = vunpack.c.l.b16 %v3070
        %v3199 = vunpack.c.l.b16 %v3071
        %v3200 = vunpack.c.l.b16 %v3072
        %v3201 = vunpack.c.l.b16 %v3073
        %v3202 = vunpack.c.l.b16 %v3074
        %v3203 = vunpack.c.l.b16 %v3075
        %v3204 = vunpack.c.l.b16 %v3076
        %v3205 = vunpack.c.l.b16 %v3077
        %v3206 = vunpack.c.l.b16 %v3078
        %v3207 = vunpack.c.l.b16 %v3079
        %v3208 = vunpack.c.l.b16 %v3080
        %v3209 = vunpack.c.l.b16 %v3081
        %v3210 = vunpack.c.l.b16 %v3082
        %v3211 = vunpack.c.l.b16 %v3083
        %v3212 = vunpack.c.l.b16 %v3084
        %v3213 = vunpack.c.l.b16 %v3085
        %v3214 = vunpack.c.l.b16 %v3086
        %v3215 = vunpack.c.l.b16 %v3087
        %v3216 = vunpack.c.l.b16 %v3088
        %v3217 = vunpack.c.l.b16 %v3089
        %v3218 = vunpack.c.l.b16 %v3090
        %v3219 = vunpack.c.l.b16 %v3091
        %v3220 = vunpack.c.l.b16 %v3092
        %v3221 = vunpack.c.l.b16 %v3093
        %v3222 = vunpack.c.l.b16 %v3094
        %v3223 = vunpack.c.l.b16 %v3095
        %v3224 = vunpack.c.l.b16 %v3096
        %v3225 = vunpack.c.l.b16 %v3097
        %v3226 = vunpack.c.l.b16 %v3098
        %v3227 = vunpack.c.l.b16 %v3099
        %v3228 = vunpack.c.l.b16 %v3100
        %v3229 = vpack.c.b16 %v3166, %v3165
        %v3230 = vpack.c.b16 %v3168, %v3167
        %v3231 = vpack.c.b16 %v3170, %v3169
        %v3232 = vpack.c.b16 %v3172, %v3171
        %v3233 = vpack.c.b16 %v3174, %v3173
        %v3234 = vpack.c.b16 %v3176, %v3175
        %v3235 = vpack.c.b16 %v3178, %v3177
        %v3236 = vpack.c.b16 %v3180, %v3179
        %v3237 = vpack.c.b16 %v3182, %v3181
        %v3238 = vpack.c.b16 %v3184, %v3183
        %v3239 = vpack.c.b16 %v3186, %v3185
        %v3240 = vpack.c.b16 %v3188, %v3187
        %v3241 = vpack.c.b16 %v3190, %v3189
        %v3242 = vpack.c.b16 %v3192, %v3191
        %v3243 = vpack.c.b16 %v3194, %v3193
        %v3244 = vpack.c.b16 %v3196, %v3195
        %v3245 = vpack.c.b16 %v3198, %v3197
        %v3246 = vpack.c.b16 %v3200, %v3199
        %v3247 = vpack.c.b16 %v3202, %v3201
        %v3248 = vpack.c.b16 %v3204, %v3203
        %v3249 = vpack.c.b16 %v3206, %v3205
        %v3250 = vpack.c.b16 %v3208, %v3207
        %v3251 = vpack.c.b16 %v3210, %v3209
        %v3252 = vpack.c.b16 %v3212, %v3211
        %v3253 = vpack.c.b16 %v3214, %v3213
        %v3254 = vpack.c.b16 %v3216, %v3215
        %v3255 = vpack.c.b16 %v3218, %v3217
        %v3256 = vpack.c.b16 %v3220, %v3219
        %v3257 = vpack.c.b16 %v3222, %v3221
        %v3258 = vpack.c.b16 %v3224, %v3223
        %v3259 = vpack.c.b16 %v3226, %v3225
        %v3260 = vpack.c.b16 %v3228, %v3227
        %3293 = vmatpush.bf16.msra.mxu0 %v3236
        %3294 = vmatpush.bf16.msra.mxu0 %v3235
        %3295 = vmatpush.bf16.msra.mxu0 %v3234
        %3296 = vmatpush.bf16.msra.mxu0 %v3233
        %3297 = vmatpush.bf16.msra.mxu0 %v3232
        %3298 = vmatpush.bf16.msra.mxu0 %v3231
        %3299 = vmatpush.bf16.msra.mxu0 %v3230
        %3300 = vmatpush.bf16.msra.mxu0 %v3229
        %3301 = vmatmul.bf16.gmra.mxu0 %v2973
        %v3302 = vpop.f32.mrf.mxu0
        %v3303 = vadd.f32 0.0, %v3302
        %v3304 = vpop.f32.mrf.mxu0
        %v3305 = vadd.f32 0.0, %v3304
        %3306 = vmatmul.bf16.gmra.mxu0 %v2977
        %v3307 = vpop.f32.mrf.mxu0
        %v3308 = vadd.f32 0.0, %v3307
        %v3309 = vpop.f32.mrf.mxu0
        %v3310 = vadd.f32 0.0, %v3309
        %3311 = vmatmul.bf16.gmra.mxu0 %v2981
        %v3312 = vpop.f32.mrf.mxu0
        %v3313 = vadd.f32 0.0, %v3312
        %v3314 = vpop.f32.mrf.mxu0
        %v3315 = vadd.f32 0.0, %v3314
        %3316 = vmatmul.bf16.gmra.mxu0 %v2985
        %v3317 = vpop.f32.mrf.mxu0
        %v3318 = vadd.f32 0.0, %v3317
        %v3319 = vpop.f32.mrf.mxu0
        %v3320 = vadd.f32 0.0, %v3319
        %3321 = vmatmul.bf16.gmra.mxu0 %v2989
        %v3322 = vpop.f32.mrf.mxu0
        %v3323 = vadd.f32 0.0, %v3322
        %v3324 = vpop.f32.mrf.mxu0
        %v3325 = vadd.f32 0.0, %v3324
        %3326 = vmatmul.bf16.gmra.mxu0 %v2993
        %v3327 = vpop.f32.mrf.mxu0
        %v3328 = vadd.f32 0.0, %v3327
        %v3329 = vpop.f32.mrf.mxu0
        %v3330 = vadd.f32 0.0, %v3329
        %3331 = vmatmul.bf16.gmra.mxu0 %v2997
        %v3332 = vpop.f32.mrf.mxu0
        %v3333 = vadd.f32 0.0, %v3332
        %v3334 = vpop.f32.mrf.mxu0
        %v3335 = vadd.f32 0.0, %v3334
        %3336 = vmatmul.bf16.gmra.mxu0 %v3001
        %v3337 = vpop.f32.mrf.mxu0
        %v3338 = vadd.f32 0.0, %v3337
        %v3339 = vpop.f32.mrf.mxu0
        %v3340 = vadd.f32 0.0, %v3339
        %3341 = vmatmul.bf16.gmra.mxu0 %v3005
        %v3342 = vpop.f32.mrf.mxu0
        %v3343 = vadd.f32 0.0, %v3342
        %v3344 = vpop.f32.mrf.mxu0
        %v3345 = vadd.f32 0.0, %v3344
        %3346 = vmatmul.bf16.gmra.mxu0 %v3009
        %v3347 = vpop.f32.mrf.mxu0
        %v3348 = vadd.f32 0.0, %v3347
        %v3349 = vpop.f32.mrf.mxu0
        %v3350 = vadd.f32 0.0, %v3349
        %3351 = vmatmul.bf16.gmra.mxu0 %v3013
        %v3352 = vpop.f32.mrf.mxu0
        %v3353 = vadd.f32 0.0, %v3352
        %v3354 = vpop.f32.mrf.mxu0
        %v3355 = vadd.f32 0.0, %v3354
        %3356 = vmatmul.bf16.gmra.mxu0 %v3017
        %v3357 = vpop.f32.mrf.mxu0
        %v3358 = vadd.f32 0.0, %v3357
        %v3359 = vpop.f32.mrf.mxu0
        %v3360 = vadd.f32 0.0, %v3359
        %3361 = vmatmul.bf16.gmra.mxu0 %v3021
        %v3362 = vpop.f32.mrf.mxu0
        %v3363 = vadd.f32 0.0, %v3362
        %v3364 = vpop.f32.mrf.mxu0
        %v3365 = vadd.f32 0.0, %v3364
        %3366 = vmatmul.bf16.gmra.mxu0 %v3025
        %v3367 = vpop.f32.mrf.mxu0
        %v3368 = vadd.f32 0.0, %v3367
        %v3369 = vpop.f32.mrf.mxu0
        %v3370 = vadd.f32 0.0, %v3369
        %3371 = vmatmul.bf16.gmra.mxu0 %v3029
        %v3372 = vpop.f32.mrf.mxu0
        %v3373 = vadd.f32 0.0, %v3372
        %v3374 = vpop.f32.mrf.mxu0
        %v3375 = vadd.f32 0.0, %v3374
        %3376 = vmatmul.bf16.gmra.mxu0 %v3033
        %v3377 = vpop.f32.mrf.mxu0
        %v3378 = vadd.f32 0.0, %v3377
        %v3379 = vpop.f32.mrf.mxu0
        %v3380 = vadd.f32 0.0, %v3379
        %3381 = vdwg.mxu0
        %3382 = vmatpush.bf16.msra.mxu0 %v3244
        %3383 = vmatpush.bf16.msra.mxu0 %v3243
        %3384 = vmatpush.bf16.msra.mxu0 %v3242
        %3385 = vmatpush.bf16.msra.mxu0 %v3241
        %3386 = vmatpush.bf16.msra.mxu0 %v3240
        %3387 = vmatpush.bf16.msra.mxu0 %v3239
        %3388 = vmatpush.bf16.msra.mxu0 %v3238
        %3389 = vmatpush.bf16.msra.mxu0 %v3237
        %3390 = vmatmul.bf16.gmra.mxu0 %v2974
        %v3391 = vpop.f32.mrf.mxu0
        %v3392 = vadd.f32 %v3303, %v3391
        %v3393 = vpop.f32.mrf.mxu0
        %v3394 = vadd.f32 %v3305, %v3393
        %3395 = vmatmul.bf16.gmra.mxu0 %v2978
        %v3396 = vpop.f32.mrf.mxu0
        %v3397 = vadd.f32 %v3308, %v3396
        %v3398 = vpop.f32.mrf.mxu0
        %v3399 = vadd.f32 %v3310, %v3398
        %3400 = vmatmul.bf16.gmra.mxu0 %v2982
        %v3401 = vpop.f32.mrf.mxu0
        %v3402 = vadd.f32 %v3313, %v3401
        %v3403 = vpop.f32.mrf.mxu0
        %v3404 = vadd.f32 %v3315, %v3403
        %3405 = vmatmul.bf16.gmra.mxu0 %v2986
        %v3406 = vpop.f32.mrf.mxu0
        %v3407 = vadd.f32 %v3318, %v3406
        %v3408 = vpop.f32.mrf.mxu0
        %v3409 = vadd.f32 %v3320, %v3408
        %3410 = vmatmul.bf16.gmra.mxu0 %v2990
        %v3411 = vpop.f32.mrf.mxu0
        %v3412 = vadd.f32 %v3323, %v3411
        %v3413 = vpop.f32.mrf.mxu0
        %v3414 = vadd.f32 %v3325, %v3413
        %3415 = vmatmul.bf16.gmra.mxu0 %v2994
        %v3416 = vpop.f32.mrf.mxu0
        %v3417 = vadd.f32 %v3328, %v3416
        %v3418 = vpop.f32.mrf.mxu0
        %v3419 = vadd.f32 %v3330, %v3418
        %3420 = vmatmul.bf16.gmra.mxu0 %v2998
        %v3421 = vpop.f32.mrf.mxu0
        %v3422 = vadd.f32 %v3333, %v3421
        %v3423 = vpop.f32.mrf.mxu0
        %v3424 = vadd.f32 %v3335, %v3423
        %3425 = vmatmul.bf16.gmra.mxu0 %v3002
        %v3426 = vpop.f32.mrf.mxu0
        %v3427 = vadd.f32 %v3338, %v3426
        %v3428 = vpop.f32.mrf.mxu0
        %v3429 = vadd.f32 %v3340, %v3428
        %3430 = vmatmul.bf16.gmra.mxu0 %v3006
        %v3431 = vpop.f32.mrf.mxu0
        %v3432 = vadd.f32 %v3343, %v3431
        %v3433 = vpop.f32.mrf.mxu0
        %v3434 = vadd.f32 %v3345, %v3433
        %3435 = vmatmul.bf16.gmra.mxu0 %v3010
        %v3436 = vpop.f32.mrf.mxu0
        %v3437 = vadd.f32 %v3348, %v3436
        %v3438 = vpop.f32.mrf.mxu0
        %v3439 = vadd.f32 %v3350, %v3438
        %3440 = vmatmul.bf16.gmra.mxu0 %v3014
        %v3441 = vpop.f32.mrf.mxu0
        %v3442 = vadd.f32 %v3353, %v3441
        %v3443 = vpop.f32.mrf.mxu0
        %v3444 = vadd.f32 %v3355, %v3443
        %3445 = vmatmul.bf16.gmra.mxu0 %v3018
        %v3446 = vpop.f32.mrf.mxu0
        %v3447 = vadd.f32 %v3358, %v3446
        %v3448 = vpop.f32.mrf.mxu0
        %v3449 = vadd.f32 %v3360, %v3448
        %3450 = vmatmul.bf16.gmra.mxu0 %v3022
        %v3451 = vpop.f32.mrf.mxu0
        %v3452 = vadd.f32 %v3363, %v3451
        %v3453 = vpop.f32.mrf.mxu0
        %v3454 = vadd.f32 %v3365, %v3453
        %3455 = vmatmul.bf16.gmra.mxu0 %v3026
        %v3456 = vpop.f32.mrf.mxu0
        %v3457 = vadd.f32 %v3368, %v3456
        %v3458 = vpop.f32.mrf.mxu0
        %v3459 = vadd.f32 %v3370, %v3458
        %3460 = vmatmul.bf16.gmra.mxu0 %v3030
        %v3461 = vpop.f32.mrf.mxu0
        %v3462 = vadd.f32 %v3373, %v3461
        %v3463 = vpop.f32.mrf.mxu0
        %v3464 = vadd.f32 %v3375, %v3463
        %3465 = vmatmul.bf16.gmra.mxu0 %v3034
        %v3466 = vpop.f32.mrf.mxu0
        %v3467 = vadd.f32 %v3378, %v3466
        %v3468 = vpop.f32.mrf.mxu0
        %v3469 = vadd.f32 %v3380, %v3468
        %3470 = vdwg.mxu0
        %3471 = vmatpush.bf16.msra.mxu0 %v3252
        %3472 = vmatpush.bf16.msra.mxu0 %v3251
        %3473 = vmatpush.bf16.msra.mxu0 %v3250
        %3474 = vmatpush.bf16.msra.mxu0 %v3249
        %3475 = vmatpush.bf16.msra.mxu0 %v3248
        %3476 = vmatpush.bf16.msra.mxu0 %v3247
        %3477 = vmatpush.bf16.msra.mxu0 %v3246
        %3478 = vmatpush.bf16.msra.mxu0 %v3245
        %3479 = vmatmul.bf16.gmra.mxu0 %v2975
        %v3480 = vpop.f32.mrf.mxu0
        %v3481 = vadd.f32 %v3392, %v3480
        %v3482 = vpop.f32.mrf.mxu0
        %v3483 = vadd.f32 %v3394, %v3482
        %3484 = vmatmul.bf16.gmra.mxu0 %v2979
        %v3485 = vpop.f32.mrf.mxu0
        %v3486 = vadd.f32 %v3397, %v3485
        %v3487 = vpop.f32.mrf.mxu0
        %v3488 = vadd.f32 %v3399, %v3487
        %3489 = vmatmul.bf16.gmra.mxu0 %v2983
        %v3490 = vpop.f32.mrf.mxu0
        %v3491 = vadd.f32 %v3402, %v3490
        %v3492 = vpop.f32.mrf.mxu0
        %v3493 = vadd.f32 %v3404, %v3492
        %3494 = vmatmul.bf16.gmra.mxu0 %v2987
        %v3495 = vpop.f32.mrf.mxu0
        %v3496 = vadd.f32 %v3407, %v3495
        %v3497 = vpop.f32.mrf.mxu0
        %v3498 = vadd.f32 %v3409, %v3497
        %3499 = vmatmul.bf16.gmra.mxu0 %v2991
        %v3500 = vpop.f32.mrf.mxu0
        %v3501 = vadd.f32 %v3412, %v3500
        %v3502 = vpop.f32.mrf.mxu0
        %v3503 = vadd.f32 %v3414, %v3502
        %3504 = vmatmul.bf16.gmra.mxu0 %v2995
        %v3505 = vpop.f32.mrf.mxu0
        %v3506 = vadd.f32 %v3417, %v3505
        %v3507 = vpop.f32.mrf.mxu0
        %v3508 = vadd.f32 %v3419, %v3507
        %3509 = vmatmul.bf16.gmra.mxu0 %v2999
        %v3510 = vpop.f32.mrf.mxu0
        %v3511 = vadd.f32 %v3422, %v3510
        %v3512 = vpop.f32.mrf.mxu0
        %v3513 = vadd.f32 %v3424, %v3512
        %3514 = vmatmul.bf16.gmra.mxu0 %v3003
        %v3515 = vpop.f32.mrf.mxu0
        %v3516 = vadd.f32 %v3427, %v3515
        %v3517 = vpop.f32.mrf.mxu0
        %v3518 = vadd.f32 %v3429, %v3517
        %3519 = vmatmul.bf16.gmra.mxu0 %v3007
        %v3520 = vpop.f32.mrf.mxu0
        %v3521 = vadd.f32 %v3432, %v3520
        %v3522 = vpop.f32.mrf.mxu0
        %v3523 = vadd.f32 %v3434, %v3522
        %3524 = vmatmul.bf16.gmra.mxu0 %v3011
        %v3525 = vpop.f32.mrf.mxu0
        %v3526 = vadd.f32 %v3437, %v3525
        %v3527 = vpop.f32.mrf.mxu0
        %v3528 = vadd.f32 %v3439, %v3527
        %3529 = vmatmul.bf16.gmra.mxu0 %v3015
        %v3530 = vpop.f32.mrf.mxu0
        %v3531 = vadd.f32 %v3442, %v3530
        %v3532 = vpop.f32.mrf.mxu0
        %v3533 = vadd.f32 %v3444, %v3532
        %3534 = vmatmul.bf16.gmra.mxu0 %v3019
        %v3535 = vpop.f32.mrf.mxu0
        %v3536 = vadd.f32 %v3447, %v3535
        %v3537 = vpop.f32.mrf.mxu0
        %v3538 = vadd.f32 %v3449, %v3537
        %3539 = vmatmul.bf16.gmra.mxu0 %v3023
        %v3540 = vpop.f32.mrf.mxu0
        %v3541 = vadd.f32 %v3452, %v3540
        %v3542 = vpop.f32.mrf.mxu0
        %v3543 = vadd.f32 %v3454, %v3542
        %3544 = vmatmul.bf16.gmra.mxu0 %v3027
        %v3545 = vpop.f32.mrf.mxu0
        %v3546 = vadd.f32 %v3457, %v3545
        %v3547 = vpop.f32.mrf.mxu0
        %v3548 = vadd.f32 %v3459, %v3547
        %3549 = vmatmul.bf16.gmra.mxu0 %v3031
        %v3550 = vpop.f32.mrf.mxu0
        %v3551 = vadd.f32 %v3462, %v3550
        %v3552 = vpop.f32.mrf.mxu0
        %v3553 = vadd.f32 %v3464, %v3552
        %3554 = vmatmul.bf16.gmra.mxu0 %v3035
        %v3555 = vpop.f32.mrf.mxu0
        %v3556 = vadd.f32 %v3467, %v3555
        %v3557 = vpop.f32.mrf.mxu0
        %v3558 = vadd.f32 %v3469, %v3557
        %3559 = vdwg.mxu0
        %3560 = vmatpush.bf16.msra.mxu0 %v3260
        %3561 = vmatpush.bf16.msra.mxu0 %v3259
        %3562 = vmatpush.bf16.msra.mxu0 %v3258
        %3563 = vmatpush.bf16.msra.mxu0 %v3257
        %3564 = vmatpush.bf16.msra.mxu0 %v3256
        %3565 = vmatpush.bf16.msra.mxu0 %v3255
        %3566 = vmatpush.bf16.msra.mxu0 %v3254
        %3567 = vmatpush.bf16.msra.mxu0 %v3253
        %3568 = vmatmul.bf16.gmra.mxu0 %v2976
        %v3569 = vpop.f32.mrf.mxu0
        %v3570 = vadd.f32 %v3481, %v3569
        %v3571 = vpop.f32.mrf.mxu0
        %v3572 = vadd.f32 %v3483, %v3571
        %3573 = vmatmul.bf16.gmra.mxu0 %v2980
        %v3574 = vpop.f32.mrf.mxu0
        %v3575 = vadd.f32 %v3486, %v3574
        %v3576 = vpop.f32.mrf.mxu0
        %v3577 = vadd.f32 %v3488, %v3576
        %3578 = vmatmul.bf16.gmra.mxu0 %v2984
        %v3579 = vpop.f32.mrf.mxu0
        %v3580 = vadd.f32 %v3491, %v3579
        %v3581 = vpop.f32.mrf.mxu0
        %v3582 = vadd.f32 %v3493, %v3581
        %3583 = vmatmul.bf16.gmra.mxu0 %v2988
        %v3584 = vpop.f32.mrf.mxu0
        %v3585 = vadd.f32 %v3496, %v3584
        %v3586 = vpop.f32.mrf.mxu0
        %v3587 = vadd.f32 %v3498, %v3586
        %3588 = vmatmul.bf16.gmra.mxu0 %v2992
        %v3589 = vpop.f32.mrf.mxu0
        %v3590 = vadd.f32 %v3501, %v3589
        %v3591 = vpop.f32.mrf.mxu0
        %v3592 = vadd.f32 %v3503, %v3591
        %3593 = vmatmul.bf16.gmra.mxu0 %v2996
        %v3594 = vpop.f32.mrf.mxu0
        %v3595 = vadd.f32 %v3506, %v3594
        %v3596 = vpop.f32.mrf.mxu0
        %v3597 = vadd.f32 %v3508, %v3596
        %3598 = vmatmul.bf16.gmra.mxu0 %v3000
        %v3599 = vpop.f32.mrf.mxu0
        %v3600 = vadd.f32 %v3511, %v3599
        %v3601 = vpop.f32.mrf.mxu0
        %v3602 = vadd.f32 %v3513, %v3601
        %3603 = vmatmul.bf16.gmra.mxu0 %v3004
        %v3604 = vpop.f32.mrf.mxu0
        %v3605 = vadd.f32 %v3516, %v3604
        %v3606 = vpop.f32.mrf.mxu0
        %v3607 = vadd.f32 %v3518, %v3606
        %3608 = vmatmul.bf16.gmra.mxu0 %v3008
        %v3609 = vpop.f32.mrf.mxu0
        %v3610 = vadd.f32 %v3521, %v3609
        %v3611 = vpop.f32.mrf.mxu0
        %v3612 = vadd.f32 %v3523, %v3611
        %3613 = vmatmul.bf16.gmra.mxu0 %v3012
        %v3614 = vpop.f32.mrf.mxu0
        %v3615 = vadd.f32 %v3526, %v3614
        %v3616 = vpop.f32.mrf.mxu0
        %v3617 = vadd.f32 %v3528, %v3616
        %3618 = vmatmul.bf16.gmra.mxu0 %v3016
        %v3619 = vpop.f32.mrf.mxu0
        %v3620 = vadd.f32 %v3531, %v3619
        %v3621 = vpop.f32.mrf.mxu0
        %v3622 = vadd.f32 %v3533, %v3621
        %3623 = vmatmul.bf16.gmra.mxu0 %v3020
        %v3624 = vpop.f32.mrf.mxu0
        %v3625 = vadd.f32 %v3536, %v3624
        %v3626 = vpop.f32.mrf.mxu0
        %v3627 = vadd.f32 %v3538, %v3626
        %3628 = vmatmul.bf16.gmra.mxu0 %v3024
        %v3629 = vpop.f32.mrf.mxu0
        %v3630 = vadd.f32 %v3541, %v3629
        %v3631 = vpop.f32.mrf.mxu0
        %v3632 = vadd.f32 %v3543, %v3631
        %3633 = vmatmul.bf16.gmra.mxu0 %v3028
        %v3634 = vpop.f32.mrf.mxu0
        %v3635 = vadd.f32 %v3546, %v3634
        %v3636 = vpop.f32.mrf.mxu0
        %v3637 = vadd.f32 %v3548, %v3636
        %3638 = vmatmul.bf16.gmra.mxu0 %v3032
        %v3639 = vpop.f32.mrf.mxu0
        %v3640 = vadd.f32 %v3551, %v3639
        %v3641 = vpop.f32.mrf.mxu0
        %v3642 = vadd.f32 %v3553, %v3641
        %3643 = vmatmul.bf16.gmra.mxu0 %v3036
        %v3644 = vpop.f32.mrf.mxu0
        %v3645 = vadd.f32 %v3556, %v3644
        %v3646 = vpop.f32.mrf.mxu0
        %v3647 = vadd.f32 %v3558, %v3646
        %3648 = vdwg.mxu0
        %v3649 = vrcp.pop %v2817
        %v3650 = vrcp.pop %v2822
        %v3651 = vrcp.pop %v2827
        %v3652 = vrcp.pop %v2832
        %v3653 = vrcp.pop %v2837
        %v3654 = vrcp.pop %v2842
        %v3655 = vrcp.pop %v2847
        %v3656 = vrcp.pop %v2852
        %v3657 = vrcp.pop %v2857
        %v3658 = vrcp.pop %v2862
        %v3659 = vrcp.pop %v2867
        %v3660 = vrcp.pop %v2872
        %v3661 = vrcp.pop %v2877
        %v3662 = vrcp.pop %v2882
        %v3663 = vrcp.pop %v2887
        %v3664 = vrcp.pop %v2892
        %v3665 = vrcp.pop %v2897
        %v3666 = vrcp.pop %v2902
        %v3667 = vrcp.pop %v2907
        %v3668 = vrcp.pop %v2912
        %v3669 = vrcp.pop %v2917
        %v3670 = vrcp.pop %v2922
        %v3671 = vrcp.pop %v2927
        %v3672 = vrcp.pop %v2932
        %v3673 = vrcp.pop %v2937
        %v3674 = vrcp.pop %v2942
        %v3675 = vrcp.pop %v2947
        %v3676 = vrcp.pop %v2952
        %v3677 = vrcp.pop %v2957
        %v3678 = vrcp.pop %v2962
        %v3679 = vrcp.pop %v2967
        %v3680 = vrcp.pop %v2972
        %v3681 = vmul.f32 %v3570, %v3649
        %v3682 = vmul.f32 %v3572, %v3650
        %v3683 = vmul.f32 %v3575, %v3651
        %v3684 = vmul.f32 %v3577, %v3652
        %v3685 = vmul.f32 %v3580, %v3653
        %v3686 = vmul.f32 %v3582, %v3654
        %v3687 = vmul.f32 %v3585, %v3655
        %v3688 = vmul.f32 %v3587, %v3656
        %v3689 = vmul.f32 %v3590, %v3657
        %v3690 = vmul.f32 %v3592, %v3658
        %v3691 = vmul.f32 %v3595, %v3659
        %v3692 = vmul.f32 %v3597, %v3660
        %v3693 = vmul.f32 %v3600, %v3661
        %v3694 = vmul.f32 %v3602, %v3662
        %v3695 = vmul.f32 %v3605, %v3663
        %v3696 = vmul.f32 %v3607, %v3664
        %v3697 = vmul.f32 %v3610, %v3665
        %v3698 = vmul.f32 %v3612, %v3666
        %v3699 = vmul.f32 %v3615, %v3667
        %v3700 = vmul.f32 %v3617, %v3668
        %v3701 = vmul.f32 %v3620, %v3669
        %v3702 = vmul.f32 %v3622, %v3670
        %v3703 = vmul.f32 %v3625, %v3671
        %v3704 = vmul.f32 %v3627, %v3672
        %v3705 = vmul.f32 %v3630, %v3673
        %v3706 = vmul.f32 %v3632, %v3674
        %v3707 = vmul.f32 %v3635, %v3675
        %v3708 = vmul.f32 %v3637, %v3676
        %v3709 = vmul.f32 %v3640, %v3677
        %v3710 = vmul.f32 %v3642, %v3678
        %v3711 = vmul.f32 %v3645, %v3679
        %v3712 = vmul.f32 %v3647, %v3680
        %v3713 = vld [vmem:[%s3] sm:$0x1]
        %v3715 = vperm.slane %v3713, 0
        %v3717 = vadd.f32 %v3681, %v3715
        %v3718 = vadd.f32 %v3682, %v3715
        %v3719 = vadd.f32 %v3683, %v3715
        %v3720 = vadd.f32 %v3684, %v3715
        %v3721 = vadd.f32 %v3685, %v3715
        %v3722 = vadd.f32 %v3686, %v3715
        %v3723 = vadd.f32 %v3687, %v3715
        %v3724 = vadd.f32 %v3688, %v3715
        %v3725 = vadd.f32 %v3689, %v3715
        %v3726 = vadd.f32 %v3690, %v3715
        %v3727 = vadd.f32 %v3691, %v3715
        %v3728 = vadd.f32 %v3692, %v3715
        %v3729 = vadd.f32 %v3693, %v3715
        %v3730 = vadd.f32 %v3694, %v3715
        %v3731 = vadd.f32 %v3695, %v3715
        %v3732 = vadd.f32 %v3696, %v3715
        %v3733 = vadd.f32 %v3697, %v3715
        %v3734 = vadd.f32 %v3698, %v3715
        %v3735 = vadd.f32 %v3699, %v3715
        %v3736 = vadd.f32 %v3700, %v3715
        %v3737 = vadd.f32 %v3701, %v3715
        %v3738 = vadd.f32 %v3702, %v3715
        %v3739 = vadd.f32 %v3703, %v3715
        %v3740 = vadd.f32 %v3704, %v3715
        %v3741 = vadd.f32 %v3705, %v3715
        %v3742 = vadd.f32 %v3706, %v3715
        %v3743 = vadd.f32 %v3707, %v3715
        %v3744 = vadd.f32 %v3708, %v3715
        %v3745 = vadd.f32 %v3709, %v3715
        %v3746 = vadd.f32 %v3710, %v3715
        %v3747 = vadd.f32 %v3711, %v3715
        %v3748 = vadd.f32 %v3712, %v3715
        %v3749 = vld [vmem:[#allocation11] sm:$0xff]
        %v3750 = vld [vmem:[#allocation11 + $0x8] sm:$0xff]
        %v3751 = vld [vmem:[#allocation11 + $0x10] sm:$0xff]
        %v3752 = vld [vmem:[#allocation11 + $0x18] sm:$0xff]
        %v3753 = vld [vmem:[#allocation11 + $0x20] sm:$0xff]
        %v3754 = vld [vmem:[#allocation11 + $0x28] sm:$0xff]
        %v3755 = vld [vmem:[#allocation11 + $0x30] sm:$0xff]
        %v3756 = vld [vmem:[#allocation11 + $0x38] sm:$0xff]
        %v3757 = vld [vmem:[#allocation11 + $0x40] sm:$0xff]
        %v3758 = vld [vmem:[#allocation11 + $0x48] sm:$0xff]
        %v3759 = vld [vmem:[#allocation11 + $0x50] sm:$0xff]
        %v3760 = vld [vmem:[#allocation11 + $0x58] sm:$0xff]
        %v3761 = vld [vmem:[#allocation11 + $0x60] sm:$0xff]
        %v3762 = vld [vmem:[#allocation11 + $0x68] sm:$0xff]
        %v3763 = vld [vmem:[#allocation11 + $0x70] sm:$0xff]
        %v3764 = vld [vmem:[#allocation11 + $0x78] sm:$0xff]
        %v3765 = vld [vmem:[%s5] sm:$0x1]
        %v3767 = vperm.slane %v3765, 0
        %3769 = vmatpush.msra.mxu0 %v3764
        %3770 = vmatpush.msra.mxu0 %v3763
        %3771 = vmatpush.msra.mxu0 %v3762
        %3772 = vmatpush.msra.mxu0 %v3761
        %3773 = vmatpush.msra.mxu0 %v3760
        %3774 = vmatpush.msra.mxu0 %v3759
        %3775 = vmatpush.msra.mxu0 %v3758
        %3776 = vmatpush.msra.mxu0 %v3757
        %3777 = vmatpush.msra.mxu0 %v3756
        %3778 = vmatpush.msra.mxu0 %v3755
        %3779 = vmatpush.msra.mxu0 %v3754
        %3780 = vmatpush.msra.mxu0 %v3753
        %3781 = vmatpush.msra.mxu0 %v3752
        %3782 = vmatpush.msra.mxu0 %v3751
        %3783 = vmatpush.msra.mxu0 %v3750
        %3784 = vmatpush.msra.mxu0 %v3749
        %3785 = vmatmul.f32.gmra.mxu0 %v3717
        %v3786 = vpop.f32.mrf.mxu0
        %v3787 = vadd.f32 %v3767, %v3786
        %3788 = vmatmul.f32.gmra.mxu0 %v3718
        %v3789 = vpop.f32.mrf.mxu0
        %v3790 = vadd.f32 %v3767, %v3789
        %3791 = vmatmul.f32.gmra.mxu0 %v3719
        %v3792 = vpop.f32.mrf.mxu0
        %v3793 = vadd.f32 %v3767, %v3792
        %3794 = vmatmul.f32.gmra.mxu0 %v3720
        %v3795 = vpop.f32.mrf.mxu0
        %v3796 = vadd.f32 %v3767, %v3795
        %3797 = vmatmul.f32.gmra.mxu0 %v3721
        %v3798 = vpop.f32.mrf.mxu0
        %v3799 = vadd.f32 %v3767, %v3798
        %3800 = vmatmul.f32.gmra.mxu0 %v3722
        %v3801 = vpop.f32.mrf.mxu0
        %v3802 = vadd.f32 %v3767, %v3801
        %3803 = vmatmul.f32.gmra.mxu0 %v3723
        %v3804 = vpop.f32.mrf.mxu0
        %v3805 = vadd.f32 %v3767, %v3804
        %3806 = vmatmul.f32.gmra.mxu0 %v3724
        %v3807 = vpop.f32.mrf.mxu0
        %v3808 = vadd.f32 %v3767, %v3807
        %3809 = vmatmul.f32.gmra.mxu0 %v3725
        %v3810 = vpop.f32.mrf.mxu0
        %v3811 = vadd.f32 %v3767, %v3810
        %3812 = vmatmul.f32.gmra.mxu0 %v3726
        %v3813 = vpop.f32.mrf.mxu0
        %v3814 = vadd.f32 %v3767, %v3813
        %3815 = vmatmul.f32.gmra.mxu0 %v3727
        %v3816 = vpop.f32.mrf.mxu0
        %v3817 = vadd.f32 %v3767, %v3816
        %3818 = vmatmul.f32.gmra.mxu0 %v3728
        %v3819 = vpop.f32.mrf.mxu0
        %v3820 = vadd.f32 %v3767, %v3819
        %3821 = vmatmul.f32.gmra.mxu0 %v3729
        %v3822 = vpop.f32.mrf.mxu0
        %v3823 = vadd.f32 %v3767, %v3822
        %3824 = vmatmul.f32.gmra.mxu0 %v3730
        %v3825 = vpop.f32.mrf.mxu0
        %v3826 = vadd.f32 %v3767, %v3825
        %3827 = vmatmul.f32.gmra.mxu0 %v3731
        %v3828 = vpop.f32.mrf.mxu0
        %v3829 = vadd.f32 %v3767, %v3828
        %3830 = vmatmul.f32.gmra.mxu0 %v3732
        %v3831 = vpop.f32.mrf.mxu0
        %v3832 = vadd.f32 %v3767, %v3831
        %3833 = vmatmul.f32.gmra.mxu0 %v3733
        %v3834 = vpop.f32.mrf.mxu0
        %v3835 = vadd.f32 %v3767, %v3834
        %3836 = vmatmul.f32.gmra.mxu0 %v3734
        %v3837 = vpop.f32.mrf.mxu0
        %v3838 = vadd.f32 %v3767, %v3837
        %3839 = vmatmul.f32.gmra.mxu0 %v3735
        %v3840 = vpop.f32.mrf.mxu0
        %v3841 = vadd.f32 %v3767, %v3840
        %3842 = vmatmul.f32.gmra.mxu0 %v3736
        %v3843 = vpop.f32.mrf.mxu0
        %v3844 = vadd.f32 %v3767, %v3843
        %3845 = vmatmul.f32.gmra.mxu0 %v3737
        %v3846 = vpop.f32.mrf.mxu0
        %v3847 = vadd.f32 %v3767, %v3846
        %3848 = vmatmul.f32.gmra.mxu0 %v3738
        %v3849 = vpop.f32.mrf.mxu0
        %v3850 = vadd.f32 %v3767, %v3849
        %3851 = vmatmul.f32.gmra.mxu0 %v3739
        %v3852 = vpop.f32.mrf.mxu0
        %v3853 = vadd.f32 %v3767, %v3852
        %3854 = vmatmul.f32.gmra.mxu0 %v3740
        %v3855 = vpop.f32.mrf.mxu0
        %v3856 = vadd.f32 %v3767, %v3855
        %3857 = vmatmul.f32.gmra.mxu0 %v3741
        %v3858 = vpop.f32.mrf.mxu0
        %v3859 = vadd.f32 %v3767, %v3858
        %3860 = vmatmul.f32.gmra.mxu0 %v3742
        %v3861 = vpop.f32.mrf.mxu0
        %v3862 = vadd.f32 %v3767, %v3861
        %3863 = vmatmul.f32.gmra.mxu0 %v3743
        %v3864 = vpop.f32.mrf.mxu0
        %v3865 = vadd.f32 %v3767, %v3864
        %3866 = vmatmul.f32.gmra.mxu0 %v3744
        %v3867 = vpop.f32.mrf.mxu0
        %v3868 = vadd.f32 %v3767, %v3867
        %3869 = vmatmul.f32.gmra.mxu0 %v3745
        %v3870 = vpop.f32.mrf.mxu0
        %v3871 = vadd.f32 %v3767, %v3870
        %3872 = vmatmul.f32.gmra.mxu0 %v3746
        %v3873 = vpop.f32.mrf.mxu0
        %v3874 = vadd.f32 %v3767, %v3873
        %3875 = vmatmul.f32.gmra.mxu0 %v3747
        %v3876 = vpop.f32.mrf.mxu0
        %v3877 = vadd.f32 %v3767, %v3876
        %3878 = vmatmul.f32.gmra.mxu0 %v3748
        %v3879 = vpop.f32.mrf.mxu0
        %v3880 = vadd.f32 %v3767, %v3879
        %3881 = vdwg.mxu0
        %v3882 = vld [vmem:[%s6] sm:$0x1]
        %v3884 = vperm.slane %v3882, 0
        %v3886 = vmul.f32 %v3787, %v3884
        %v3887 = vmul.f32 %v3790, %v3884
        %v3888 = vmul.f32 %v3793, %v3884
        %v3889 = vmul.f32 %v3796, %v3884
        %v3890 = vmul.f32 %v3799, %v3884
        %v3891 = vmul.f32 %v3802, %v3884
        %v3892 = vmul.f32 %v3805, %v3884
        %v3893 = vmul.f32 %v3808, %v3884
        %v3894 = vmul.f32 %v3811, %v3884
        %v3895 = vmul.f32 %v3814, %v3884
        %v3896 = vmul.f32 %v3817, %v3884
        %v3897 = vmul.f32 %v3820, %v3884
        %v3898 = vmul.f32 %v3823, %v3884
        %v3899 = vmul.f32 %v3826, %v3884
        %v3900 = vmul.f32 %v3829, %v3884
        %v3901 = vmul.f32 %v3832, %v3884
        %v3902 = vmul.f32 %v3835, %v3884
        %v3903 = vmul.f32 %v3838, %v3884
        %v3904 = vmul.f32 %v3841, %v3884
        %v3905 = vmul.f32 %v3844, %v3884
        %v3906 = vmul.f32 %v3847, %v3884
        %v3907 = vmul.f32 %v3850, %v3884
        %v3908 = vmul.f32 %v3853, %v3884
        %v3909 = vmul.f32 %v3856, %v3884
        %v3910 = vmul.f32 %v3859, %v3884
        %v3911 = vmul.f32 %v3862, %v3884
        %v3912 = vmul.f32 %v3865, %v3884
        %v3913 = vmul.f32 %v3868, %v3884
        %v3914 = vmul.f32 %v3871, %v3884
        %v3915 = vmul.f32 %v3874, %v3884
        %v3916 = vmul.f32 %v3877, %v3884
        %v3917 = vmul.f32 %v3880, %v3884
        %v3918 = vld [vmem:[%s7] sm:$0x1]
        %v3920 = vperm.slane %v3918, 0
        %v3922 = vadd.f32 %v3886, %v3920
        %v3923 = vadd.f32 %v3887, %v3920
        %v3924 = vadd.f32 %v3888, %v3920
        %v3925 = vadd.f32 %v3889, %v3920
        %v3926 = vadd.f32 %v3890, %v3920
        %v3927 = vadd.f32 %v3891, %v3920
        %v3928 = vadd.f32 %v3892, %v3920
        %v3929 = vadd.f32 %v3893, %v3920
        %v3930 = vadd.f32 %v3894, %v3920
        %v3931 = vadd.f32 %v3895, %v3920
        %v3932 = vadd.f32 %v3896, %v3920
        %v3933 = vadd.f32 %v3897, %v3920
        %v3934 = vadd.f32 %v3898, %v3920
        %v3935 = vadd.f32 %v3899, %v3920
        %v3936 = vadd.f32 %v3900, %v3920
        %v3937 = vadd.f32 %v3901, %v3920
        %v3938 = vadd.f32 %v3902, %v3920
        %v3939 = vadd.f32 %v3903, %v3920
        %v3940 = vadd.f32 %v3904, %v3920
        %v3941 = vadd.f32 %v3905, %v3920
        %v3942 = vadd.f32 %v3906, %v3920
        %v3943 = vadd.f32 %v3907, %v3920
        %v3944 = vadd.f32 %v3908, %v3920
        %v3945 = vadd.f32 %v3909, %v3920
        %v3946 = vadd.f32 %v3910, %v3920
        %v3947 = vadd.f32 %v3911, %v3920
        %v3948 = vadd.f32 %v3912, %v3920
        %v3949 = vadd.f32 %v3913, %v3920
        %v3950 = vadd.f32 %v3914, %v3920
        %v3951 = vadd.f32 %v3915, %v3920
        %v3952 = vadd.f32 %v3916, %v3920
        %v3953 = vadd.f32 %v3917, %v3920
        %s3954 = scalar_lea.vmem %s339, %s1524 [#allocation5]
        %v3955 = vld [vmem:[%s3954] sm:$0xff]
        %v3956 = vld [vmem:[%s3954 + $0x8] sm:$0xff]
        %v3957 = vld [vmem:[%s3954 + $0x10] sm:$0xff]
        %v3958 = vld [vmem:[%s3954 + $0x18] sm:$0xff]
        %v3959 = vld [vmem:[%s3954 + $0x20] sm:$0xff]
        %v3960 = vld [vmem:[%s3954 + $0x28] sm:$0xff]
        %v3961 = vld [vmem:[%s3954 + $0x30] sm:$0xff]
        %v3962 = vld [vmem:[%s3954 + $0x38] sm:$0xff]
        %v3963 = vld [vmem:[%s3954 + $0x40] sm:$0xff]
        %v3964 = vld [vmem:[%s3954 + $0x48] sm:$0xff]
        %v3965 = vld [vmem:[%s3954 + $0x50] sm:$0xff]
        %v3966 = vld [vmem:[%s3954 + $0x58] sm:$0xff]
        %v3967 = vld [vmem:[%s3954 + $0x60] sm:$0xff]
        %v3968 = vld [vmem:[%s3954 + $0x68] sm:$0xff]
        %v3969 = vld [vmem:[%s3954 + $0x70] sm:$0xff]
        %v3970 = vld [vmem:[%s3954 + $0x78] sm:$0xff]
        %v3971 = vld [vmem:[%s3954 + $0x80] sm:$0xff]
        %v3972 = vld [vmem:[%s3954 + $0x88] sm:$0xff]
        %v3973 = vld [vmem:[%s3954 + $0x90] sm:$0xff]
        %v3974 = vld [vmem:[%s3954 + $0x98] sm:$0xff]
        %v3975 = vld [vmem:[%s3954 + $0xa0] sm:$0xff]
        %v3976 = vld [vmem:[%s3954 + $0xa8] sm:$0xff]
        %v3977 = vld [vmem:[%s3954 + $0xb0] sm:$0xff]
        %v3978 = vld [vmem:[%s3954 + $0xb8] sm:$0xff]
        %v3979 = vld [vmem:[%s3954 + $0xc0] sm:$0xff]
        %v3980 = vld [vmem:[%s3954 + $0xc8] sm:$0xff]
        %v3981 = vld [vmem:[%s3954 + $0xd0] sm:$0xff]
        %v3982 = vld [vmem:[%s3954 + $0xd8] sm:$0xff]
        %v3983 = vld [vmem:[%s3954 + $0xe0] sm:$0xff]
        %v3984 = vld [vmem:[%s3954 + $0xe8] sm:$0xff]
        %v3985 = vld [vmem:[%s3954 + $0xf0] sm:$0xff]
        %v3986 = vld [vmem:[%s3954 + $0xf8] sm:$0xff]
        %v3987 = vadd.f32 %v3922, %v3955
        %v3988 = vadd.f32 %v3923, %v3956
        %v3989 = vadd.f32 %v3924, %v3957
        %v3990 = vadd.f32 %v3925, %v3958
        %v3991 = vadd.f32 %v3926, %v3959
        %v3992 = vadd.f32 %v3927, %v3960
        %v3993 = vadd.f32 %v3928, %v3961
        %v3994 = vadd.f32 %v3929, %v3962
        %v3995 = vadd.f32 %v3930, %v3963
        %v3996 = vadd.f32 %v3931, %v3964
        %v3997 = vadd.f32 %v3932, %v3965
        %v3998 = vadd.f32 %v3933, %v3966
        %v3999 = vadd.f32 %v3934, %v3967
        %v4000 = vadd.f32 %v3935, %v3968
        %v4001 = vadd.f32 %v3936, %v3969
        %v4002 = vadd.f32 %v3937, %v3970
        %v4003 = vadd.f32 %v3938, %v3971
        %v4004 = vadd.f32 %v3939, %v3972
        %v4005 = vadd.f32 %v3940, %v3973
        %v4006 = vadd.f32 %v3941, %v3974
        %v4007 = vadd.f32 %v3942, %v3975
        %v4008 = vadd.f32 %v3943, %v3976
        %v4009 = vadd.f32 %v3944, %v3977
        %v4010 = vadd.f32 %v3945, %v3978
        %v4011 = vadd.f32 %v3946, %v3979
        %v4012 = vadd.f32 %v3947, %v3980
        %v4013 = vadd.f32 %v3948, %v3981
        %v4014 = vadd.f32 %v3949, %v3982
        %v4015 = vadd.f32 %v3950, %v3983
        %v4016 = vadd.f32 %v3951, %v3984
        %v4017 = vadd.f32 %v3952, %v3985
        %v4018 = vadd.f32 %v3953, %v3986
        %4019 = vst [vmem:[%s387] sm:$0xff] %v3987
        %4020 = vst [vmem:[%s387 + $0x8] sm:$0xff] %v3988
        %4021 = vst [vmem:[%s387 + $0x10] sm:$0xff] %v3989
        %4022 = vst [vmem:[%s387 + $0x18] sm:$0xff] %v3990
        %4023 = vst [vmem:[%s387 + $0x20] sm:$0xff] %v3991
        %4024 = vst [vmem:[%s387 + $0x28] sm:$0xff] %v3992
        %4025 = vst [vmem:[%s387 + $0x30] sm:$0xff] %v3993
        %4026 = vst [vmem:[%s387 + $0x38] sm:$0xff] %v3994
        %4027 = vst [vmem:[%s387 + $0x40] sm:$0xff] %v3995
        %4028 = vst [vmem:[%s387 + $0x48] sm:$0xff] %v3996
        %4029 = vst [vmem:[%s387 + $0x50] sm:$0xff] %v3997
        %4030 = vst [vmem:[%s387 + $0x58] sm:$0xff] %v3998
        %4031 = vst [vmem:[%s387 + $0x60] sm:$0xff] %v3999
        %4032 = vst [vmem:[%s387 + $0x68] sm:$0xff] %v4000
        %4033 = vst [vmem:[%s387 + $0x70] sm:$0xff] %v4001
        %4034 = vst [vmem:[%s387 + $0x78] sm:$0xff] %v4002
        %4035 = vst [vmem:[%s387 + $0x80] sm:$0xff] %v4003
        %4036 = vst [vmem:[%s387 + $0x88] sm:$0xff] %v4004
        %4037 = vst [vmem:[%s387 + $0x90] sm:$0xff] %v4005
        %4038 = vst [vmem:[%s387 + $0x98] sm:$0xff] %v4006
        %4039 = vst [vmem:[%s387 + $0xa0] sm:$0xff] %v4007
        %4040 = vst [vmem:[%s387 + $0xa8] sm:$0xff] %v4008
        %4041 = vst [vmem:[%s387 + $0xb0] sm:$0xff] %v4009
        %4042 = vst [vmem:[%s387 + $0xb8] sm:$0xff] %v4010
        %4043 = vst [vmem:[%s387 + $0xc0] sm:$0xff] %v4011
        %4044 = vst [vmem:[%s387 + $0xc8] sm:$0xff] %v4012
        %4045 = vst [vmem:[%s387 + $0xd0] sm:$0xff] %v4013
        %4046 = vst [vmem:[%s387 + $0xd8] sm:$0xff] %v4014
        %4047 = vst [vmem:[%s387 + $0xe0] sm:$0xff] %v4015
        %4048 = vst [vmem:[%s387 + $0xe8] sm:$0xff] %v4016
        %4049 = vst [vmem:[%s387 + $0xf0] sm:$0xff] %v4017
        %4050 = vst [vmem:[%s387 + $0xf8] sm:$0xff] %v4018
        %s4051 = sand.u32 %s222, 1
        %s4052 = scalar_lea.sflag [#allocation7], %s4051
        %s4053 = sand.u32 %s222, 1
        %s4054 = smul.addr %s4053, 256
        %s4055 = scalar_lea.vmem [#allocation13], %s4054
        // Predicated region
        $region73: #{tpu_custom_call.1} parent=51 // pred_check
          %p4056 = pneg %p232
        $region74: #{tpu_custom_call.1} parent=51 // pred_check_branch
          %4058 = sbr.rel (%p4056) target = $region76
        $region75: #{tpu_custom_call.1} parent=51 // pred_region
          %s4059 = smul.u32 32, %s32
          %4061 = vsyncadd %s4052, 0
          %s4062 = smul.addr %s31, 64
          %s4063 = sadd.s32 %s4059, %s4062
          %s4064 = smul.addr %s4063, 8
          %s4065 = scalar_lea.hbm %s8, %s4064
          %s4066 = sshll.u32 %s4055, 4
          %s4067 = int_to_ptr.vmem [resolvable:$true] %s4066
          %s4068 = sshll.u32 %s4065, 4
          %s4069 = int_to_ptr.hbm [resolvable:$true] %s4068
          %4074 = dma.vmem_to_hbm [thread:$0]  %s4067, 4096, %s4069, %s4052, 128, 128, 8
        $region76: #{tpu_custom_call.1} parent=51 // pred_fallthru
          _
      $region52: #{tpu_custom_call.1} parent=5 // pred_fallthru
        _
      %p4075 = scmp.le.s32.totalorder 2, %s22
      // Predicated region
      $region77: #{tpu_custom_call.1} parent=5 // pred_check
        %p4076 = pneg %p4075
      $region78: #{tpu_custom_call.1} parent=5 // pred_check_branch
        %4078 = sbr.rel (%p4076) target = $region80
      $region79: #{tpu_custom_call.1} parent=5 // pred_region
        %s4079 = ssub.s32 %s22, 2
        // Predicated region
        $region81: #{tpu_custom_call.1} parent=79 // pred_check
          %p4080 = pneg %p238
        $region82: #{tpu_custom_call.1} parent=79 // pred_check_branch
          %4082 = sbr.rel (%p4080) target = $region84
        $region83: #{tpu_custom_call.1} parent=79 // pred_region
          %s4083 = sand.u32 %s223, 1
          %s4084 = scalar_lea.sflag [#allocation7], %s4083
          %s4085 = sand.u32 %s223, 1
          %s4086 = smul.addr %s4085, 256
          %s4087 = scalar_lea.vmem [#allocation13], %s4086
          %4089 = dma.done %s4084, 4096
        $region84: #{tpu_custom_call.1} parent=79 // pred_fallthru
          _
      $region80: #{tpu_custom_call.1} parent=5 // pred_fallthru
        _
    $region6: #{tpu_custom_call.1} parent=1 // loop_footer
      %s26 = sadd.s32 1, %s22
    $region7: #{tpu_custom_call.1} parent=1 // loop_footer_branch
      %21 = sbr.rel target = $region3
    $region8: #{tpu_custom_call.1} parent=1 // loop_exit
      _
    %4090 = vsyncpa [#allocation6], 1
    %s4091 = scalar_lea.sflag [#allocation6], 1
    %4092 = vsyncpa %s4091, 1
    %4093 = vsyncpa [#allocation9], 1
    %4094 = vsyncpa [#allocation12], 1
    %4095 = vsyncpa [#allocation7], 1
    %s4096 = scalar_lea.sflag [#allocation7], 1
    %4097 = vsyncpa %s4096, 1

</llo_original>
